<compile_context>
chip_gen: v7x
topology: tpu7x:2x2x1
jax: 0.10.0
libtpu: 0.0.40
codegen_flags: <defaults>
</compile_context>

<pallas_src>
import functools
import math

import jax
import jax.numpy as jnp
from jax.experimental import pallas as pl
from jax.experimental.pallas import tpu as pltpu


# ----------------------------------------------------------------------------- #
# Config (stands in for cfg.MODEL.DECODER.* / cfg.MODEL.NUM_CLASSES)
# ----------------------------------------------------------------------------- #
DEC_NAME = "lstm"
IN_FEATURES = 32          # channels of incoming feature map (== LSTM input size)
HIDDEN_SIZE = 32
NUM_LAYERS = 2
BIDIRECTIONAL = False     # see TODO(synk) above
DROPOUT = 0.0             # inference: nn.LSTM dropout is inactive
NUM_CLASSES = 5
SEQ_LEN = 8
BATCH = 2                 # number of sequences; input rows N = BATCH * SEQ_LEN
SPATIAL = 16

LANE = 128


def _round_up(x, m):
    return ((x + m - 1) // m) * m


# ----------------------------------------------------------------------------- #
# Fused Pallas kernel: GAP + stacked LSTM + FC in one invocation
# ----------------------------------------------------------------------------- #
def _fused_decoder_kernel(x_ref, *refs, num_layers, B, T, H, inv_hw):
    """Whole decoder in one kernel.

    x_ref : (B*T, C, H*W) f32 feature map (rows ordered batch-major, b*T + t).
    refs  : per layer l: w_ih_T (F_l, 4H) bf16, w_hh_T (H, 4H) bf16, bias (1, 4H) f32;
            then fc_w_T (H, NCp) bf16, fc_b (1, NCp) f32; last entry is the output ref.
    """
    o_ref = refs[-1]
    fcw_ref = refs[3 * num_layers]
    fcb_ref = refs[3 * num_layers + 1]
    layer_refs = [refs[3 * l: 3 * l + 3] for l in range(num_layers)]
    G = 4 * H
    f32 = jnp.float32
    bf16 = jnp.bfloat16

    # ---- Global average pool: (B*T, C, HW) -> (B*T, C), f32, stays in VMEM ----
    pooled = jnp.sum(x_ref[...], axis=2) * inv_hw

    # ---- Layer-0 input projection for ALL timesteps in one MXU GEMM ----
    wih0_ref, _, b0_ref = layer_refs[0]
    xp0 = jnp.dot(pooled.astype(bf16), wih0_ref[...],
                  preferred_element_type=f32) + b0_ref[...]        # (B*T, 4H)

    # Hoist weight loads / bias broadcasts out of the unrolled time loop.
    whh = [layer_refs[l][1][...] for l in range(num_layers)]       # (H, 4H) bf16
    wih_up = [layer_refs[l][0][...] for l in range(1, num_layers)] # (H, 4H) bf16
    b_up = [jnp.broadcast_to(layer_refs[l][2][...], (B, G))
            for l in range(1, num_layers)]

    h = [jnp.zeros((B, H), f32) for _ in range(num_layers)]
    c = [jnp.zeros((B, H), f32) for _ in range(num_layers)]

    # ---- Stacked LSTM recurrence: fully unrolled (T, num_layers small, static) ----
    for t in range(T):
        # Gather timestep t for every sequence: rows {b*T + t} (2-D slices + concat).
        x_t = jnp.concatenate(
            [xp0[b * T + t: b * T + t + 1, :] for b in range(B)], axis=0)  # (B, 4H)
        for l in range(num_layers):
            if l == 0:
                gin = x_t                                          # bias already folded in
            else:
                gin = jnp.dot(h[l - 1].astype(bf16), wih_up[l - 1],
                              preferred_element_type=f32) + b_up[l - 1]
            g = gin + jnp.dot(h[l].astype(bf16), whh[l],
                              preferred_element_type=f32)          # (B, 4H) f32
            # Whole-(B,4H) transcendentals (EUP); slice only for the combine.
            sg = jax.nn.sigmoid(g)
            tg = jnp.tanh(g)
            i_g = sg[:, 0 * H:1 * H]
            f_g = sg[:, 1 * H:2 * H]
            g_g = tg[:, 2 * H:3 * H]
            o_g = sg[:, 3 * H:4 * H]
            c[l] = f_g * c[l] + i_g * g_g
            h[l] = o_g * jnp.tanh(c[l])

    # ---- Final FC on h_n (torch ordering: row = layer*B + batch) ----
    h_n = jnp.concatenate(h, axis=0)                               # (L*B, H)
    logits = jnp.dot(h_n.astype(bf16), fcw_ref[...],
                     preferred_element_type=f32) + fcb_ref[...]    # (L*B, NCp)
    nc = o_ref.shape[-1]
    o_ref[...] = logits[:, :nc]


# ----------------------------------------------------------------------------- #
# Forward pass wrapper — a single pallas_call, full-array VMEM blocks
# ----------------------------------------------------------------------------- #
def decoder_forward(x_nchw, kparams, *, seq_len):
    N, C, Hs, Ws = x_nchw.shape
    HW = Hs * Ws
    T = seq_len
    B = N // T
    L = len(kparams["layers"])
    H = kparams["layers"][0]["w_hh_T"].shape[0]
    NC = NUM_CLASSES

    x3 = x_nchw.reshape(N, C, HW)          # contiguous -> free metadata reshape

    flat_w = []
    in_specs = [pl.BlockSpec((N, C, HW), lambda i: (0, 0, 0))]
    for lp in kparams["layers"]:
        for name in ("w_ih_T", "w_hh_T", "bias"):
            w = lp[name]
            flat_w.append(w)
            in_specs.append(pl.BlockSpec(w.shape, lambda i: (0, 0)))
    for name in ("fc_w_T", "fc_b"):
        w = kparams[name]
        flat_w.append(w)
        in_specs.append(pl.BlockSpec(w.shape, lambda i: (0, 0)))

    kernel = functools.partial(_fused_decoder_kernel, num_layers=L, B=B, T=T,
                               H=H, inv_hw=1.0 / HW)

    return pl.pallas_call(
        kernel,
        out_shape=jax.ShapeDtypeStruct((L * B, NC), jnp.float32),
        grid_spec=pltpu.PrefetchScalarGridSpec(
            num_scalar_prefetch=0,
            grid=(1,),
            in_specs=in_specs,
            out_specs=pl.BlockSpec((L * B, NC), lambda i: (0, 0)),
        ),
        compiler_params=pltpu.CompilerParams(
            dimension_semantics=("arbitrary",),   # time loop lives inside the kernel
        ),
    )(x3, *flat_w)


# ----------------------------------------------------------------------------- #
# Parameters (deterministic, PyTorch-default-style init) — kernel-ready copies
# (transposed / bf16, FC lane-padded) built ONCE here, not per forward call.
# ----------------------------------------------------------------------------- #
class ParamGen:
    def __init__(self, key):
        self.key = key
        self.count = 0

    def uniform(self, shape, bound):
        self.count += 1
        k = jax.random.fold_in(self.key, self.count)
        return jax.random.uniform(k, shape, jnp.float32, -bound, bound)


def init_params(key):
    assert DEC_NAME == "lstm" and not BIDIRECTIONAL, \
        "TODO(synk): GRU / bidirectional paths not implemented"
    H = HIDDEN_SIZE
    gen = ParamGen(key)
    bound = 1.0 / math.sqrt(H)

    layers_k, layers_r = [], []
    in_f = IN_FEATURES
    for _ in range(NUM_LAYERS):
        w_ih = gen.uniform((4 * H, in_f), bound)     # torch layout (4H, F), gates i,f,g,o
        w_hh = gen.uniform((4 * H, H), bound)
        bias = gen.uniform((4 * H,), bound) + gen.uniform((4 * H,), bound)  # b_ih + b_hh
        layers_k.append({
            "w_ih_T": w_ih.T.astype(jnp.bfloat16),   # (F, 4H), K left unpadded
            "w_hh_T": w_hh.T.astype(jnp.bfloat16),   # (H, 4H)
            "bias": bias.reshape(1, 4 * H).astype(jnp.float32),
        })
        layers_r.append({"w_ih": w_ih, "w_hh": w_hh, "bias": bias})
        in_f = H

    fc_bound = 1.0 / math.sqrt(H)
    fc_w = gen.uniform((NUM_CLASSES, H), fc_bound)
    fc_b = jnp.zeros((NUM_CLASSES,), jnp.float32)    # nn.init.zeros_
    NCp = _round_up(NUM_CLASSES, LANE)               # one-time lane pad of the tiny FC
    fc_w_T_p = jnp.zeros((H, NCp), jnp.bfloat16).at[:, :NUM_CLASSES].set(
        fc_w.T.astype(jnp.bfloat16))
    fc_b_p = jnp.zeros((1, NCp), jnp.float32).at[0, :NUM_CLASSES].set(fc_b)

    kparams = {"layers": layers_k, "fc_w_T": fc_w_T_p, "fc_b": fc_b_p}
    rparams = {"layers": layers_r, "fc_w": fc_w, "fc_b": fc_b}
    return kparams, rparams


# ----------------------------------------------------------------------------- #
# Pure-JAX reference (f32) for a sanity check
# ----------------------------------------------------------------------------- #
def reference_forward(x_nchw, rparams, seq_len):
    pooled = jnp.mean(x_nchw.astype(jnp.float32), axis=(2, 3))
    N, C = pooled.shape
    B = N // seq_len
    inp = pooled.reshape(B, seq_len, C)
    h_last = []
    for lp in rparams["layers"]:
        W_ih, W_hh, b = lp["w_ih"], lp["w_hh"], lp["bias"]
        H = W_hh.shape[1]

        def step(carry, x_t, W_ih=W_ih, W_hh=W_hh, b=b, H=H):
            h, c = carry
            g = x_t @ W_ih.T + h @ W_hh.T + b
            i = jax.nn.sigmoid(g[:, :H])
            f = jax.nn.sigmoid(g[:, H:2 * H])
            gg = jnp.tanh(g[:, 2 * H:3 * H])
            o = jax.nn.sigmoid(g[:, 3 * H:])
            c = f * c + i * gg
            h = o * jnp.tanh(c)
            return (h, c), h

        init = (jnp.zeros((B, H), jnp.float32), jnp.zeros((B, H), jnp.float32))
        (hT, _), hs = jax.lax.scan(step, init, inp.transpose(1, 0, 2))
        inp = hs.transpose(1, 0, 2)
        h_last.append(hT)
    h_n = jnp.stack(h_last, axis=0)
    L, Bc, H = h_n.shape
    return h_n.reshape(L * Bc, H) @ rparams["fc_w"].T + rparams["fc_b"]


# ----------------------------------------------------------------------------- #
if __name__ == "__main__":
    key = jax.random.PRNGKey(0)
    kparams, rparams = init_params(key)

    N = BATCH * SEQ_LEN
    x = jax.random.normal(jax.random.fold_in(key, 12345),
                          (N, IN_FEATURES, SPATIAL, SPATIAL), jnp.float32)

    fwd = jax.jit(decoder_forward, static_argnames=("seq_len",))
    logits = fwd(x, kparams, seq_len=SEQ_LEN)
    jax.block_until_ready(logits)

    assert logits.shape == (NUM_LAYERS * BATCH, NUM_CLASSES), logits.shape
    assert bool(jnp.all(jnp.isfinite(logits)))

    ref = reference_forward(x, rparams, SEQ_LEN)
    max_err = float(jnp.max(jnp.abs(logits - ref)))
    assert max_err < 5e-2, f"max abs err vs reference: {max_err}"

    print("KERNEL_OK")
</pallas_src>

<mosaic_0001>
module attributes {stable_mosaic.version = 11 : i64} {
  func.func @_fused_decoder_kernel(%arg0: i32, %arg1: memref<16x32x256xf32, #tpu.memory_space<vmem>>, %arg2: memref<32x128xbf16, #tpu.memory_space<vmem>>, %arg3: memref<32x128xbf16, #tpu.memory_space<vmem>>, %arg4: memref<1x128xf32, #tpu.memory_space<vmem>>, %arg5: memref<32x128xbf16, #tpu.memory_space<vmem>>, %arg6: memref<32x128xbf16, #tpu.memory_space<vmem>>, %arg7: memref<1x128xf32, #tpu.memory_space<vmem>>, %arg8: memref<32x128xbf16, #tpu.memory_space<vmem>>, %arg9: memref<1x128xf32, #tpu.memory_space<vmem>>, %arg10: memref<4x5xf32, #tpu.memory_space<vmem>>) attributes {dimension_semantics = [#tpu.dimension_semantics<arbitrary>], iteration_bounds = array<i64: 1>, scalar_prefetch = 0 : i64, scratch_operands = 0 : i64, tpu.core_type = #tpu.core_type<tc>, window_params = [{pipeline_mode = #tpu.pipeline_mode<synchronous>, transform_indices = @transform_0, window_bounds = array<i64: 16, 32, 256>}, {pipeline_mode = #tpu.pipeline_mode<synchronous>, transform_indices = @transform_1, window_bounds = array<i64: 32, 128>}, {pipeline_mode = #tpu.pipeline_mode<synchronous>, transform_indices = @transform_2, window_bounds = array<i64: 32, 128>}, {pipeline_mode = #tpu.pipeline_mode<synchronous>, transform_indices = @transform_3, window_bounds = array<i64: 1, 128>}, {pipeline_mode = #tpu.pipeline_mode<synchronous>, transform_indices = @transform_4, window_bounds = array<i64: 32, 128>}, {pipeline_mode = #tpu.pipeline_mode<synchronous>, transform_indices = @transform_5, window_bounds = array<i64: 32, 128>}, {pipeline_mode = #tpu.pipeline_mode<synchronous>, transform_indices = @transform_6, window_bounds = array<i64: 1, 128>}, {pipeline_mode = #tpu.pipeline_mode<synchronous>, transform_indices = @transform_7, window_bounds = array<i64: 32, 128>}, {pipeline_mode = #tpu.pipeline_mode<synchronous>, transform_indices = @transform_8, window_bounds = array<i64: 1, 128>}, {pipeline_mode = #tpu.pipeline_mode<synchronous>, transform_indices = @transform_9, window_bounds = array<i64: 4, 5>}]} {
    %c0 = arith.constant 0 : index
    %c0_0 = arith.constant 0 : index
    %c0_1 = arith.constant 0 : index
    %0 = vector.load %arg1[%c0, %c0_0, %c0_1] : memref<16x32x256xf32, #tpu.memory_space<vmem>>, vector<16x32x256xf32>
    %cst = arith.constant dense<0.000000e+00> : vector<16x32xf32>
    %1 = vector.multi_reduction <add>, %0, %cst [2] : vector<16x32x256xf32> to vector<16x32xf32>
    %cst_2 = arith.constant 3.906250e-03 : f32
    %2 = vector.broadcast %cst_2 : f32 to vector<16x32xf32>
    %3 = arith.mulf %1, %2 : vector<16x32xf32>
    %4 = arith.truncf %3 : vector<16x32xf32> to vector<16x32xbf16>
    %c0_3 = arith.constant 0 : index
    %c0_4 = arith.constant 0 : index
    %5 = vector.load %arg2[%c0_3, %c0_4] : memref<32x128xbf16, #tpu.memory_space<vmem>>, vector<32x128xbf16>
    %cst_5 = arith.constant dense<0.000000e+00> : vector<16x128xf32>
    %6 = tpu.matmul %4, %5, %cst_5 {dimension_numbers = #tpu.dot_dimension_numbers<[1], [0], [0], [1], [0, 0, 1, 1], [], []>} : vector<16x32xbf16>, vector<32x128xbf16>, vector<16x128xf32> -> vector<16x128xf32>
    %c0_6 = arith.constant 0 : index
    %c0_7 = arith.constant 0 : index
    %7 = vector.load %arg4[%c0_6, %c0_7] : memref<1x128xf32, #tpu.memory_space<vmem>>, vector<1x128xf32>
    %8 = vector.broadcast %7 : vector<1x128xf32> to vector<16x128xf32>
    %9 = arith.addf %6, %8 : vector<16x128xf32>
    %c0_8 = arith.constant 0 : index
    %c0_9 = arith.constant 0 : index
    %10 = vector.load %arg3[%c0_8, %c0_9] : memref<32x128xbf16, #tpu.memory_space<vmem>>, vector<32x128xbf16>
    %c0_10 = arith.constant 0 : index
    %c0_11 = arith.constant 0 : index
    %11 = vector.load %arg6[%c0_10, %c0_11] : memref<32x128xbf16, #tpu.memory_space<vmem>>, vector<32x128xbf16>
    %c0_12 = arith.constant 0 : index
    %c0_13 = arith.constant 0 : index
    %12 = vector.load %arg5[%c0_12, %c0_13] : memref<32x128xbf16, #tpu.memory_space<vmem>>, vector<32x128xbf16>
    %c0_14 = arith.constant 0 : index
    %c0_15 = arith.constant 0 : index
    %13 = vector.load %arg7[%c0_14, %c0_15] : memref<1x128xf32, #tpu.memory_space<vmem>>, vector<1x128xf32>
    %14 = vector.shape_cast %13 : vector<1x128xf32> to vector<1x128xf32>
    %15 = vector.broadcast %14 : vector<1x128xf32> to vector<2x128xf32>
    %cst_16 = arith.constant 0.000000e+00 : f32
    %16 = vector.broadcast %cst_16 : f32 to vector<2x32xf32>
    %cst_17 = arith.constant 0.000000e+00 : f32
    %17 = vector.broadcast %cst_17 : f32 to vector<2x32xf32>
    %cst_18 = arith.constant 0.000000e+00 : f32
    %18 = vector.broadcast %cst_18 : f32 to vector<2x32xf32>
    %cst_19 = arith.constant 0.000000e+00 : f32
    %19 = vector.broadcast %cst_19 : f32 to vector<2x32xf32>
    %20 = vector.extract_strided_slice %9 {offsets = [0, 0], sizes = [1, 128], strides = [1, 1]} : vector<16x128xf32> to vector<1x128xf32>
    %21 = vector.extract_strided_slice %9 {offsets = [8, 0], sizes = [1, 128], strides = [1, 1]} : vector<16x128xf32> to vector<1x128xf32>
    %22 = tpu.concatenate %20, %21 in 0 : vector<1x128xf32>, vector<1x128xf32> -> vector<2x128xf32>
    %23 = arith.truncf %16 : vector<2x32xf32> to vector<2x32xbf16>
    %cst_20 = arith.constant dense<0.000000e+00> : vector<2x128xf32>
    %24 = tpu.matmul %23, %10, %cst_20 {dimension_numbers = #tpu.dot_dimension_numbers<[1], [0], [0], [1], [0, 0, 1, 1], [], []>} : vector<2x32xbf16>, vector<32x128xbf16>, vector<2x128xf32> -> vector<2x128xf32>
    %25 = arith.addf %22, %24 : vector<2x128xf32>
    %26 = arith.negf %25 : vector<2x128xf32>
    %27 = math.exp %26 : vector<2x128xf32>
    %cst_21 = arith.constant 1.000000e+00 : f32
    %28 = vector.broadcast %cst_21 : f32 to vector<2x128xf32>
    %29 = arith.addf %28, %27 : vector<2x128xf32>
    %30 = arith.divf %28, %29 : vector<2x128xf32>
    %31 = math.tanh %25 : vector<2x128xf32>
    %32 = vector.extract_strided_slice %30 {offsets = [0, 0], sizes = [2, 32], strides = [1, 1]} : vector<2x128xf32> to vector<2x32xf32>
    %33 = vector.extract_strided_slice %30 {offsets = [0, 32], sizes = [2, 32], strides = [1, 1]} : vector<2x128xf32> to vector<2x32xf32>
    %34 = vector.extract_strided_slice %31 {offsets = [0, 64], sizes = [2, 32], strides = [1, 1]} : vector<2x128xf32> to vector<2x32xf32>
    %35 = vector.extract_strided_slice %30 {offsets = [0, 96], sizes = [2, 32], strides = [1, 1]} : vector<2x128xf32> to vector<2x32xf32>
    %36 = arith.mulf %33, %18 : vector<2x32xf32>
    %37 = arith.mulf %32, %34 : vector<2x32xf32>
    %38 = arith.addf %36, %37 : vector<2x32xf32>
    %39 = math.tanh %38 : vector<2x32xf32>
    %40 = arith.mulf %35, %39 : vector<2x32xf32>
    %41 = arith.truncf %40 : vector<2x32xf32> to vector<2x32xbf16>
    %cst_22 = arith.constant dense<0.000000e+00> : vector<2x128xf32>
    %42 = tpu.matmul %41, %12, %cst_22 {dimension_numbers = #tpu.dot_dimension_numbers<[1], [0], [0], [1], [0, 0, 1, 1], [], []>} : vector<2x32xbf16>, vector<32x128xbf16>, vector<2x128xf32> -> vector<2x128xf32>
    %43 = arith.addf %42, %15 : vector<2x128xf32>
    %44 = arith.truncf %17 : vector<2x32xf32> to vector<2x32xbf16>
    %cst_23 = arith.constant dense<0.000000e+00> : vector<2x128xf32>
    %45 = tpu.matmul %44, %11, %cst_23 {dimension_numbers = #tpu.dot_dimension_numbers<[1], [0], [0], [1], [0, 0, 1, 1], [], []>} : vector<2x32xbf16>, vector<32x128xbf16>, vector<2x128xf32> -> vector<2x128xf32>
    %46 = arith.addf %43, %45 : vector<2x128xf32>
    %47 = arith.negf %46 : vector<2x128xf32>
    %48 = math.exp %47 : vector<2x128xf32>
    %cst_24 = arith.constant 1.000000e+00 : f32
    %49 = vector.broadcast %cst_24 : f32 to vector<2x128xf32>
    %50 = arith.addf %49, %48 : vector<2x128xf32>
    %51 = arith.divf %49, %50 : vector<2x128xf32>
    %52 = math.tanh %46 : vector<2x128xf32>
    %53 = vector.extract_strided_slice %51 {offsets = [0, 0], sizes = [2, 32], strides = [1, 1]} : vector<2x128xf32> to vector<2x32xf32>
    %54 = vector.extract_strided_slice %51 {offsets = [0, 32], sizes = [2, 32], strides = [1, 1]} : vector<2x128xf32> to vector<2x32xf32>
    %55 = vector.extract_strided_slice %52 {offsets = [0, 64], sizes = [2, 32], strides = [1, 1]} : vector<2x128xf32> to vector<2x32xf32>
    %56 = vector.extract_strided_slice %51 {offsets = [0, 96], sizes = [2, 32], strides = [1, 1]} : vector<2x128xf32> to vector<2x32xf32>
    %57 = arith.mulf %54, %19 : vector<2x32xf32>
    %58 = arith.mulf %53, %55 : vector<2x32xf32>
    %59 = arith.addf %57, %58 : vector<2x32xf32>
    %60 = math.tanh %59 : vector<2x32xf32>
    %61 = arith.mulf %56, %60 : vector<2x32xf32>
    %62 = vector.extract_strided_slice %9 {offsets = [1, 0], sizes = [1, 128], strides = [1, 1]} : vector<16x128xf32> to vector<1x128xf32>
    %63 = vector.extract_strided_slice %9 {offsets = [9, 0], sizes = [1, 128], strides = [1, 1]} : vector<16x128xf32> to vector<1x128xf32>
    %64 = tpu.concatenate %62, %63 in 0 : vector<1x128xf32>, vector<1x128xf32> -> vector<2x128xf32>
    %65 = arith.truncf %40 : vector<2x32xf32> to vector<2x32xbf16>
    %cst_25 = arith.constant dense<0.000000e+00> : vector<2x128xf32>
    %66 = tpu.matmul %65, %10, %cst_25 {dimension_numbers = #tpu.dot_dimension_numbers<[1], [0], [0], [1], [0, 0, 1, 1], [], []>} : vector<2x32xbf16>, vector<32x128xbf16>, vector<2x128xf32> -> vector<2x128xf32>
    %67 = arith.addf %64, %66 : vector<2x128xf32>
    %68 = arith.negf %67 : vector<2x128xf32>
    %69 = math.exp %68 : vector<2x128xf32>
    %cst_26 = arith.constant 1.000000e+00 : f32
    %70 = vector.broadcast %cst_26 : f32 to vector<2x128xf32>
    %71 = arith.addf %70, %69 : vector<2x128xf32>
    %72 = arith.divf %70, %71 : vector<2x128xf32>
    %73 = math.tanh %67 : vector<2x128xf32>
    %74 = vector.extract_strided_slice %72 {offsets = [0, 0], sizes = [2, 32], strides = [1, 1]} : vector<2x128xf32> to vector<2x32xf32>
    %75 = vector.extract_strided_slice %72 {offsets = [0, 32], sizes = [2, 32], strides = [1, 1]} : vector<2x128xf32> to vector<2x32xf32>
    %76 = vector.extract_strided_slice %73 {offsets = [0, 64], sizes = [2, 32], strides = [1, 1]} : vector<2x128xf32> to vector<2x32xf32>
    %77 = vector.extract_strided_slice %72 {offsets = [0, 96], sizes = [2, 32], strides = [1, 1]} : vector<2x128xf32> to vector<2x32xf32>
    %78 = arith.mulf %75, %38 : vector<2x32xf32>
    %79 = arith.mulf %74, %76 : vector<2x32xf32>
    %80 = arith.addf %78, %79 : vector<2x32xf32>
    %81 = math.tanh %80 : vector<2x32xf32>
    %82 = arith.mulf %77, %81 : vector<2x32xf32>
    %83 = arith.truncf %82 : vector<2x32xf32> to vector<2x32xbf16>
    %cst_27 = arith.constant dense<0.000000e+00> : vector<2x128xf32>
    %84 = tpu.matmul %83, %12, %cst_27 {dimension_numbers = #tpu.dot_dimension_numbers<[1], [0], [0], [1], [0, 0, 1, 1], [], []>} : vector<2x32xbf16>, vector<32x128xbf16>, vector<2x128xf32> -> vector<2x128xf32>
    %85 = arith.addf %84, %15 : vector<2x128xf32>
    %86 = arith.truncf %61 : vector<2x32xf32> to vector<2x32xbf16>
    %cst_28 = arith.constant dense<0.000000e+00> : vector<2x128xf32>
    %87 = tpu.matmul %86, %11, %cst_28 {dimension_numbers = #tpu.dot_dimension_numbers<[1], [0], [0], [1], [0, 0, 1, 1], [], []>} : vector<2x32xbf16>, vector<32x128xbf16>, vector<2x128xf32> -> vector<2x128xf32>
    %88 = arith.addf %85, %87 : vector<2x128xf32>
    %89 = arith.negf %88 : vector<2x128xf32>
    %90 = math.exp %89 : vector<2x128xf32>
    %cst_29 = arith.constant 1.000000e+00 : f32
    %91 = vector.broadcast %cst_29 : f32 to vector<2x128xf32>
    %92 = arith.addf %91, %90 : vector<2x128xf32>
    %93 = arith.divf %91, %92 : vector<2x128xf32>
    %94 = math.tanh %88 : vector<2x128xf32>
    %95 = vector.extract_strided_slice %93 {offsets = [0, 0], sizes = [2, 32], strides = [1, 1]} : vector<2x128xf32> to vector<2x32xf32>
    %96 = vector.extract_strided_slice %93 {offsets = [0, 32], sizes = [2, 32], strides = [1, 1]} : vector<2x128xf32> to vector<2x32xf32>
    %97 = vector.extract_strided_slice %94 {offsets = [0, 64], sizes = [2, 32], strides = [1, 1]} : vector<2x128xf32> to vector<2x32xf32>
    %98 = vector.extract_strided_slice %93 {offsets = [0, 96], sizes = [2, 32], strides = [1, 1]} : vector<2x128xf32> to vector<2x32xf32>
    %99 = arith.mulf %96, %59 : vector<2x32xf32>
    %100 = arith.mulf %95, %97 : vector<2x32xf32>
    %101 = arith.addf %99, %100 : vector<2x32xf32>
    %102 = math.tanh %101 : vector<2x32xf32>
    %103 = arith.mulf %98, %102 : vector<2x32xf32>
    %104 = vector.extract_strided_slice %9 {offsets = [2, 0], sizes = [1, 128], strides = [1, 1]} : vector<16x128xf32> to vector<1x128xf32>
    %105 = vector.extract_strided_slice %9 {offsets = [10, 0], sizes = [1, 128], strides = [1, 1]} : vector<16x128xf32> to vector<1x128xf32>
    %106 = tpu.concatenate %104, %105 in 0 : vector<1x128xf32>, vector<1x128xf32> -> vector<2x128xf32>
    %107 = arith.truncf %82 : vector<2x32xf32> to vector<2x32xbf16>
    %cst_30 = arith.constant dense<0.000000e+00> : vector<2x128xf32>
    %108 = tpu.matmul %107, %10, %cst_30 {dimension_numbers = #tpu.dot_dimension_numbers<[1], [0], [0], [1], [0, 0, 1, 1], [], []>} : vector<2x32xbf16>, vector<32x128xbf16>, vector<2x128xf32> -> vector<2x128xf32>
    %109 = arith.addf %106, %108 : vector<2x128xf32>
    %110 = arith.negf %109 : vector<2x128xf32>
    %111 = math.exp %110 : vector<2x128xf32>
    %cst_31 = arith.constant 1.000000e+00 : f32
    %112 = vector.broadcast %cst_31 : f32 to vector<2x128xf32>
    %113 = arith.addf %112, %111 : vector<2x128xf32>
    %114 = arith.divf %112, %113 : vector<2x128xf32>
    %115 = math.tanh %109 : vector<2x128xf32>
    %116 = vector.extract_strided_slice %114 {offsets = [0, 0], sizes = [2, 32], strides = [1, 1]} : vector<2x128xf32> to vector<2x32xf32>
    %117 = vector.extract_strided_slice %114 {offsets = [0, 32], sizes = [2, 32], strides = [1, 1]} : vector<2x128xf32> to vector<2x32xf32>
    %118 = vector.extract_strided_slice %115 {offsets = [0, 64], sizes = [2, 32], strides = [1, 1]} : vector<2x128xf32> to vector<2x32xf32>
    %119 = vector.extract_strided_slice %114 {offsets = [0, 96], sizes = [2, 32], strides = [1, 1]} : vector<2x128xf32> to vector<2x32xf32>
    %120 = arith.mulf %117, %80 : vector<2x32xf32>
    %121 = arith.mulf %116, %118 : vector<2x32xf32>
    %122 = arith.addf %120, %121 : vector<2x32xf32>
    %123 = math.tanh %122 : vector<2x32xf32>
    %124 = arith.mulf %119, %123 : vector<2x32xf32>
    %125 = arith.truncf %124 : vector<2x32xf32> to vector<2x32xbf16>
    %cst_32 = arith.constant dense<0.000000e+00> : vector<2x128xf32>
    %126 = tpu.matmul %125, %12, %cst_32 {dimension_numbers = #tpu.dot_dimension_numbers<[1], [0], [0], [1], [0, 0, 1, 1], [], []>} : vector<2x32xbf16>, vector<32x128xbf16>, vector<2x128xf32> -> vector<2x128xf32>
    %127 = arith.addf %126, %15 : vector<2x128xf32>
    %128 = arith.truncf %103 : vector<2x32xf32> to vector<2x32xbf16>
    %cst_33 = arith.constant dense<0.000000e+00> : vector<2x128xf32>
    %129 = tpu.matmul %128, %11, %cst_33 {dimension_numbers = #tpu.dot_dimension_numbers<[1], [0], [0], [1], [0, 0, 1, 1], [], []>} : vector<2x32xbf16>, vector<32x128xbf16>, vector<2x128xf32> -> vector<2x128xf32>
    %130 = arith.addf %127, %129 : vector<2x128xf32>
    %131 = arith.negf %130 : vector<2x128xf32>
    %132 = math.exp %131 : vector<2x128xf32>
    %cst_34 = arith.constant 1.000000e+00 : f32
    %133 = vector.broadcast %cst_34 : f32 to vector<2x128xf32>
    %134 = arith.addf %133, %132 : vector<2x128xf32>
    %135 = arith.divf %133, %134 : vector<2x128xf32>
    %136 = math.tanh %130 : vector<2x128xf32>
    %137 = vector.extract_strided_slice %135 {offsets = [0, 0], sizes = [2, 32], strides = [1, 1]} : vector<2x128xf32> to vector<2x32xf32>
    %138 = vector.extract_strided_slice %135 {offsets = [0, 32], sizes = [2, 32], strides = [1, 1]} : vector<2x128xf32> to vector<2x32xf32>
    %139 = vector.extract_strided_slice %136 {offsets = [0, 64], sizes = [2, 32], strides = [1, 1]} : vector<2x128xf32> to vector<2x32xf32>
    %140 = vector.extract_strided_slice %135 {offsets = [0, 96], sizes = [2, 32], strides = [1, 1]} : vector<2x128xf32> to vector<2x32xf32>
    %141 = arith.mulf %138, %101 : vector<2x32xf32>
    %142 = arith.mulf %137, %139 : vector<2x32xf32>
    %143 = arith.addf %141, %142 : vector<2x32xf32>
    %144 = math.tanh %143 : vector<2x32xf32>
    %145 = arith.mulf %140, %144 : vector<2x32xf32>
    %146 = vector.extract_strided_slice %9 {offsets = [3, 0], sizes = [1, 128], strides = [1, 1]} : vector<16x128xf32> to vector<1x128xf32>
    %147 = vector.extract_strided_slice %9 {offsets = [11, 0], sizes = [1, 128], strides = [1, 1]} : vector<16x128xf32> to vector<1x128xf32>
    %148 = tpu.concatenate %146, %147 in 0 : vector<1x128xf32>, vector<1x128xf32> -> vector<2x128xf32>
    %149 = arith.truncf %124 : vector<2x32xf32> to vector<2x32xbf16>
    %cst_35 = arith.constant dense<0.000000e+00> : vector<2x128xf32>
    %150 = tpu.matmul %149, %10, %cst_35 {dimension_numbers = #tpu.dot_dimension_numbers<[1], [0], [0], [1], [0, 0, 1, 1], [], []>} : vector<2x32xbf16>, vector<32x128xbf16>, vector<2x128xf32> -> vector<2x128xf32>
    %151 = arith.addf %148, %150 : vector<2x128xf32>
    %152 = arith.negf %151 : vector<2x128xf32>
    %153 = math.exp %152 : vector<2x128xf32>
    %cst_36 = arith.constant 1.000000e+00 : f32
    %154 = vector.broadcast %cst_36 : f32 to vector<2x128xf32>
    %155 = arith.addf %154, %153 : vector<2x128xf32>
    %156 = arith.divf %154, %155 : vector<2x128xf32>
    %157 = math.tanh %151 : vector<2x128xf32>
    %158 = vector.extract_strided_slice %156 {offsets = [0, 0], sizes = [2, 32], strides = [1, 1]} : vector<2x128xf32> to vector<2x32xf32>
    %159 = vector.extract_strided_slice %156 {offsets = [0, 32], sizes = [2, 32], strides = [1, 1]} : vector<2x128xf32> to vector<2x32xf32>
    %160 = vector.extract_strided_slice %157 {offsets = [0, 64], sizes = [2, 32], strides = [1, 1]} : vector<2x128xf32> to vector<2x32xf32>
    %161 = vector.extract_strided_slice %156 {offsets = [0, 96], sizes = [2, 32], strides = [1, 1]} : vector<2x128xf32> to vector<2x32xf32>
    %162 = arith.mulf %159, %122 : vector<2x32xf32>
    %163 = arith.mulf %158, %160 : vector<2x32xf32>
    %164 = arith.addf %162, %163 : vector<2x32xf32>
    %165 = math.tanh %164 : vector<2x32xf32>
    %166 = arith.mulf %161, %165 : vector<2x32xf32>
    %167 = arith.truncf %166 : vector<2x32xf32> to vector<2x32xbf16>
    %cst_37 = arith.constant dense<0.000000e+00> : vector<2x128xf32>
    %168 = tpu.matmul %167, %12, %cst_37 {dimension_numbers = #tpu.dot_dimension_numbers<[1], [0], [0], [1], [0, 0, 1, 1], [], []>} : vector<2x32xbf16>, vector<32x128xbf16>, vector<2x128xf32> -> vector<2x128xf32>
    %169 = arith.addf %168, %15 : vector<2x128xf32>
    %170 = arith.truncf %145 : vector<2x32xf32> to vector<2x32xbf16>
    %cst_38 = arith.constant dense<0.000000e+00> : vector<2x128xf32>
    %171 = tpu.matmul %170, %11, %cst_38 {dimension_numbers = #tpu.dot_dimension_numbers<[1], [0], [0], [1], [0, 0, 1, 1], [], []>} : vector<2x32xbf16>, vector<32x128xbf16>, vector<2x128xf32> -> vector<2x128xf32>
    %172 = arith.addf %169, %171 : vector<2x128xf32>
    %173 = arith.negf %172 : vector<2x128xf32>
    %174 = math.exp %173 : vector<2x128xf32>
    %cst_39 = arith.constant 1.000000e+00 : f32
    %175 = vector.broadcast %cst_39 : f32 to vector<2x128xf32>
    %176 = arith.addf %175, %174 : vector<2x128xf32>
    %177 = arith.divf %175, %176 : vector<2x128xf32>
    %178 = math.tanh %172 : vector<2x128xf32>
    %179 = vector.extract_strided_slice %177 {offsets = [0, 0], sizes = [2, 32], strides = [1, 1]} : vector<2x128xf32> to vector<2x32xf32>
    %180 = vector.extract_strided_slice %177 {offsets = [0, 32], sizes = [2, 32], strides = [1, 1]} : vector<2x128xf32> to vector<2x32xf32>
    %181 = vector.extract_strided_slice %178 {offsets = [0, 64], sizes = [2, 32], strides = [1, 1]} : vector<2x128xf32> to vector<2x32xf32>
    %182 = vector.extract_strided_slice %177 {offsets = [0, 96], sizes = [2, 32], strides = [1, 1]} : vector<2x128xf32> to vector<2x32xf32>
    %183 = arith.mulf %180, %143 : vector<2x32xf32>
    %184 = arith.mulf %179, %181 : vector<2x32xf32>
    %185 = arith.addf %183, %184 : vector<2x32xf32>
    %186 = math.tanh %185 : vector<2x32xf32>
    %187 = arith.mulf %182, %186 : vector<2x32xf32>
    %188 = vector.extract_strided_slice %9 {offsets = [4, 0], sizes = [1, 128], strides = [1, 1]} : vector<16x128xf32> to vector<1x128xf32>
    %189 = vector.extract_strided_slice %9 {offsets = [12, 0], sizes = [1, 128], strides = [1, 1]} : vector<16x128xf32> to vector<1x128xf32>
    %190 = tpu.concatenate %188, %189 in 0 : vector<1x128xf32>, vector<1x128xf32> -> vector<2x128xf32>
    %191 = arith.truncf %166 : vector<2x32xf32> to vector<2x32xbf16>
    %cst_40 = arith.constant dense<0.000000e+00> : vector<2x128xf32>
    %192 = tpu.matmul %191, %10, %cst_40 {dimension_numbers = #tpu.dot_dimension_numbers<[1], [0], [0], [1], [0, 0, 1, 1], [], []>} : vector<2x32xbf16>, vector<32x128xbf16>, vector<2x128xf32> -> vector<2x128xf32>
    %193 = arith.addf %190, %192 : vector<2x128xf32>
    %194 = arith.negf %193 : vector<2x128xf32>
    %195 = math.exp %194 : vector<2x128xf32>
    %cst_41 = arith.constant 1.000000e+00 : f32
    %196 = vector.broadcast %cst_41 : f32 to vector<2x128xf32>
    %197 = arith.addf %196, %195 : vector<2x128xf32>
    %198 = arith.divf %196, %197 : vector<2x128xf32>
    %199 = math.tanh %193 : vector<2x128xf32>
    %200 = vector.extract_strided_slice %198 {offsets = [0, 0], sizes = [2, 32], strides = [1, 1]} : vector<2x128xf32> to vector<2x32xf32>
    %201 = vector.extract_strided_slice %198 {offsets = [0, 32], sizes = [2, 32], strides = [1, 1]} : vector<2x128xf32> to vector<2x32xf32>
    %202 = vector.extract_strided_slice %199 {offsets = [0, 64], sizes = [2, 32], strides = [1, 1]} : vector<2x128xf32> to vector<2x32xf32>
    %203 = vector.extract_strided_slice %198 {offsets = [0, 96], sizes = [2, 32], strides = [1, 1]} : vector<2x128xf32> to vector<2x32xf32>
    %204 = arith.mulf %201, %164 : vector<2x32xf32>
    %205 = arith.mulf %200, %202 : vector<2x32xf32>
    %206 = arith.addf %204, %205 : vector<2x32xf32>
    %207 = math.tanh %206 : vector<2x32xf32>
    %208 = arith.mulf %203, %207 : vector<2x32xf32>
    %209 = arith.truncf %208 : vector<2x32xf32> to vector<2x32xbf16>
    %cst_42 = arith.constant dense<0.000000e+00> : vector<2x128xf32>
    %210 = tpu.matmul %209, %12, %cst_42 {dimension_numbers = #tpu.dot_dimension_numbers<[1], [0], [0], [1], [0, 0, 1, 1], [], []>} : vector<2x32xbf16>, vector<32x128xbf16>, vector<2x128xf32> -> vector<2x128xf32>
    %211 = arith.addf %210, %15 : vector<2x128xf32>
    %212 = arith.truncf %187 : vector<2x32xf32> to vector<2x32xbf16>
    %cst_43 = arith.constant dense<0.000000e+00> : vector<2x128xf32>
    %213 = tpu.matmul %212, %11, %cst_43 {dimension_numbers = #tpu.dot_dimension_numbers<[1], [0], [0], [1], [0, 0, 1, 1], [], []>} : vector<2x32xbf16>, vector<32x128xbf16>, vector<2x128xf32> -> vector<2x128xf32>
    %214 = arith.addf %211, %213 : vector<2x128xf32>
    %215 = arith.negf %214 : vector<2x128xf32>
    %216 = math.exp %215 : vector<2x128xf32>
    %cst_44 = arith.constant 1.000000e+00 : f32
    %217 = vector.broadcast %cst_44 : f32 to vector<2x128xf32>
    %218 = arith.addf %217, %216 : vector<2x128xf32>
    %219 = arith.divf %217, %218 : vector<2x128xf32>
    %220 = math.tanh %214 : vector<2x128xf32>
    %221 = vector.extract_strided_slice %219 {offsets = [0, 0], sizes = [2, 32], strides = [1, 1]} : vector<2x128xf32> to vector<2x32xf32>
    %222 = vector.extract_strided_slice %219 {offsets = [0, 32], sizes = [2, 32], strides = [1, 1]} : vector<2x128xf32> to vector<2x32xf32>
    %223 = vector.extract_strided_slice %220 {offsets = [0, 64], sizes = [2, 32], strides = [1, 1]} : vector<2x128xf32> to vector<2x32xf32>
    %224 = vector.extract_strided_slice %219 {offsets = [0, 96], sizes = [2, 32], strides = [1, 1]} : vector<2x128xf32> to vector<2x32xf32>
    %225 = arith.mulf %222, %185 : vector<2x32xf32>
    %226 = arith.mulf %221, %223 : vector<2x32xf32>
    %227 = arith.addf %225, %226 : vector<2x32xf32>
    %228 = math.tanh %227 : vector<2x32xf32>
    %229 = arith.mulf %224, %228 : vector<2x32xf32>
    %230 = vector.extract_strided_slice %9 {offsets = [5, 0], sizes = [1, 128], strides = [1, 1]} : vector<16x128xf32> to vector<1x128xf32>
    %231 = vector.extract_strided_slice %9 {offsets = [13, 0], sizes = [1, 128], strides = [1, 1]} : vector<16x128xf32> to vector<1x128xf32>
    %232 = tpu.concatenate %230, %231 in 0 : vector<1x128xf32>, vector<1x128xf32> -> vector<2x128xf32>
    %233 = arith.truncf %208 : vector<2x32xf32> to vector<2x32xbf16>
    %cst_45 = arith.constant dense<0.000000e+00> : vector<2x128xf32>
    %234 = tpu.matmul %233, %10, %cst_45 {dimension_numbers = #tpu.dot_dimension_numbers<[1], [0], [0], [1], [0, 0, 1, 1], [], []>} : vector<2x32xbf16>, vector<32x128xbf16>, vector<2x128xf32> -> vector<2x128xf32>
    %235 = arith.addf %232, %234 : vector<2x128xf32>
    %236 = arith.negf %235 : vector<2x128xf32>
    %237 = math.exp %236 : vector<2x128xf32>
    %cst_46 = arith.constant 1.000000e+00 : f32
    %238 = vector.broadcast %cst_46 : f32 to vector<2x128xf32>
    %239 = arith.addf %238, %237 : vector<2x128xf32>
    %240 = arith.divf %238, %239 : vector<2x128xf32>
    %241 = math.tanh %235 : vector<2x128xf32>
    %242 = vector.extract_strided_slice %240 {offsets = [0, 0], sizes = [2, 32], strides = [1, 1]} : vector<2x128xf32> to vector<2x32xf32>
    %243 = vector.extract_strided_slice %240 {offsets = [0, 32], sizes = [2, 32], strides = [1, 1]} : vector<2x128xf32> to vector<2x32xf32>
    %244 = vector.extract_strided_slice %241 {offsets = [0, 64], sizes = [2, 32], strides = [1, 1]} : vector<2x128xf32> to vector<2x32xf32>
    %245 = vector.extract_strided_slice %240 {offsets = [0, 96], sizes = [2, 32], strides = [1, 1]} : vector<2x128xf32> to vector<2x32xf32>
    %246 = arith.mulf %243, %206 : vector<2x32xf32>
    %247 = arith.mulf %242, %244 : vector<2x32xf32>
    %248 = arith.addf %246, %247 : vector<2x32xf32>
    %249 = math.tanh %248 : vector<2x32xf32>
    %250 = arith.mulf %245, %249 : vector<2x32xf32>
    %251 = arith.truncf %250 : vector<2x32xf32> to vector<2x32xbf16>
    %cst_47 = arith.constant dense<0.000000e+00> : vector<2x128xf32>
    %252 = tpu.matmul %251, %12, %cst_47 {dimension_numbers = #tpu.dot_dimension_numbers<[1], [0], [0], [1], [0, 0, 1, 1], [], []>} : vector<2x32xbf16>, vector<32x128xbf16>, vector<2x128xf32> -> vector<2x128xf32>
    %253 = arith.addf %252, %15 : vector<2x128xf32>
    %254 = arith.truncf %229 : vector<2x32xf32> to vector<2x32xbf16>
    %cst_48 = arith.constant dense<0.000000e+00> : vector<2x128xf32>
    %255 = tpu.matmul %254, %11, %cst_48 {dimension_numbers = #tpu.dot_dimension_numbers<[1], [0], [0], [1], [0, 0, 1, 1], [], []>} : vector<2x32xbf16>, vector<32x128xbf16>, vector<2x128xf32> -> vector<2x128xf32>
    %256 = arith.addf %253, %255 : vector<2x128xf32>
    %257 = arith.negf %256 : vector<2x128xf32>
    %258 = math.exp %257 : vector<2x128xf32>
    %cst_49 = arith.constant 1.000000e+00 : f32
    %259 = vector.broadcast %cst_49 : f32 to vector<2x128xf32>
    %260 = arith.addf %259, %258 : vector<2x128xf32>
    %261 = arith.divf %259, %260 : vector<2x128xf32>
    %262 = math.tanh %256 : vector<2x128xf32>
    %263 = vector.extract_strided_slice %261 {offsets = [0, 0], sizes = [2, 32], strides = [1, 1]} : vector<2x128xf32> to vector<2x32xf32>
    %264 = vector.extract_strided_slice %261 {offsets = [0, 32], sizes = [2, 32], strides = [1, 1]} : vector<2x128xf32> to vector<2x32xf32>
    %265 = vector.extract_strided_slice %262 {offsets = [0, 64], sizes = [2, 32], strides = [1, 1]} : vector<2x128xf32> to vector<2x32xf32>
    %266 = vector.extract_strided_slice %261 {offsets = [0, 96], sizes = [2, 32], strides = [1, 1]} : vector<2x128xf32> to vector<2x32xf32>
    %267 = arith.mulf %264, %227 : vector<2x32xf32>
    %268 = arith.mulf %263, %265 : vector<2x32xf32>
    %269 = arith.addf %267, %268 : vector<2x32xf32>
    %270 = math.tanh %269 : vector<2x32xf32>
    %271 = arith.mulf %266, %270 : vector<2x32xf32>
    %272 = vector.extract_strided_slice %9 {offsets = [6, 0], sizes = [1, 128], strides = [1, 1]} : vector<16x128xf32> to vector<1x128xf32>
    %273 = vector.extract_strided_slice %9 {offsets = [14, 0], sizes = [1, 128], strides = [1, 1]} : vector<16x128xf32> to vector<1x128xf32>
    %274 = tpu.concatenate %272, %273 in 0 : vector<1x128xf32>, vector<1x128xf32> -> vector<2x128xf32>
    %275 = arith.truncf %250 : vector<2x32xf32> to vector<2x32xbf16>
    %cst_50 = arith.constant dense<0.000000e+00> : vector<2x128xf32>
    %276 = tpu.matmul %275, %10, %cst_50 {dimension_numbers = #tpu.dot_dimension_numbers<[1], [0], [0], [1], [0, 0, 1, 1], [], []>} : vector<2x32xbf16>, vector<32x128xbf16>, vector<2x128xf32> -> vector<2x128xf32>
    %277 = arith.addf %274, %276 : vector<2x128xf32>
    %278 = arith.negf %277 : vector<2x128xf32>
    %279 = math.exp %278 : vector<2x128xf32>
    %cst_51 = arith.constant 1.000000e+00 : f32
    %280 = vector.broadcast %cst_51 : f32 to vector<2x128xf32>
    %281 = arith.addf %280, %279 : vector<2x128xf32>
    %282 = arith.divf %280, %281 : vector<2x128xf32>
    %283 = math.tanh %277 : vector<2x128xf32>
    %284 = vector.extract_strided_slice %282 {offsets = [0, 0], sizes = [2, 32], strides = [1, 1]} : vector<2x128xf32> to vector<2x32xf32>
    %285 = vector.extract_strided_slice %282 {offsets = [0, 32], sizes = [2, 32], strides = [1, 1]} : vector<2x128xf32> to vector<2x32xf32>
    %286 = vector.extract_strided_slice %283 {offsets = [0, 64], sizes = [2, 32], strides = [1, 1]} : vector<2x128xf32> to vector<2x32xf32>
    %287 = vector.extract_strided_slice %282 {offsets = [0, 96], sizes = [2, 32], strides = [1, 1]} : vector<2x128xf32> to vector<2x32xf32>
    %288 = arith.mulf %285, %248 : vector<2x32xf32>
    %289 = arith.mulf %284, %286 : vector<2x32xf32>
    %290 = arith.addf %288, %289 : vector<2x32xf32>
    %291 = math.tanh %290 : vector<2x32xf32>
    %292 = arith.mulf %287, %291 : vector<2x32xf32>
    %293 = arith.truncf %292 : vector<2x32xf32> to vector<2x32xbf16>
    %cst_52 = arith.constant dense<0.000000e+00> : vector<2x128xf32>
    %294 = tpu.matmul %293, %12, %cst_52 {dimension_numbers = #tpu.dot_dimension_numbers<[1], [0], [0], [1], [0, 0, 1, 1], [], []>} : vector<2x32xbf16>, vector<32x128xbf16>, vector<2x128xf32> -> vector<2x128xf32>
    %295 = arith.addf %294, %15 : vector<2x128xf32>
    %296 = arith.truncf %271 : vector<2x32xf32> to vector<2x32xbf16>
    %cst_53 = arith.constant dense<0.000000e+00> : vector<2x128xf32>
    %297 = tpu.matmul %296, %11, %cst_53 {dimension_numbers = #tpu.dot_dimension_numbers<[1], [0], [0], [1], [0, 0, 1, 1], [], []>} : vector<2x32xbf16>, vector<32x128xbf16>, vector<2x128xf32> -> vector<2x128xf32>
    %298 = arith.addf %295, %297 : vector<2x128xf32>
    %299 = arith.negf %298 : vector<2x128xf32>
    %300 = math.exp %299 : vector<2x128xf32>
    %cst_54 = arith.constant 1.000000e+00 : f32
    %301 = vector.broadcast %cst_54 : f32 to vector<2x128xf32>
    %302 = arith.addf %301, %300 : vector<2x128xf32>
    %303 = arith.divf %301, %302 : vector<2x128xf32>
    %304 = math.tanh %298 : vector<2x128xf32>
    %305 = vector.extract_strided_slice %303 {offsets = [0, 0], sizes = [2, 32], strides = [1, 1]} : vector<2x128xf32> to vector<2x32xf32>
    %306 = vector.extract_strided_slice %303 {offsets = [0, 32], sizes = [2, 32], strides = [1, 1]} : vector<2x128xf32> to vector<2x32xf32>
    %307 = vector.extract_strided_slice %304 {offsets = [0, 64], sizes = [2, 32], strides = [1, 1]} : vector<2x128xf32> to vector<2x32xf32>
    %308 = vector.extract_strided_slice %303 {offsets = [0, 96], sizes = [2, 32], strides = [1, 1]} : vector<2x128xf32> to vector<2x32xf32>
    %309 = arith.mulf %306, %269 : vector<2x32xf32>
    %310 = arith.mulf %305, %307 : vector<2x32xf32>
    %311 = arith.addf %309, %310 : vector<2x32xf32>
    %312 = math.tanh %311 : vector<2x32xf32>
    %313 = arith.mulf %308, %312 : vector<2x32xf32>
    %314 = vector.extract_strided_slice %9 {offsets = [7, 0], sizes = [1, 128], strides = [1, 1]} : vector<16x128xf32> to vector<1x128xf32>
    %315 = vector.extract_strided_slice %9 {offsets = [15, 0], sizes = [1, 128], strides = [1, 1]} : vector<16x128xf32> to vector<1x128xf32>
    %316 = tpu.concatenate %314, %315 in 0 : vector<1x128xf32>, vector<1x128xf32> -> vector<2x128xf32>
    %317 = arith.truncf %292 : vector<2x32xf32> to vector<2x32xbf16>
    %cst_55 = arith.constant dense<0.000000e+00> : vector<2x128xf32>
    %318 = tpu.matmul %317, %10, %cst_55 {dimension_numbers = #tpu.dot_dimension_numbers<[1], [0], [0], [1], [0, 0, 1, 1], [], []>} : vector<2x32xbf16>, vector<32x128xbf16>, vector<2x128xf32> -> vector<2x128xf32>
    %319 = arith.addf %316, %318 : vector<2x128xf32>
    %320 = arith.negf %319 : vector<2x128xf32>
    %321 = math.exp %320 : vector<2x128xf32>
    %cst_56 = arith.constant 1.000000e+00 : f32
    %322 = vector.broadcast %cst_56 : f32 to vector<2x128xf32>
    %323 = arith.addf %322, %321 : vector<2x128xf32>
    %324 = arith.divf %322, %323 : vector<2x128xf32>
    %325 = math.tanh %319 : vector<2x128xf32>
    %326 = vector.extract_strided_slice %324 {offsets = [0, 0], sizes = [2, 32], strides = [1, 1]} : vector<2x128xf32> to vector<2x32xf32>
    %327 = vector.extract_strided_slice %324 {offsets = [0, 32], sizes = [2, 32], strides = [1, 1]} : vector<2x128xf32> to vector<2x32xf32>
    %328 = vector.extract_strided_slice %325 {offsets = [0, 64], sizes = [2, 32], strides = [1, 1]} : vector<2x128xf32> to vector<2x32xf32>
    %329 = vector.extract_strided_slice %324 {offsets = [0, 96], sizes = [2, 32], strides = [1, 1]} : vector<2x128xf32> to vector<2x32xf32>
    %330 = arith.mulf %327, %290 : vector<2x32xf32>
    %331 = arith.mulf %326, %328 : vector<2x32xf32>
    %332 = arith.addf %330, %331 : vector<2x32xf32>
    %333 = math.tanh %332 : vector<2x32xf32>
    %334 = arith.mulf %329, %333 : vector<2x32xf32>
    %335 = arith.truncf %334 : vector<2x32xf32> to vector<2x32xbf16>
    %cst_57 = arith.constant dense<0.000000e+00> : vector<2x128xf32>
    %336 = tpu.matmul %335, %12, %cst_57 {dimension_numbers = #tpu.dot_dimension_numbers<[1], [0], [0], [1], [0, 0, 1, 1], [], []>} : vector<2x32xbf16>, vector<32x128xbf16>, vector<2x128xf32> -> vector<2x128xf32>
    %337 = arith.addf %336, %15 : vector<2x128xf32>
    %338 = arith.truncf %313 : vector<2x32xf32> to vector<2x32xbf16>
    %cst_58 = arith.constant dense<0.000000e+00> : vector<2x128xf32>
    %339 = tpu.matmul %338, %11, %cst_58 {dimension_numbers = #tpu.dot_dimension_numbers<[1], [0], [0], [1], [0, 0, 1, 1], [], []>} : vector<2x32xbf16>, vector<32x128xbf16>, vector<2x128xf32> -> vector<2x128xf32>
    %340 = arith.addf %337, %339 : vector<2x128xf32>
    %341 = arith.negf %340 : vector<2x128xf32>
    %342 = math.exp %341 : vector<2x128xf32>
    %cst_59 = arith.constant 1.000000e+00 : f32
    %343 = vector.broadcast %cst_59 : f32 to vector<2x128xf32>
    %344 = arith.addf %343, %342 : vector<2x128xf32>
    %345 = arith.divf %343, %344 : vector<2x128xf32>
    %346 = math.tanh %340 : vector<2x128xf32>
    %347 = vector.extract_strided_slice %345 {offsets = [0, 0], sizes = [2, 32], strides = [1, 1]} : vector<2x128xf32> to vector<2x32xf32>
    %348 = vector.extract_strided_slice %345 {offsets = [0, 32], sizes = [2, 32], strides = [1, 1]} : vector<2x128xf32> to vector<2x32xf32>
    %349 = vector.extract_strided_slice %346 {offsets = [0, 64], sizes = [2, 32], strides = [1, 1]} : vector<2x128xf32> to vector<2x32xf32>
    %350 = vector.extract_strided_slice %345 {offsets = [0, 96], sizes = [2, 32], strides = [1, 1]} : vector<2x128xf32> to vector<2x32xf32>
    %351 = arith.mulf %348, %311 : vector<2x32xf32>
    %352 = arith.mulf %347, %349 : vector<2x32xf32>
    %353 = arith.addf %351, %352 : vector<2x32xf32>
    %354 = math.tanh %353 : vector<2x32xf32>
    %355 = arith.mulf %350, %354 : vector<2x32xf32>
    %356 = tpu.concatenate %334, %355 in 0 : vector<2x32xf32>, vector<2x32xf32> -> vector<4x32xf32>
    %357 = arith.truncf %356 : vector<4x32xf32> to vector<4x32xbf16>
    %c0_60 = arith.constant 0 : index
    %c0_61 = arith.constant 0 : index
    %358 = vector.load %arg8[%c0_60, %c0_61] : memref<32x128xbf16, #tpu.memory_space<vmem>>, vector<32x128xbf16>
    %cst_62 = arith.constant dense<0.000000e+00> : vector<4x128xf32>
    %359 = tpu.matmul %357, %358, %cst_62 {dimension_numbers = #tpu.dot_dimension_numbers<[1], [0], [0], [1], [0, 0, 1, 1], [], []>} : vector<4x32xbf16>, vector<32x128xbf16>, vector<4x128xf32> -> vector<4x128xf32>
    %c0_63 = arith.constant 0 : index
    %c0_64 = arith.constant 0 : index
    %360 = vector.load %arg9[%c0_63, %c0_64] : memref<1x128xf32, #tpu.memory_space<vmem>>, vector<1x128xf32>
    %361 = vector.broadcast %360 : vector<1x128xf32> to vector<4x128xf32>
    %362 = arith.addf %359, %361 : vector<4x128xf32>
    %363 = vector.extract_strided_slice %362 {offsets = [0, 0], sizes = [4, 5], strides = [1, 1]} : vector<4x128xf32> to vector<4x5xf32>
    %c0_65 = arith.constant 0 : index
    %c0_66 = arith.constant 0 : index
    %364 = vector.load %arg10[%c0_65, %c0_66] : memref<4x5xf32, #tpu.memory_space<vmem>>, vector<4x5xf32>
    tpu.vector_store %arg10[%c0_65, %c0_66], %363 {strides = array<i32>} : memref<4x5xf32, #tpu.memory_space<vmem>>, vector<4x5xf32>,
    return
  }
  func.func @transform_0(%arg0: i32) -> (i32, i32, i32) {
    %c0_i32 = arith.constant 0 : i32
    %c0_i32_0 = arith.constant 0 : i32
    %c0_i32_1 = arith.constant 0 : i32
    %c0_i32_2 = arith.constant 0 : i32
    return %c0_i32, %c0_i32_0, %c0_i32_1 : i32, i32, i32
  }
  func.func @transform_1(%arg0: i32) -> (i32, i32) {
    %c0_i32 = arith.constant 0 : i32
    %c0_i32_0 = arith.constant 0 : i32
    %c0_i32_1 = arith.constant 0 : i32
    return %c0_i32, %c0_i32_0 : i32, i32
  }
  func.func @transform_2(%arg0: i32) -> (i32, i32) {
    %c0_i32 = arith.constant 0 : i32
    %c0_i32_0 = arith.constant 0 : i32
    %c0_i32_1 = arith.constant 0 : i32
    return %c0_i32, %c0_i32_0 : i32, i32
  }
  func.func @transform_3(%arg0: i32) -> (i32, i32) {
    %c0_i32 = arith.constant 0 : i32
    %c0_i32_0 = arith.constant 0 : i32
    %c0_i32_1 = arith.constant 0 : i32
    return %c0_i32, %c0_i32_0 : i32, i32
  }
  func.func @transform_4(%arg0: i32) -> (i32, i32) {
    %c0_i32 = arith.constant 0 : i32
    %c0_i32_0 = arith.constant 0 : i32
    %c0_i32_1 = arith.constant 0 : i32
    return %c0_i32, %c0_i32_0 : i32, i32
  }
  func.func @transform_5(%arg0: i32) -> (i32, i32) {
    %c0_i32 = arith.constant 0 : i32
    %c0_i32_0 = arith.constant 0 : i32
    %c0_i32_1 = arith.constant 0 : i32
    return %c0_i32, %c0_i32_0 : i32, i32
  }
  func.func @transform_6(%arg0: i32) -> (i32, i32) {
    %c0_i32 = arith.constant 0 : i32
    %c0_i32_0 = arith.constant 0 : i32
    %c0_i32_1 = arith.constant 0 : i32
    return %c0_i32, %c0_i32_0 : i32, i32
  }
  func.func @transform_7(%arg0: i32) -> (i32, i32) {
    %c0_i32 = arith.constant 0 : i32
    %c0_i32_0 = arith.constant 0 : i32
    %c0_i32_1 = arith.constant 0 : i32
    return %c0_i32, %c0_i32_0 : i32, i32
  }
  func.func @transform_8(%arg0: i32) -> (i32, i32) {
    %c0_i32 = arith.constant 0 : i32
    %c0_i32_0 = arith.constant 0 : i32
    %c0_i32_1 = arith.constant 0 : i32
    return %c0_i32, %c0_i32_0 : i32, i32
  }
  func.func @transform_9(%arg0: i32) -> (i32, i32) {
    %c0_i32 = arith.constant 0 : i32
    %c0_i32_0 = arith.constant 0 : i32
    %c0_i32_1 = arith.constant 0 : i32
    return %c0_i32, %c0_i32_0 : i32, i32
  }
}

</mosaic_0001>

<llo_original>
// kernel: decoder_forward.1
$region0: #{decoder_forward.1}
  #allocation0 [shape = 'u32[]', space=smem, size = 0x4, offset = 0x4, fixed_abs, tag = 'smem constant byte address 0x4 - core index']
  #allocation1 [shape = 'u32[144,128]{1,0:T(1,128)}', space=vmem, size = 0x12000, scoped, tag = 'internal scratch']
  %s0 = inlined_call_operand.vmem [shape: f32[16,32,256], index: 0, kind: input, shape index: {}]
  %s1 = inlined_call_operand.vmem [shape: bf16[32,128], index: 1, kind: input, shape index: {}]
  %s2 = inlined_call_operand.vmem [shape: bf16[32,128], index: 2, kind: input, shape index: {}]
  %s3 = inlined_call_operand.vmem [shape: f32[1,128], index: 3, kind: input, shape index: {}]
  %s4 = inlined_call_operand.vmem [shape: bf16[32,128], index: 4, kind: input, shape index: {}]
  %s5 = inlined_call_operand.vmem [shape: bf16[32,128], index: 5, kind: input, shape index: {}]
  %s6 = inlined_call_operand.vmem [shape: f32[1,128], index: 6, kind: input, shape index: {}]
  %s7 = inlined_call_operand.vmem [shape: bf16[32,128], index: 7, kind: input, shape index: {}]
  %s8 = inlined_call_operand.vmem [shape: f32[1,128], index: 8, kind: input, shape index: {}]
  %s9 = inlined_call_operand.hbm [shape: f32[4,5], index: 9, kind: output, shape index: {}]
  %s10 = sld [smem:[#allocation0]]
  $region46: #{decoder_forward.1} parent=0
    _
  %s12 = ssub.s32 1, %s10
  %s13 = scalar_select 0, %s12, %s10
  $region1: #{decoder_forward.1} parent=0
    #allocation2 [shape = 'u8[2048]{0}', space=vmem, size = 0x800, scoped, tag = 'output window, operand 0, single buffered']
    #allocation3 [shape = 's32[1]{0}', space=sflag, size = 0x4, scoped, tag = 'scoped memory for decoder_forward.1']
    %14 = vsyncpa [#allocation3], 0
    // Predicated region
    $region2: #{decoder_forward.1} parent=1 // pred_check
      _
    $region3: #{decoder_forward.1} parent=1 // pred_check_branch
      %16 = sbr.rel (0) target = $region5
    $region4: #{decoder_forward.1} parent=1 // pred_region
      _
    $region5: #{decoder_forward.1} parent=1 // pred_fallthru
      _
    // Predicated region
    $region6: #{decoder_forward.1} parent=1 // pred_check
      _
    $region7: #{decoder_forward.1} parent=1 // pred_check_branch
      %18 = sbr.rel (0) target = $region9
    $region8: #{decoder_forward.1} parent=1 // pred_region
      _
    $region9: #{decoder_forward.1} parent=1 // pred_fallthru
      _
    // Predicated region
    $region10: #{decoder_forward.1} parent=1 // pred_check
      _
    $region11: #{decoder_forward.1} parent=1 // pred_check_branch
      %20 = sbr.rel (0) target = $region13
    $region12: #{decoder_forward.1} parent=1 // pred_region
      _
    $region13: #{decoder_forward.1} parent=1 // pred_fallthru
      _
    // Predicated region
    $region14: #{decoder_forward.1} parent=1 // pred_check
      _
    $region15: #{decoder_forward.1} parent=1 // pred_check_branch
      %22 = sbr.rel (0) target = $region17
    $region16: #{decoder_forward.1} parent=1 // pred_region
      _
    $region17: #{decoder_forward.1} parent=1 // pred_fallthru
      _
    // Predicated region
    $region18: #{decoder_forward.1} parent=1 // pred_check
      _
    $region19: #{decoder_forward.1} parent=1 // pred_check_branch
      %24 = sbr.rel (0) target = $region21
    $region20: #{decoder_forward.1} parent=1 // pred_region
      _
    $region21: #{decoder_forward.1} parent=1 // pred_fallthru
      _
    // Predicated region
    $region22: #{decoder_forward.1} parent=1 // pred_check
      _
    $region23: #{decoder_forward.1} parent=1 // pred_check_branch
      %26 = sbr.rel (0) target = $region25
    $region24: #{decoder_forward.1} parent=1 // pred_region
      _
    $region25: #{decoder_forward.1} parent=1 // pred_fallthru
      _
    // Predicated region
    $region26: #{decoder_forward.1} parent=1 // pred_check
      _
    $region27: #{decoder_forward.1} parent=1 // pred_check_branch
      %28 = sbr.rel (0) target = $region29
    $region28: #{decoder_forward.1} parent=1 // pred_region
      _
    $region29: #{decoder_forward.1} parent=1 // pred_fallthru
      _
    // Predicated region
    $region30: #{decoder_forward.1} parent=1 // pred_check
      _
    $region31: #{decoder_forward.1} parent=1 // pred_check_branch
      %30 = sbr.rel (0) target = $region33
    $region32: #{decoder_forward.1} parent=1 // pred_region
      _
    $region33: #{decoder_forward.1} parent=1 // pred_fallthru
      _
    // Predicated region
    $region34: #{decoder_forward.1} parent=1 // pred_check
      _
    $region35: #{decoder_forward.1} parent=1 // pred_check_branch
      %32 = sbr.rel (0) target = $region37
    $region36: #{decoder_forward.1} parent=1 // pred_region
      _
    $region37: #{decoder_forward.1} parent=1 // pred_fallthru
      _
    %v34 = vld [vmem:[%s0] sm:$0xff]
    %v35 = vld [vmem:[%s0 + $0x8] sm:$0xff]
    %v36 = vld [vmem:[%s0 + $0x10] sm:$0xff]
    %v37 = vld [vmem:[%s0 + $0x18] sm:$0xff]
    %v38 = vld [vmem:[%s0 + $0x20] sm:$0xff]
    %v39 = vld [vmem:[%s0 + $0x28] sm:$0xff]
    %v40 = vld [vmem:[%s0 + $0x30] sm:$0xff]
    %v41 = vld [vmem:[%s0 + $0x38] sm:$0xff]
    %v42 = vld [vmem:[%s0 + $0x40] sm:$0xff]
    %v43 = vld [vmem:[%s0 + $0x48] sm:$0xff]
    %v44 = vld [vmem:[%s0 + $0x50] sm:$0xff]
    %v45 = vld [vmem:[%s0 + $0x58] sm:$0xff]
    %v46 = vld [vmem:[%s0 + $0x60] sm:$0xff]
    %v47 = vld [vmem:[%s0 + $0x68] sm:$0xff]
    %v48 = vld [vmem:[%s0 + $0x70] sm:$0xff]
    %v49 = vld [vmem:[%s0 + $0x78] sm:$0xff]
    %v50 = vld [vmem:[%s0 + $0x80] sm:$0xff]
    %v51 = vld [vmem:[%s0 + $0x88] sm:$0xff]
    %v52 = vld [vmem:[%s0 + $0x90] sm:$0xff]
    %v53 = vld [vmem:[%s0 + $0x98] sm:$0xff]
    %v54 = vld [vmem:[%s0 + $0xa0] sm:$0xff]
    %v55 = vld [vmem:[%s0 + $0xa8] sm:$0xff]
    %v56 = vld [vmem:[%s0 + $0xb0] sm:$0xff]
    %v57 = vld [vmem:[%s0 + $0xb8] sm:$0xff]
    %v58 = vld [vmem:[%s0 + $0xc0] sm:$0xff]
    %v59 = vld [vmem:[%s0 + $0xc8] sm:$0xff]
    %v60 = vld [vmem:[%s0 + $0xd0] sm:$0xff]
    %v61 = vld [vmem:[%s0 + $0xd8] sm:$0xff]
    %v62 = vld [vmem:[%s0 + $0xe0] sm:$0xff]
    %v63 = vld [vmem:[%s0 + $0xe8] sm:$0xff]
    %v64 = vld [vmem:[%s0 + $0xf0] sm:$0xff]
    %v65 = vld [vmem:[%s0 + $0xf8] sm:$0xff]
    %v66 = vld [vmem:[%s0 + $0x100] sm:$0xff]
    %v67 = vld [vmem:[%s0 + $0x108] sm:$0xff]
    %v68 = vld [vmem:[%s0 + $0x110] sm:$0xff]
    %v69 = vld [vmem:[%s0 + $0x118] sm:$0xff]
    %v70 = vld [vmem:[%s0 + $0x120] sm:$0xff]
    %v71 = vld [vmem:[%s0 + $0x128] sm:$0xff]
    %v72 = vld [vmem:[%s0 + $0x130] sm:$0xff]
    %v73 = vld [vmem:[%s0 + $0x138] sm:$0xff]
    %v74 = vld [vmem:[%s0 + $0x140] sm:$0xff]
    %v75 = vld [vmem:[%s0 + $0x148] sm:$0xff]
    %v76 = vld [vmem:[%s0 + $0x150] sm:$0xff]
    %v77 = vld [vmem:[%s0 + $0x158] sm:$0xff]
    %v78 = vld [vmem:[%s0 + $0x160] sm:$0xff]
    %v79 = vld [vmem:[%s0 + $0x168] sm:$0xff]
    %v80 = vld [vmem:[%s0 + $0x170] sm:$0xff]
    %v81 = vld [vmem:[%s0 + $0x178] sm:$0xff]
    %v82 = vld [vmem:[%s0 + $0x180] sm:$0xff]
    %v83 = vld [vmem:[%s0 + $0x188] sm:$0xff]
    %v84 = vld [vmem:[%s0 + $0x190] sm:$0xff]
    %v85 = vld [vmem:[%s0 + $0x198] sm:$0xff]
    %v86 = vld [vmem:[%s0 + $0x1a0] sm:$0xff]
    %v87 = vld [vmem:[%s0 + $0x1a8] sm:$0xff]
    %v88 = vld [vmem:[%s0 + $0x1b0] sm:$0xff]
    %v89 = vld [vmem:[%s0 + $0x1b8] sm:$0xff]
    %v90 = vld [vmem:[%s0 + $0x1c0] sm:$0xff]
    %v91 = vld [vmem:[%s0 + $0x1c8] sm:$0xff]
    %v92 = vld [vmem:[%s0 + $0x1d0] sm:$0xff]
    %v93 = vld [vmem:[%s0 + $0x1d8] sm:$0xff]
    %v94 = vld [vmem:[%s0 + $0x1e0] sm:$0xff]
    %v95 = vld [vmem:[%s0 + $0x1e8] sm:$0xff]
    %v96 = vld [vmem:[%s0 + $0x1f0] sm:$0xff]
    %v97 = vld [vmem:[%s0 + $0x1f8] sm:$0xff]
    %v98 = vld [vmem:[%s0 + $0x200] sm:$0xff]
    %v99 = vld [vmem:[%s0 + $0x208] sm:$0xff]
    %v100 = vld [vmem:[%s0 + $0x210] sm:$0xff]
    %v101 = vld [vmem:[%s0 + $0x218] sm:$0xff]
    %v102 = vld [vmem:[%s0 + $0x220] sm:$0xff]
    %v103 = vld [vmem:[%s0 + $0x228] sm:$0xff]
    %v104 = vld [vmem:[%s0 + $0x230] sm:$0xff]
    %v105 = vld [vmem:[%s0 + $0x238] sm:$0xff]
    %v106 = vld [vmem:[%s0 + $0x240] sm:$0xff]
    %v107 = vld [vmem:[%s0 + $0x248] sm:$0xff]
    %v108 = vld [vmem:[%s0 + $0x250] sm:$0xff]
    %v109 = vld [vmem:[%s0 + $0x258] sm:$0xff]
    %v110 = vld [vmem:[%s0 + $0x260] sm:$0xff]
    %v111 = vld [vmem:[%s0 + $0x268] sm:$0xff]
    %v112 = vld [vmem:[%s0 + $0x270] sm:$0xff]
    %v113 = vld [vmem:[%s0 + $0x278] sm:$0xff]
    %v114 = vld [vmem:[%s0 + $0x280] sm:$0xff]
    %v115 = vld [vmem:[%s0 + $0x288] sm:$0xff]
    %v116 = vld [vmem:[%s0 + $0x290] sm:$0xff]
    %v117 = vld [vmem:[%s0 + $0x298] sm:$0xff]
    %v118 = vld [vmem:[%s0 + $0x2a0] sm:$0xff]
    %v119 = vld [vmem:[%s0 + $0x2a8] sm:$0xff]
    %v120 = vld [vmem:[%s0 + $0x2b0] sm:$0xff]
    %v121 = vld [vmem:[%s0 + $0x2b8] sm:$0xff]
    %v122 = vld [vmem:[%s0 + $0x2c0] sm:$0xff]
    %v123 = vld [vmem:[%s0 + $0x2c8] sm:$0xff]
    %v124 = vld [vmem:[%s0 + $0x2d0] sm:$0xff]
    %v125 = vld [vmem:[%s0 + $0x2d8] sm:$0xff]
    %v126 = vld [vmem:[%s0 + $0x2e0] sm:$0xff]
    %v127 = vld [vmem:[%s0 + $0x2e8] sm:$0xff]
    %v128 = vld [vmem:[%s0 + $0x2f0] sm:$0xff]
    %v129 = vld [vmem:[%s0 + $0x2f8] sm:$0xff]
    %v130 = vld [vmem:[%s0 + $0x300] sm:$0xff]
    %v131 = vld [vmem:[%s0 + $0x308] sm:$0xff]
    %v132 = vld [vmem:[%s0 + $0x310] sm:$0xff]
    %v133 = vld [vmem:[%s0 + $0x318] sm:$0xff]
    %v134 = vld [vmem:[%s0 + $0x320] sm:$0xff]
    %v135 = vld [vmem:[%s0 + $0x328] sm:$0xff]
    %v136 = vld [vmem:[%s0 + $0x330] sm:$0xff]
    %v137 = vld [vmem:[%s0 + $0x338] sm:$0xff]
    %v138 = vld [vmem:[%s0 + $0x340] sm:$0xff]
    %v139 = vld [vmem:[%s0 + $0x348] sm:$0xff]
    %v140 = vld [vmem:[%s0 + $0x350] sm:$0xff]
    %v141 = vld [vmem:[%s0 + $0x358] sm:$0xff]
    %v142 = vld [vmem:[%s0 + $0x360] sm:$0xff]
    %v143 = vld [vmem:[%s0 + $0x368] sm:$0xff]
    %v144 = vld [vmem:[%s0 + $0x370] sm:$0xff]
    %v145 = vld [vmem:[%s0 + $0x378] sm:$0xff]
    %v146 = vld [vmem:[%s0 + $0x380] sm:$0xff]
    %v147 = vld [vmem:[%s0 + $0x388] sm:$0xff]
    %v148 = vld [vmem:[%s0 + $0x390] sm:$0xff]
    %v149 = vld [vmem:[%s0 + $0x398] sm:$0xff]
    %v150 = vld [vmem:[%s0 + $0x3a0] sm:$0xff]
    %v151 = vld [vmem:[%s0 + $0x3a8] sm:$0xff]
    %v152 = vld [vmem:[%s0 + $0x3b0] sm:$0xff]
    %v153 = vld [vmem:[%s0 + $0x3b8] sm:$0xff]
    %v154 = vld [vmem:[%s0 + $0x3c0] sm:$0xff]
    %v155 = vld [vmem:[%s0 + $0x3c8] sm:$0xff]
    %v156 = vld [vmem:[%s0 + $0x3d0] sm:$0xff]
    %v157 = vld [vmem:[%s0 + $0x3d8] sm:$0xff]
    %v158 = vld [vmem:[%s0 + $0x3e0] sm:$0xff]
    %v159 = vld [vmem:[%s0 + $0x3e8] sm:$0xff]
    %v160 = vld [vmem:[%s0 + $0x3f0] sm:$0xff]
    %v161 = vld [vmem:[%s0 + $0x3f8] sm:$0xff]
    %v162 = vadd.f32 %v34, %v35
    %163 = vadd.xlane.f32.xlu0 %v162
    %v164 = vpop.xlane.xlu0 %163
    %v165 = vadd.f32 %v36, %v37
    %166 = vadd.xlane.f32.xlu0 %v165
    %v167 = vpop.xlane.xlu0 %166
    %v168 = vadd.f32 %v38, %v39
    %169 = vadd.xlane.f32.xlu0 %v168
    %v170 = vpop.xlane.xlu0 %169
    %v171 = vadd.f32 %v40, %v41
    %172 = vadd.xlane.f32.xlu0 %v171
    %v173 = vpop.xlane.xlu0 %172
    %v174 = vadd.f32 %v42, %v43
    %175 = vadd.xlane.f32.xlu0 %v174
    %v176 = vpop.xlane.xlu0 %175
    %v177 = vadd.f32 %v44, %v45
    %178 = vadd.xlane.f32.xlu0 %v177
    %v179 = vpop.xlane.xlu0 %178
    %v180 = vadd.f32 %v46, %v47
    %181 = vadd.xlane.f32.xlu0 %v180
    %v182 = vpop.xlane.xlu0 %181
    %v183 = vadd.f32 %v48, %v49
    %184 = vadd.xlane.f32.xlu0 %v183
    %v185 = vpop.xlane.xlu0 %184
    %v186 = vadd.f32 %v50, %v51
    %187 = vadd.xlane.f32.xlu0 %v186
    %v188 = vpop.xlane.xlu0 %187
    %v189 = vadd.f32 %v52, %v53
    %190 = vadd.xlane.f32.xlu0 %v189
    %v191 = vpop.xlane.xlu0 %190
    %v192 = vadd.f32 %v54, %v55
    %193 = vadd.xlane.f32.xlu0 %v192
    %v194 = vpop.xlane.xlu0 %193
    %v195 = vadd.f32 %v56, %v57
    %196 = vadd.xlane.f32.xlu0 %v195
    %v197 = vpop.xlane.xlu0 %196
    %v198 = vadd.f32 %v58, %v59
    %199 = vadd.xlane.f32.xlu0 %v198
    %v200 = vpop.xlane.xlu0 %199
    %v201 = vadd.f32 %v60, %v61
    %202 = vadd.xlane.f32.xlu0 %v201
    %v203 = vpop.xlane.xlu0 %202
    %v204 = vadd.f32 %v62, %v63
    %205 = vadd.xlane.f32.xlu0 %v204
    %v206 = vpop.xlane.xlu0 %205
    %v207 = vadd.f32 %v64, %v65
    %208 = vadd.xlane.f32.xlu0 %v207
    %v209 = vpop.xlane.xlu0 %208
    %v210 = vadd.f32 %v66, %v67
    %211 = vadd.xlane.f32.xlu0 %v210
    %v212 = vpop.xlane.xlu0 %211
    %v213 = vadd.f32 %v68, %v69
    %214 = vadd.xlane.f32.xlu0 %v213
    %v215 = vpop.xlane.xlu0 %214
    %v216 = vadd.f32 %v70, %v71
    %217 = vadd.xlane.f32.xlu0 %v216
    %v218 = vpop.xlane.xlu0 %217
    %v219 = vadd.f32 %v72, %v73
    %220 = vadd.xlane.f32.xlu0 %v219
    %v221 = vpop.xlane.xlu0 %220
    %v222 = vadd.f32 %v74, %v75
    %223 = vadd.xlane.f32.xlu0 %v222
    %v224 = vpop.xlane.xlu0 %223
    %v225 = vadd.f32 %v76, %v77
    %226 = vadd.xlane.f32.xlu0 %v225
    %v227 = vpop.xlane.xlu0 %226
    %v228 = vadd.f32 %v78, %v79
    %229 = vadd.xlane.f32.xlu0 %v228
    %v230 = vpop.xlane.xlu0 %229
    %v231 = vadd.f32 %v80, %v81
    %232 = vadd.xlane.f32.xlu0 %v231
    %v233 = vpop.xlane.xlu0 %232
    %v234 = vadd.f32 %v82, %v83
    %235 = vadd.xlane.f32.xlu0 %v234
    %v236 = vpop.xlane.xlu0 %235
    %v237 = vadd.f32 %v84, %v85
    %238 = vadd.xlane.f32.xlu0 %v237
    %v239 = vpop.xlane.xlu0 %238
    %v240 = vadd.f32 %v86, %v87
    %241 = vadd.xlane.f32.xlu0 %v240
    %v242 = vpop.xlane.xlu0 %241
    %v243 = vadd.f32 %v88, %v89
    %244 = vadd.xlane.f32.xlu0 %v243
    %v245 = vpop.xlane.xlu0 %244
    %v246 = vadd.f32 %v90, %v91
    %247 = vadd.xlane.f32.xlu0 %v246
    %v248 = vpop.xlane.xlu0 %247
    %v249 = vadd.f32 %v92, %v93
    %250 = vadd.xlane.f32.xlu0 %v249
    %v251 = vpop.xlane.xlu0 %250
    %v252 = vadd.f32 %v94, %v95
    %253 = vadd.xlane.f32.xlu0 %v252
    %v254 = vpop.xlane.xlu0 %253
    %v255 = vadd.f32 %v96, %v97
    %256 = vadd.xlane.f32.xlu0 %v255
    %v257 = vpop.xlane.xlu0 %256
    %v258 = vadd.f32 %v98, %v99
    %259 = vadd.xlane.f32.xlu0 %v258
    %v260 = vpop.xlane.xlu0 %259
    %v261 = vadd.f32 %v100, %v101
    %262 = vadd.xlane.f32.xlu0 %v261
    %v263 = vpop.xlane.xlu0 %262
    %v264 = vadd.f32 %v102, %v103
    %265 = vadd.xlane.f32.xlu0 %v264
    %v266 = vpop.xlane.xlu0 %265
    %v267 = vadd.f32 %v104, %v105
    %268 = vadd.xlane.f32.xlu0 %v267
    %v269 = vpop.xlane.xlu0 %268
    %v270 = vadd.f32 %v106, %v107
    %271 = vadd.xlane.f32.xlu0 %v270
    %v272 = vpop.xlane.xlu0 %271
    %v273 = vadd.f32 %v108, %v109
    %274 = vadd.xlane.f32.xlu0 %v273
    %v275 = vpop.xlane.xlu0 %274
    %v276 = vadd.f32 %v110, %v111
    %277 = vadd.xlane.f32.xlu0 %v276
    %v278 = vpop.xlane.xlu0 %277
    %v279 = vadd.f32 %v112, %v113
    %280 = vadd.xlane.f32.xlu0 %v279
    %v281 = vpop.xlane.xlu0 %280
    %v282 = vadd.f32 %v114, %v115
    %283 = vadd.xlane.f32.xlu0 %v282
    %v284 = vpop.xlane.xlu0 %283
    %v285 = vadd.f32 %v116, %v117
    %286 = vadd.xlane.f32.xlu0 %v285
    %v287 = vpop.xlane.xlu0 %286
    %v288 = vadd.f32 %v118, %v119
    %289 = vadd.xlane.f32.xlu0 %v288
    %v290 = vpop.xlane.xlu0 %289
    %v291 = vadd.f32 %v120, %v121
    %292 = vadd.xlane.f32.xlu0 %v291
    %v293 = vpop.xlane.xlu0 %292
    %v294 = vadd.f32 %v122, %v123
    %295 = vadd.xlane.f32.xlu0 %v294
    %v296 = vpop.xlane.xlu0 %295
    %v297 = vadd.f32 %v124, %v125
    %298 = vadd.xlane.f32.xlu0 %v297
    %v299 = vpop.xlane.xlu0 %298
    %v300 = vadd.f32 %v126, %v127
    %301 = vadd.xlane.f32.xlu0 %v300
    %v302 = vpop.xlane.xlu0 %301
    %v303 = vadd.f32 %v128, %v129
    %304 = vadd.xlane.f32.xlu0 %v303
    %v305 = vpop.xlane.xlu0 %304
    %v306 = vadd.f32 %v130, %v131
    %307 = vadd.xlane.f32.xlu0 %v306
    %v308 = vpop.xlane.xlu0 %307
    %v309 = vadd.f32 %v132, %v133
    %310 = vadd.xlane.f32.xlu0 %v309
    %v311 = vpop.xlane.xlu0 %310
    %v312 = vadd.f32 %v134, %v135
    %313 = vadd.xlane.f32.xlu0 %v312
    %v314 = vpop.xlane.xlu0 %313
    %v315 = vadd.f32 %v136, %v137
    %316 = vadd.xlane.f32.xlu0 %v315
    %v317 = vpop.xlane.xlu0 %316
    %v318 = vadd.f32 %v138, %v139
    %319 = vadd.xlane.f32.xlu0 %v318
    %v320 = vpop.xlane.xlu0 %319
    %v321 = vadd.f32 %v140, %v141
    %322 = vadd.xlane.f32.xlu0 %v321
    %v323 = vpop.xlane.xlu0 %322
    %v324 = vadd.f32 %v142, %v143
    %325 = vadd.xlane.f32.xlu0 %v324
    %v326 = vpop.xlane.xlu0 %325
    %v327 = vadd.f32 %v144, %v145
    %328 = vadd.xlane.f32.xlu0 %v327
    %v329 = vpop.xlane.xlu0 %328
    %v330 = vadd.f32 %v146, %v147
    %331 = vadd.xlane.f32.xlu0 %v330
    %v332 = vpop.xlane.xlu0 %331
    %v333 = vadd.f32 %v148, %v149
    %334 = vadd.xlane.f32.xlu0 %v333
    %v335 = vpop.xlane.xlu0 %334
    %v336 = vadd.f32 %v150, %v151
    %337 = vadd.xlane.f32.xlu0 %v336
    %v338 = vpop.xlane.xlu0 %337
    %v339 = vadd.f32 %v152, %v153
    %340 = vadd.xlane.f32.xlu0 %v339
    %v341 = vpop.xlane.xlu0 %340
    %v342 = vadd.f32 %v154, %v155
    %343 = vadd.xlane.f32.xlu0 %v342
    %v344 = vpop.xlane.xlu0 %343
    %v345 = vadd.f32 %v156, %v157
    %346 = vadd.xlane.f32.xlu0 %v345
    %v347 = vpop.xlane.xlu0 %346
    %v348 = vadd.f32 %v158, %v159
    %349 = vadd.xlane.f32.xlu0 %v348
    %v350 = vpop.xlane.xlu0 %349
    %v351 = vadd.f32 %v160, %v161
    %352 = vadd.xlane.f32.xlu0 %v351
    %v353 = vpop.xlane.xlu0 %352
    %v354 = vmul.f32 %v164, 0.00390625
    %v355 = vmul.f32 %v167, 0.00390625
    %v356 = vmul.f32 %v170, 0.00390625
    %v357 = vmul.f32 %v173, 0.00390625
    %v358 = vmul.f32 %v176, 0.00390625
    %v359 = vmul.f32 %v179, 0.00390625
    %v360 = vmul.f32 %v182, 0.00390625
    %v361 = vmul.f32 %v185, 0.00390625
    %v362 = vmul.f32 %v188, 0.00390625
    %v363 = vmul.f32 %v191, 0.00390625
    %v364 = vmul.f32 %v194, 0.00390625
    %v365 = vmul.f32 %v197, 0.00390625
    %v366 = vmul.f32 %v200, 0.00390625
    %v367 = vmul.f32 %v203, 0.00390625
    %v368 = vmul.f32 %v206, 0.00390625
    %v369 = vmul.f32 %v209, 0.00390625
    %v370 = vmul.f32 %v212, 0.00390625
    %v371 = vmul.f32 %v215, 0.00390625
    %v372 = vmul.f32 %v218, 0.00390625
    %v373 = vmul.f32 %v221, 0.00390625
    %v374 = vmul.f32 %v224, 0.00390625
    %v375 = vmul.f32 %v227, 0.00390625
    %v376 = vmul.f32 %v230, 0.00390625
    %v377 = vmul.f32 %v233, 0.00390625
    %v378 = vmul.f32 %v236, 0.00390625
    %v379 = vmul.f32 %v239, 0.00390625
    %v380 = vmul.f32 %v242, 0.00390625
    %v381 = vmul.f32 %v245, 0.00390625
    %v382 = vmul.f32 %v248, 0.00390625
    %v383 = vmul.f32 %v251, 0.00390625
    %v384 = vmul.f32 %v254, 0.00390625
    %v385 = vmul.f32 %v257, 0.00390625
    %v386 = vmul.f32 %v260, 0.00390625
    %v387 = vmul.f32 %v263, 0.00390625
    %v388 = vmul.f32 %v266, 0.00390625
    %v389 = vmul.f32 %v269, 0.00390625
    %v390 = vmul.f32 %v272, 0.00390625
    %v391 = vmul.f32 %v275, 0.00390625
    %v392 = vmul.f32 %v278, 0.00390625
    %v393 = vmul.f32 %v281, 0.00390625
    %v394 = vmul.f32 %v284, 0.00390625
    %v395 = vmul.f32 %v287, 0.00390625
    %v396 = vmul.f32 %v290, 0.00390625
    %v397 = vmul.f32 %v293, 0.00390625
    %v398 = vmul.f32 %v296, 0.00390625
    %v399 = vmul.f32 %v299, 0.00390625
    %v400 = vmul.f32 %v302, 0.00390625
    %v401 = vmul.f32 %v305, 0.00390625
    %v402 = vmul.f32 %v308, 0.00390625
    %v403 = vmul.f32 %v311, 0.00390625
    %v404 = vmul.f32 %v314, 0.00390625
    %v405 = vmul.f32 %v317, 0.00390625
    %v406 = vmul.f32 %v320, 0.00390625
    %v407 = vmul.f32 %v323, 0.00390625
    %v408 = vmul.f32 %v326, 0.00390625
    %v409 = vmul.f32 %v329, 0.00390625
    %v410 = vmul.f32 %v332, 0.00390625
    %v411 = vmul.f32 %v335, 0.00390625
    %v412 = vmul.f32 %v338, 0.00390625
    %v413 = vmul.f32 %v341, 0.00390625
    %v414 = vmul.f32 %v344, 0.00390625
    %v415 = vmul.f32 %v347, 0.00390625
    %v416 = vmul.f32 %v350, 0.00390625
    %v417 = vmul.f32 %v353, 0.00390625
    %v418 = vpack.c.bf16 %v355, %v354
    %v419 = vpack.c.bf16 %v357, %v356
    %v420 = vpack.c.bf16 %v359, %v358
    %v421 = vpack.c.bf16 %v361, %v360
    %v422 = vpack.c.bf16 %v363, %v362
    %v423 = vpack.c.bf16 %v365, %v364
    %v424 = vpack.c.bf16 %v367, %v366
    %v425 = vpack.c.bf16 %v369, %v368
    %v426 = vpack.c.bf16 %v371, %v370
    %v427 = vpack.c.bf16 %v373, %v372
    %v428 = vpack.c.bf16 %v375, %v374
    %v429 = vpack.c.bf16 %v377, %v376
    %v430 = vpack.c.bf16 %v379, %v378
    %v431 = vpack.c.bf16 %v381, %v380
    %v432 = vpack.c.bf16 %v383, %v382
    %v433 = vpack.c.bf16 %v385, %v384
    %v434 = vpack.c.bf16 %v387, %v386
    %v435 = vpack.c.bf16 %v389, %v388
    %v436 = vpack.c.bf16 %v391, %v390
    %v437 = vpack.c.bf16 %v393, %v392
    %v438 = vpack.c.bf16 %v395, %v394
    %v439 = vpack.c.bf16 %v397, %v396
    %v440 = vpack.c.bf16 %v399, %v398
    %v441 = vpack.c.bf16 %v401, %v400
    %v442 = vpack.c.bf16 %v403, %v402
    %v443 = vpack.c.bf16 %v405, %v404
    %v444 = vpack.c.bf16 %v407, %v406
    %v445 = vpack.c.bf16 %v409, %v408
    %v446 = vpack.c.bf16 %v411, %v410
    %v447 = vpack.c.bf16 %v413, %v412
    %v448 = vpack.c.bf16 %v415, %v414
    %v449 = vpack.c.bf16 %v417, %v416
    %v450 = vld [vmem:[%s1] sm:$0xf]
    %v451 = vld [vmem:[%s1 + $0x4] sm:$0xf]
    %v452 = vld [vmem:[%s1 + $0x8] sm:$0xf]
    %v453 = vld [vmem:[%s1 + $0xc] sm:$0xf]
    %v454 = vld [vmem:[%s3] sm:$0x1]
    %v456 = vlaneseq
    %v457 = vshrl.u32 %v456, 7
    %v458 = vsub.s32 0, %v457
    %v459 = vrot.slane %v454, %v458
    %v493 = vunpack.c.l.b16 %v418
    %v494 = vunpack.c.h.b16 %v418
    %v495 = vunpack.c.l.b16 %v419
    %v496 = vunpack.c.h.b16 %v419
    %v497 = vunpack.c.l.b16 %v420
    %v498 = vunpack.c.h.b16 %v420
    %v499 = vunpack.c.l.b16 %v421
    %v500 = vunpack.c.h.b16 %v421
    %v501 = vunpack.c.l.b16 %v422
    %v502 = vunpack.c.h.b16 %v422
    %v503 = vunpack.c.l.b16 %v423
    %v504 = vunpack.c.h.b16 %v423
    %v505 = vunpack.c.l.b16 %v424
    %v506 = vunpack.c.h.b16 %v424
    %v507 = vunpack.c.l.b16 %v425
    %v508 = vunpack.c.h.b16 %v425
    %v509 = vunpack.c.l.b16 %v426
    %v510 = vunpack.c.h.b16 %v426
    %v511 = vunpack.c.l.b16 %v427
    %v512 = vunpack.c.h.b16 %v427
    %v513 = vunpack.c.l.b16 %v428
    %v514 = vunpack.c.h.b16 %v428
    %v515 = vunpack.c.l.b16 %v429
    %v516 = vunpack.c.h.b16 %v429
    %v517 = vunpack.c.l.b16 %v430
    %v518 = vunpack.c.h.b16 %v430
    %v519 = vunpack.c.l.b16 %v431
    %v520 = vunpack.c.h.b16 %v431
    %v521 = vunpack.c.l.b16 %v432
    %v522 = vunpack.c.h.b16 %v432
    %v523 = vunpack.c.l.b16 %v433
    %v524 = vunpack.c.h.b16 %v433
    %v525 = vunpack.c.l.b16 %v434
    %v526 = vunpack.c.h.b16 %v434
    %v527 = vunpack.c.l.b16 %v435
    %v528 = vunpack.c.h.b16 %v435
    %v529 = vunpack.c.l.b16 %v436
    %v530 = vunpack.c.h.b16 %v436
    %v531 = vunpack.c.l.b16 %v437
    %v532 = vunpack.c.h.b16 %v437
    %v533 = vunpack.c.l.b16 %v438
    %v534 = vunpack.c.h.b16 %v438
    %v535 = vunpack.c.l.b16 %v439
    %v536 = vunpack.c.h.b16 %v439
    %v537 = vunpack.c.l.b16 %v440
    %v538 = vunpack.c.h.b16 %v440
    %v539 = vunpack.c.l.b16 %v441
    %v540 = vunpack.c.h.b16 %v441
    %v541 = vunpack.c.l.b16 %v442
    %v542 = vunpack.c.h.b16 %v442
    %v543 = vunpack.c.l.b16 %v443
    %v544 = vunpack.c.h.b16 %v443
    %v545 = vunpack.c.l.b16 %v444
    %v546 = vunpack.c.h.b16 %v444
    %v547 = vunpack.c.l.b16 %v445
    %v548 = vunpack.c.h.b16 %v445
    %v549 = vunpack.c.l.b16 %v446
    %v550 = vunpack.c.h.b16 %v446
    %v551 = vunpack.c.l.b16 %v447
    %v552 = vunpack.c.h.b16 %v447
    %v553 = vunpack.c.l.b16 %v448
    %v554 = vunpack.c.h.b16 %v448
    %v555 = vunpack.c.l.b16 %v449
    %v556 = vunpack.c.h.b16 %v449
    %v557 = vlaneseq
    %v558 = vand.u32 %v557, 127
    %v559 = vlaneseq
    %v560 = vshrl.u32 %v559, 7
    %v561 = vsub.s32 %v558, %v560
    %v562 = vrot.slane %v493, %v561
    %v563 = vadd.s32 %v558, 4294967288
    %v564 = vlaneseq
    %v565 = vshrl.u32 %v564, 7
    %v566 = vsub.s32 %v563, %v565
    %v567 = vrot.slane %v494, %v566
    %vm568 = vcmask 130112
    %v569 = vsel %vm568, %v567, %v562
    %v570 = vadd.s32 %v558, 4294967280
    %v571 = vlaneseq
    %v572 = vshrl.u32 %v571, 7
    %v573 = vsub.s32 %v570, %v572
    %v574 = vrot.slane %v495, %v573
    %vm575 = vcmask 195712
    %v576 = vsel %vm575, %v574, %v569
    %v577 = vadd.s32 %v558, 4294967272
    %v578 = vlaneseq
    %v579 = vshrl.u32 %v578, 7
    %v580 = vsub.s32 %v577, %v579
    %v581 = vrot.slane %v496, %v580
    %vm582 = vcmask 261312
    %v583 = vsel %vm582, %v581, %v576
    %v584 = vlaneseq
    %v585 = vshrl.u32 %v584, 7
    %v586 = vsub.s32 %v558, %v585
    %v587 = vrot.slane %v497, %v586
    %v588 = vlaneseq
    %v589 = vshrl.u32 %v588, 7
    %v590 = vsub.s32 %v563, %v589
    %v591 = vrot.slane %v498, %v590
    %v592 = vsel %vm568, %v591, %v587
    %v593 = vlaneseq
    %v594 = vshrl.u32 %v593, 7
    %v595 = vsub.s32 %v570, %v594
    %v596 = vrot.slane %v499, %v595
    %v597 = vsel %vm575, %v596, %v592
    %v598 = vlaneseq
    %v599 = vshrl.u32 %v598, 7
    %v600 = vsub.s32 %v577, %v599
    %v601 = vrot.slane %v500, %v600
    %v602 = vsel %vm582, %v601, %v597
    %v603 = vlaneseq
    %v604 = vshrl.u32 %v603, 7
    %v605 = vsub.s32 %v558, %v604
    %v606 = vrot.slane %v501, %v605
    %v607 = vlaneseq
    %v608 = vshrl.u32 %v607, 7
    %v609 = vsub.s32 %v563, %v608
    %v610 = vrot.slane %v502, %v609
    %v611 = vsel %vm568, %v610, %v606
    %v612 = vlaneseq
    %v613 = vshrl.u32 %v612, 7
    %v614 = vsub.s32 %v570, %v613
    %v615 = vrot.slane %v503, %v614
    %v616 = vsel %vm575, %v615, %v611
    %v617 = vlaneseq
    %v618 = vshrl.u32 %v617, 7
    %v619 = vsub.s32 %v577, %v618
    %v620 = vrot.slane %v504, %v619
    %v621 = vsel %vm582, %v620, %v616
    %v622 = vlaneseq
    %v623 = vshrl.u32 %v622, 7
    %v624 = vsub.s32 %v558, %v623
    %v625 = vrot.slane %v505, %v624
    %v626 = vlaneseq
    %v627 = vshrl.u32 %v626, 7
    %v628 = vsub.s32 %v563, %v627
    %v629 = vrot.slane %v506, %v628
    %v630 = vsel %vm568, %v629, %v625
    %v631 = vlaneseq
    %v632 = vshrl.u32 %v631, 7
    %v633 = vsub.s32 %v570, %v632
    %v634 = vrot.slane %v507, %v633
    %v635 = vsel %vm575, %v634, %v630
    %v636 = vlaneseq
    %v637 = vshrl.u32 %v636, 7
    %v638 = vsub.s32 %v577, %v637
    %v639 = vrot.slane %v508, %v638
    %v640 = vsel %vm582, %v639, %v635
    %v641 = vlaneseq
    %v642 = vshrl.u32 %v641, 7
    %v643 = vsub.s32 %v558, %v642
    %v644 = vrot.slane %v509, %v643
    %v645 = vlaneseq
    %v646 = vshrl.u32 %v645, 7
    %v647 = vsub.s32 %v563, %v646
    %v648 = vrot.slane %v510, %v647
    %v649 = vsel %vm568, %v648, %v644
    %v650 = vlaneseq
    %v651 = vshrl.u32 %v650, 7
    %v652 = vsub.s32 %v570, %v651
    %v653 = vrot.slane %v511, %v652
    %v654 = vsel %vm575, %v653, %v649
    %v655 = vlaneseq
    %v656 = vshrl.u32 %v655, 7
    %v657 = vsub.s32 %v577, %v656
    %v658 = vrot.slane %v512, %v657
    %v659 = vsel %vm582, %v658, %v654
    %v660 = vlaneseq
    %v661 = vshrl.u32 %v660, 7
    %v662 = vsub.s32 %v558, %v661
    %v663 = vrot.slane %v513, %v662
    %v664 = vlaneseq
    %v665 = vshrl.u32 %v664, 7
    %v666 = vsub.s32 %v563, %v665
    %v667 = vrot.slane %v514, %v666
    %v668 = vsel %vm568, %v667, %v663
    %v669 = vlaneseq
    %v670 = vshrl.u32 %v669, 7
    %v671 = vsub.s32 %v570, %v670
    %v672 = vrot.slane %v515, %v671
    %v673 = vsel %vm575, %v672, %v668
    %v674 = vlaneseq
    %v675 = vshrl.u32 %v674, 7
    %v676 = vsub.s32 %v577, %v675
    %v677 = vrot.slane %v516, %v676
    %v678 = vsel %vm582, %v677, %v673
    %v679 = vlaneseq
    %v680 = vshrl.u32 %v679, 7
    %v681 = vsub.s32 %v558, %v680
    %v682 = vrot.slane %v517, %v681
    %v683 = vlaneseq
    %v684 = vshrl.u32 %v683, 7
    %v685 = vsub.s32 %v563, %v684
    %v686 = vrot.slane %v518, %v685
    %v687 = vsel %vm568, %v686, %v682
    %v688 = vlaneseq
    %v689 = vshrl.u32 %v688, 7
    %v690 = vsub.s32 %v570, %v689
    %v691 = vrot.slane %v519, %v690
    %v692 = vsel %vm575, %v691, %v687
    %v693 = vlaneseq
    %v694 = vshrl.u32 %v693, 7
    %v695 = vsub.s32 %v577, %v694
    %v696 = vrot.slane %v520, %v695
    %v697 = vsel %vm582, %v696, %v692
    %v698 = vlaneseq
    %v699 = vshrl.u32 %v698, 7
    %v700 = vsub.s32 %v558, %v699
    %v701 = vrot.slane %v521, %v700
    %v702 = vlaneseq
    %v703 = vshrl.u32 %v702, 7
    %v704 = vsub.s32 %v563, %v703
    %v705 = vrot.slane %v522, %v704
    %v706 = vsel %vm568, %v705, %v701
    %v707 = vlaneseq
    %v708 = vshrl.u32 %v707, 7
    %v709 = vsub.s32 %v570, %v708
    %v710 = vrot.slane %v523, %v709
    %v711 = vsel %vm575, %v710, %v706
    %v712 = vlaneseq
    %v713 = vshrl.u32 %v712, 7
    %v714 = vsub.s32 %v577, %v713
    %v715 = vrot.slane %v524, %v714
    %v716 = vsel %vm582, %v715, %v711
    %v717 = vlaneseq
    %v718 = vshrl.u32 %v717, 7
    %v719 = vsub.s32 %v558, %v718
    %v720 = vrot.slane %v525, %v719
    %v721 = vlaneseq
    %v722 = vshrl.u32 %v721, 7
    %v723 = vsub.s32 %v563, %v722
    %v724 = vrot.slane %v526, %v723
    %v725 = vsel %vm568, %v724, %v720
    %v726 = vlaneseq
    %v727 = vshrl.u32 %v726, 7
    %v728 = vsub.s32 %v570, %v727
    %v729 = vrot.slane %v527, %v728
    %v730 = vsel %vm575, %v729, %v725
    %v731 = vlaneseq
    %v732 = vshrl.u32 %v731, 7
    %v733 = vsub.s32 %v577, %v732
    %v734 = vrot.slane %v528, %v733
    %v735 = vsel %vm582, %v734, %v730
    %v736 = vlaneseq
    %v737 = vshrl.u32 %v736, 7
    %v738 = vsub.s32 %v558, %v737
    %v739 = vrot.slane %v529, %v738
    %v740 = vlaneseq
    %v741 = vshrl.u32 %v740, 7
    %v742 = vsub.s32 %v563, %v741
    %v743 = vrot.slane %v530, %v742
    %v744 = vsel %vm568, %v743, %v739
    %v745 = vlaneseq
    %v746 = vshrl.u32 %v745, 7
    %v747 = vsub.s32 %v570, %v746
    %v748 = vrot.slane %v531, %v747
    %v749 = vsel %vm575, %v748, %v744
    %v750 = vlaneseq
    %v751 = vshrl.u32 %v750, 7
    %v752 = vsub.s32 %v577, %v751
    %v753 = vrot.slane %v532, %v752
    %v754 = vsel %vm582, %v753, %v749
    %v755 = vlaneseq
    %v756 = vshrl.u32 %v755, 7
    %v757 = vsub.s32 %v558, %v756
    %v758 = vrot.slane %v533, %v757
    %v759 = vlaneseq
    %v760 = vshrl.u32 %v759, 7
    %v761 = vsub.s32 %v563, %v760
    %v762 = vrot.slane %v534, %v761
    %v763 = vsel %vm568, %v762, %v758
    %v764 = vlaneseq
    %v765 = vshrl.u32 %v764, 7
    %v766 = vsub.s32 %v570, %v765
    %v767 = vrot.slane %v535, %v766
    %v768 = vsel %vm575, %v767, %v763
    %v769 = vlaneseq
    %v770 = vshrl.u32 %v769, 7
    %v771 = vsub.s32 %v577, %v770
    %v772 = vrot.slane %v536, %v771
    %v773 = vsel %vm582, %v772, %v768
    %v774 = vlaneseq
    %v775 = vshrl.u32 %v774, 7
    %v776 = vsub.s32 %v558, %v775
    %v777 = vrot.slane %v537, %v776
    %v778 = vlaneseq
    %v779 = vshrl.u32 %v778, 7
    %v780 = vsub.s32 %v563, %v779
    %v781 = vrot.slane %v538, %v780
    %v782 = vsel %vm568, %v781, %v777
    %v783 = vlaneseq
    %v784 = vshrl.u32 %v783, 7
    %v785 = vsub.s32 %v570, %v784
    %v786 = vrot.slane %v539, %v785
    %v787 = vsel %vm575, %v786, %v782
    %v788 = vlaneseq
    %v789 = vshrl.u32 %v788, 7
    %v790 = vsub.s32 %v577, %v789
    %v791 = vrot.slane %v540, %v790
    %v792 = vsel %vm582, %v791, %v787
    %v793 = vlaneseq
    %v794 = vshrl.u32 %v793, 7
    %v795 = vsub.s32 %v558, %v794
    %v796 = vrot.slane %v541, %v795
    %v797 = vlaneseq
    %v798 = vshrl.u32 %v797, 7
    %v799 = vsub.s32 %v563, %v798
    %v800 = vrot.slane %v542, %v799
    %v801 = vsel %vm568, %v800, %v796
    %v802 = vlaneseq
    %v803 = vshrl.u32 %v802, 7
    %v804 = vsub.s32 %v570, %v803
    %v805 = vrot.slane %v543, %v804
    %v806 = vsel %vm575, %v805, %v801
    %v807 = vlaneseq
    %v808 = vshrl.u32 %v807, 7
    %v809 = vsub.s32 %v577, %v808
    %v810 = vrot.slane %v544, %v809
    %v811 = vsel %vm582, %v810, %v806
    %v812 = vlaneseq
    %v813 = vshrl.u32 %v812, 7
    %v814 = vsub.s32 %v558, %v813
    %v815 = vrot.slane %v545, %v814
    %v816 = vlaneseq
    %v817 = vshrl.u32 %v816, 7
    %v818 = vsub.s32 %v563, %v817
    %v819 = vrot.slane %v546, %v818
    %v820 = vsel %vm568, %v819, %v815
    %v821 = vlaneseq
    %v822 = vshrl.u32 %v821, 7
    %v823 = vsub.s32 %v570, %v822
    %v824 = vrot.slane %v547, %v823
    %v825 = vsel %vm575, %v824, %v820
    %v826 = vlaneseq
    %v827 = vshrl.u32 %v826, 7
    %v828 = vsub.s32 %v577, %v827
    %v829 = vrot.slane %v548, %v828
    %v830 = vsel %vm582, %v829, %v825
    %v831 = vlaneseq
    %v832 = vshrl.u32 %v831, 7
    %v833 = vsub.s32 %v558, %v832
    %v834 = vrot.slane %v549, %v833
    %v835 = vlaneseq
    %v836 = vshrl.u32 %v835, 7
    %v837 = vsub.s32 %v563, %v836
    %v838 = vrot.slane %v550, %v837
    %v839 = vsel %vm568, %v838, %v834
    %v840 = vlaneseq
    %v841 = vshrl.u32 %v840, 7
    %v842 = vsub.s32 %v570, %v841
    %v843 = vrot.slane %v551, %v842
    %v844 = vsel %vm575, %v843, %v839
    %v845 = vlaneseq
    %v846 = vshrl.u32 %v845, 7
    %v847 = vsub.s32 %v577, %v846
    %v848 = vrot.slane %v552, %v847
    %v849 = vsel %vm582, %v848, %v844
    %v850 = vlaneseq
    %v851 = vshrl.u32 %v850, 7
    %v852 = vsub.s32 %v558, %v851
    %v853 = vrot.slane %v553, %v852
    %v854 = vlaneseq
    %v855 = vshrl.u32 %v854, 7
    %v856 = vsub.s32 %v563, %v855
    %v857 = vrot.slane %v554, %v856
    %v858 = vsel %vm568, %v857, %v853
    %v859 = vlaneseq
    %v860 = vshrl.u32 %v859, 7
    %v861 = vsub.s32 %v570, %v860
    %v862 = vrot.slane %v555, %v861
    %v863 = vsel %vm575, %v862, %v858
    %v864 = vlaneseq
    %v865 = vshrl.u32 %v864, 7
    %v866 = vsub.s32 %v577, %v865
    %v867 = vrot.slane %v556, %v866
    %v868 = vsel %vm582, %v867, %v863
    %vm869 = vcmask 1041409
    %v870 = vsel %vm869, %v602, %v583
    %vm871 = vcmask 1042434
    %v872 = vsel %vm871, %v621, %v870
    %vm873 = vcmask 1043459
    %v874 = vsel %vm873, %v640, %v872
    %vm875 = vcmask 1044484
    %v876 = vsel %vm875, %v659, %v874
    %vm877 = vcmask 1045509
    %v878 = vsel %vm877, %v678, %v876
    %vm879 = vcmask 1046534
    %v880 = vsel %vm879, %v697, %v878
    %vm881 = vcmask 1047559
    %v882 = vsel %vm881, %v716, %v880
    %v883 = vsel %vm869, %v754, %v735
    %v884 = vsel %vm871, %v773, %v883
    %v885 = vsel %vm873, %v792, %v884
    %v886 = vsel %vm875, %v811, %v885
    %v887 = vsel %vm877, %v830, %v886
    %v888 = vsel %vm879, %v849, %v887
    %v889 = vsel %vm881, %v868, %v888
    %v890 = vpack.c.b16 %v889, %v882
    %v895 = vunpack.c.l.b16 %v450
    %v896 = vunpack.c.l.b16 %v451
    %v897 = vunpack.c.l.b16 %v452
    %v898 = vunpack.c.l.b16 %v453
    %v899 = vpack.c.b16 %v896, %v895
    %v900 = vpack.c.b16 %v898, %v897
    %vm903 = vcmask 261120
    %v905 = vsel %vm903, %v890, 0
    %907 = vmatprep.subr.bf16.mxu0 0
    %908 = vmatpush1.bf16.msra.mxu0 %v899
    %909 = vmatprep.subr.bf16.mxu0 0
    %910 = vmatpush1.bf16.msra.mxu0 %v900
    %911 = vmatprep.subr.bf16.mxu0 0
    %912 = vmatpush1.bf16.msra.mxu0 0
    %913 = vmatprep.subr.bf16.mxu0 0
    %914 = vmatpush1.bf16.msra.mxu0 0
    %915 = vmatprep.subr.bf16.mxu0 0
    %916 = vmatpush1.bf16.msra.mxu0 0
    %917 = vmatprep.subr.bf16.mxu0 0
    %918 = vmatpush1.bf16.msra.mxu0 0
    %919 = vmatprep.subr.bf16.mxu0 0
    %920 = vmatpush1.bf16.msra.mxu0 0
    %921 = vmatprep.subr.bf16.mxu0 0
    %922 = vmatpush1.bf16.msra.mxu0 0
    %923 = vmatprep.subr.bf16.mxu0 0
    %924 = vmatpush1.bf16.msra.mxu0 0
    %925 = vmatprep.subr.bf16.mxu0 0
    %926 = vmatpush1.bf16.msra.mxu0 0
    %927 = vmatprep.subr.bf16.mxu0 0
    %928 = vmatpush1.bf16.msra.mxu0 0
    %929 = vmatprep.subr.bf16.mxu0 0
    %930 = vmatpush1.bf16.msra.mxu0 0
    %931 = vmatprep.subr.bf16.mxu0 0
    %932 = vmatpush1.bf16.msra.mxu0 0
    %933 = vmatprep.subr.bf16.mxu0 0
    %934 = vmatpush1.bf16.msra.mxu0 0
    %935 = vmatprep.subr.bf16.mxu0 0
    %936 = vmatpush1.bf16.msra.mxu0 0
    %937 = vmatprep.subr.bf16.mxu0 0
    %938 = vmatpush1.bf16.msra.mxu0 0
    %939 = vmatprep.mubr.bf16.mxu0 0
    %940 = vmatmul.mubr.bf16.gmra.mrb[0].mxu0 %v905
    %v941 = vpop.f32.mrb[0].mxu0
    %v942 = vadd.f32 %v459, %v941
    %v943 = vpop.f32.mrb[0].mxu0
    %v944 = vpop.f32.mrb[0].mxu0
    %v945 = vadd.f32 %v459, %v944
    %v946 = vpop.f32.mrb[0].mxu0
    %947 = vdwg.mxu0
    %v948 = vld [vmem:[%s2] sm:$0xf]
    %v949 = vld [vmem:[%s2 + $0x4] sm:$0xf]
    %v950 = vld [vmem:[%s2 + $0x8] sm:$0xf]
    %v951 = vld [vmem:[%s2 + $0xc] sm:$0xf]
    %v952 = vld [vmem:[%s5] sm:$0xf]
    %v953 = vld [vmem:[%s5 + $0x4] sm:$0xf]
    %v954 = vld [vmem:[%s5 + $0x8] sm:$0xf]
    %v955 = vld [vmem:[%s5 + $0xc] sm:$0xf]
    %v956 = vld [vmem:[%s4] sm:$0xf]
    %v957 = vld [vmem:[%s4 + $0x4] sm:$0xf]
    %v958 = vld [vmem:[%s4 + $0x8] sm:$0xf]
    %v959 = vld [vmem:[%s4 + $0xc] sm:$0xf]
    %v960 = vld [vmem:[%s6] sm:$0x1]
    %v962 = vlaneseq
    %v963 = vshrl.u32 %v962, 7
    %v964 = vsub.s32 0, %v963
    %v965 = vrot.slane %v960, %v964
    %v968 = vrot.slane %v945, 7
    %vm970 = vcmask 1040384
    %v971 = vsel %vm970, %v942, %v968
    %v976 = vunpack.c.l.b16 %v948
    %v977 = vunpack.c.l.b16 %v949
    %v978 = vunpack.c.l.b16 %v950
    %v979 = vunpack.c.l.b16 %v951
    %v980 = vpack.c.b16 %v977, %v976
    %v981 = vpack.c.b16 %v979, %v978
    %v985 = vsel %vm903, 0, 0
    %987 = vmatprep.subr.bf16.mxu0 0
    %988 = vmatpush1.bf16.msra.mxu0 %v980
    %989 = vmatprep.subr.bf16.mxu0 0
    %990 = vmatpush1.bf16.msra.mxu0 %v981
    %991 = vmatprep.subr.bf16.mxu0 0
    %992 = vmatpush1.bf16.msra.mxu0 0
    %993 = vmatprep.subr.bf16.mxu0 0
    %994 = vmatpush1.bf16.msra.mxu0 0
    %995 = vmatprep.subr.bf16.mxu0 0
    %996 = vmatpush1.bf16.msra.mxu0 0
    %997 = vmatprep.subr.bf16.mxu0 0
    %998 = vmatpush1.bf16.msra.mxu0 0
    %999 = vmatprep.subr.bf16.mxu0 0
    %1000 = vmatpush1.bf16.msra.mxu0 0
    %1001 = vmatprep.subr.bf16.mxu0 0
    %1002 = vmatpush1.bf16.msra.mxu0 0
    %1003 = vmatprep.subr.bf16.mxu0 0
    %1004 = vmatpush1.bf16.msra.mxu0 0
    %1005 = vmatprep.subr.bf16.mxu0 0
    %1006 = vmatpush1.bf16.msra.mxu0 0
    %1007 = vmatprep.subr.bf16.mxu0 0
    %1008 = vmatpush1.bf16.msra.mxu0 0
    %1009 = vmatprep.subr.bf16.mxu0 0
    %1010 = vmatpush1.bf16.msra.mxu0 0
    %1011 = vmatprep.subr.bf16.mxu0 0
    %1012 = vmatpush1.bf16.msra.mxu0 0
    %1013 = vmatprep.subr.bf16.mxu0 0
    %1014 = vmatpush1.bf16.msra.mxu0 0
    %1015 = vmatprep.subr.bf16.mxu0 0
    %1016 = vmatpush1.bf16.msra.mxu0 0
    %1017 = vmatprep.subr.bf16.mxu0 0
    %1018 = vmatpush1.bf16.msra.mxu0 0
    %1019 = vmatprep.mubr.bf16.mxu0 0
    %1020 = vmatmul.mubr.bf16.gmra.mrb[0].mxu0 %v985
    %v1021 = vpop.f32.mrb[0].mxu0
    %v1022 = vadd.f32 0.0, %v1021
    %v1023 = vpop.f32.mrb[0].mxu0
    %v1024 = vpop.f32.mrb[0].mxu0
    %v1025 = vpop.f32.mrb[0].mxu0
    %1026 = vdwg.mxu0
    %v1027 = vadd.f32 %v971, %v1022
    %v1028 = vxor.u32 %v1027, 2147483648
    %v1029 = vmul.f32 %v1028, 1.442695
    %v1030 = vpow.pop %v1029
    %v1031 = vadd.f32 %v1030, 1.0
    %v1032 = vrcp.pop %v1031
    %v1033 = vmul.f32 1.0, %v1032
    %v1034 = vtanh.pop %v1027
    %v1035 = vmul.f32 %v1033, 0.0
    %1037 = vrot.lane.b32.xlu0 %v1034, 64
    %v1038 = vpop.permute.xlu0 %1037
    %v1040 = vmul.f32 %v1033, %v1038
    %1042 = vrot.lane.b32.xlu0 %v1040, 32
    %v1043 = vpop.permute.xlu0 %1042
    %v1045 = vadd.f32 %v1035, %v1043
    %v1046 = vtanh.pop %v1045
    %1048 = vrot.lane.b32.xlu0 %v1046, 64
    %v1049 = vpop.permute.xlu0 %1048
    %v1051 = vmul.f32 %v1033, %v1049
    %v1052 = vpack.c.bf16 %v1051, %v1051
    %1054 = vrot.lane.b32.xlu0 %v1052, 32
    %v1055 = vpop.permute.xlu0 %1054
    %v1060 = vunpack.c.l.b16 %v956
    %v1061 = vunpack.c.l.b16 %v957
    %v1062 = vunpack.c.l.b16 %v958
    %v1063 = vunpack.c.l.b16 %v959
    %v1064 = vpack.c.b16 %v1061, %v1060
    %v1065 = vpack.c.b16 %v1063, %v1062
    %v1069 = vsel %vm903, %v1055, 0
    %1071 = vmatprep.subr.bf16.mxu0 0
    %1072 = vmatpush1.bf16.msra.mxu0 %v1064
    %1073 = vmatprep.subr.bf16.mxu0 0
    %1074 = vmatpush1.bf16.msra.mxu0 %v1065
    %1075 = vmatprep.subr.bf16.mxu0 0
    %1076 = vmatpush1.bf16.msra.mxu0 0
    %1077 = vmatprep.subr.bf16.mxu0 0
    %1078 = vmatpush1.bf16.msra.mxu0 0
    %1079 = vmatprep.subr.bf16.mxu0 0
    %1080 = vmatpush1.bf16.msra.mxu0 0
    %1081 = vmatprep.subr.bf16.mxu0 0
    %1082 = vmatpush1.bf16.msra.mxu0 0
    %1083 = vmatprep.subr.bf16.mxu0 0
    %1084 = vmatpush1.bf16.msra.mxu0 0
    %1085 = vmatprep.subr.bf16.mxu0 0
    %1086 = vmatpush1.bf16.msra.mxu0 0
    %1087 = vmatprep.subr.bf16.mxu0 0
    %1088 = vmatpush1.bf16.msra.mxu0 0
    %1089 = vmatprep.subr.bf16.mxu0 0
    %1090 = vmatpush1.bf16.msra.mxu0 0
    %1091 = vmatprep.subr.bf16.mxu0 0
    %1092 = vmatpush1.bf16.msra.mxu0 0
    %1093 = vmatprep.subr.bf16.mxu0 0
    %1094 = vmatpush1.bf16.msra.mxu0 0
    %1095 = vmatprep.subr.bf16.mxu0 0
    %1096 = vmatpush1.bf16.msra.mxu0 0
    %1097 = vmatprep.subr.bf16.mxu0 0
    %1098 = vmatpush1.bf16.msra.mxu0 0
    %1099 = vmatprep.subr.bf16.mxu0 0
    %1100 = vmatpush1.bf16.msra.mxu0 0
    %1101 = vmatprep.subr.bf16.mxu0 0
    %1102 = vmatpush1.bf16.msra.mxu0 0
    %1103 = vmatprep.mubr.bf16.mxu0 0
    %1104 = vmatmul.mubr.bf16.gmra.mrb[0].mxu0 %v1069
    %v1105 = vpop.f32.mrb[0].mxu0
    %v1106 = vadd.f32 %v965, %v1105
    %v1107 = vpop.f32.mrb[0].mxu0
    %v1108 = vpop.f32.mrb[0].mxu0
    %v1109 = vpop.f32.mrb[0].mxu0
    %1110 = vdwg.mxu0
    %v1115 = vunpack.c.l.b16 %v952
    %v1116 = vunpack.c.l.b16 %v953
    %v1117 = vunpack.c.l.b16 %v954
    %v1118 = vunpack.c.l.b16 %v955
    %v1119 = vpack.c.b16 %v1116, %v1115
    %v1120 = vpack.c.b16 %v1118, %v1117
    %1123 = vmatprep.subr.bf16.mxu0 0
    %1124 = vmatpush1.bf16.msra.mxu0 %v1119
    %1125 = vmatprep.subr.bf16.mxu0 0
    %1126 = vmatpush1.bf16.msra.mxu0 %v1120
    %1127 = vmatprep.subr.bf16.mxu0 0
    %1128 = vmatpush1.bf16.msra.mxu0 0
    %1129 = vmatprep.subr.bf16.mxu0 0
    %1130 = vmatpush1.bf16.msra.mxu0 0
    %1131 = vmatprep.subr.bf16.mxu0 0
    %1132 = vmatpush1.bf16.msra.mxu0 0
    %1133 = vmatprep.subr.bf16.mxu0 0
    %1134 = vmatpush1.bf16.msra.mxu0 0
    %1135 = vmatprep.subr.bf16.mxu0 0
    %1136 = vmatpush1.bf16.msra.mxu0 0
    %1137 = vmatprep.subr.bf16.mxu0 0
    %1138 = vmatpush1.bf16.msra.mxu0 0
    %1139 = vmatprep.subr.bf16.mxu0 0
    %1140 = vmatpush1.bf16.msra.mxu0 0
    %1141 = vmatprep.subr.bf16.mxu0 0
    %1142 = vmatpush1.bf16.msra.mxu0 0
    %1143 = vmatprep.subr.bf16.mxu0 0
    %1144 = vmatpush1.bf16.msra.mxu0 0
    %1145 = vmatprep.subr.bf16.mxu0 0
    %1146 = vmatpush1.bf16.msra.mxu0 0
    %1147 = vmatprep.subr.bf16.mxu0 0
    %1148 = vmatpush1.bf16.msra.mxu0 0
    %1149 = vmatprep.subr.bf16.mxu0 0
    %1150 = vmatpush1.bf16.msra.mxu0 0
    %1151 = vmatprep.subr.bf16.mxu0 0
    %1152 = vmatpush1.bf16.msra.mxu0 0
    %1153 = vmatprep.subr.bf16.mxu0 0
    %1154 = vmatpush1.bf16.msra.mxu0 0
    %1155 = vmatprep.mubr.bf16.mxu0 0
    %1156 = vmatmul.mubr.bf16.gmra.mrb[0].mxu0 %v985
    %v1157 = vpop.f32.mrb[0].mxu0
    %v1158 = vadd.f32 0.0, %v1157
    %v1159 = vpop.f32.mrb[0].mxu0
    %v1160 = vpop.f32.mrb[0].mxu0
    %v1161 = vpop.f32.mrb[0].mxu0
    %1162 = vdwg.mxu0
    %v1163 = vadd.f32 %v1106, %v1158
    %v1164 = vxor.u32 %v1163, 2147483648
    %v1165 = vmul.f32 %v1164, 1.442695
    %v1166 = vpow.pop %v1165
    %v1167 = vadd.f32 %v1166, 1.0
    %v1168 = vrcp.pop %v1167
    %v1169 = vmul.f32 1.0, %v1168
    %v1170 = vtanh.pop %v1163
    %v1171 = vmul.f32 %v1169, 0.0
    %1173 = vrot.lane.b32.xlu0 %v1170, 64
    %v1174 = vpop.permute.xlu0 %1173
    %v1176 = vmul.f32 %v1169, %v1174
    %1178 = vrot.lane.b32.xlu0 %v1176, 32
    %v1179 = vpop.permute.xlu0 %1178
    %v1181 = vadd.f32 %v1171, %v1179
    %v1182 = vtanh.pop %v1181
    %1184 = vrot.lane.b32.xlu0 %v1182, 64
    %v1185 = vpop.permute.xlu0 %1184
    %v1187 = vmul.f32 %v1169, %v1185
    %v1189 = vrot.slane %v942, 1
    %v1191 = vsel %vm970, %v1189, %v945
    %1192 = vmatprep.subr.bf16.mxu0 0
    %1193 = vmatpush1.bf16.msra.mxu0 %v980
    %1194 = vmatprep.subr.bf16.mxu0 0
    %1195 = vmatpush1.bf16.msra.mxu0 %v981
    %1196 = vmatprep.subr.bf16.mxu0 0
    %1197 = vmatpush1.bf16.msra.mxu0 0
    %1198 = vmatprep.subr.bf16.mxu0 0
    %1199 = vmatpush1.bf16.msra.mxu0 0
    %1200 = vmatprep.subr.bf16.mxu0 0
    %1201 = vmatpush1.bf16.msra.mxu0 0
    %1202 = vmatprep.subr.bf16.mxu0 0
    %1203 = vmatpush1.bf16.msra.mxu0 0
    %1204 = vmatprep.subr.bf16.mxu0 0
    %1205 = vmatpush1.bf16.msra.mxu0 0
    %1206 = vmatprep.subr.bf16.mxu0 0
    %1207 = vmatpush1.bf16.msra.mxu0 0
    %1208 = vmatprep.subr.bf16.mxu0 0
    %1209 = vmatpush1.bf16.msra.mxu0 0
    %1210 = vmatprep.subr.bf16.mxu0 0
    %1211 = vmatpush1.bf16.msra.mxu0 0
    %1212 = vmatprep.subr.bf16.mxu0 0
    %1213 = vmatpush1.bf16.msra.mxu0 0
    %1214 = vmatprep.subr.bf16.mxu0 0
    %1215 = vmatpush1.bf16.msra.mxu0 0
    %1216 = vmatprep.subr.bf16.mxu0 0
    %1217 = vmatpush1.bf16.msra.mxu0 0
    %1218 = vmatprep.subr.bf16.mxu0 0
    %1219 = vmatpush1.bf16.msra.mxu0 0
    %1220 = vmatprep.subr.bf16.mxu0 0
    %1221 = vmatpush1.bf16.msra.mxu0 0
    %1222 = vmatprep.subr.bf16.mxu0 0
    %1223 = vmatpush1.bf16.msra.mxu0 0
    %1224 = vmatprep.mubr.bf16.mxu0 0
    %1225 = vmatmul.mubr.bf16.gmra.mrb[0].mxu0 %v1069
    %v1226 = vpop.f32.mrb[0].mxu0
    %v1227 = vadd.f32 0.0, %v1226
    %v1228 = vpop.f32.mrb[0].mxu0
    %v1229 = vpop.f32.mrb[0].mxu0
    %v1230 = vpop.f32.mrb[0].mxu0
    %1231 = vdwg.mxu0
    %v1232 = vadd.f32 %v1191, %v1227
    %v1233 = vxor.u32 %v1232, 2147483648
    %v1234 = vmul.f32 %v1233, 1.442695
    %v1235 = vpow.pop %v1234
    %v1236 = vadd.f32 %v1235, 1.0
    %v1237 = vrcp.pop %v1236
    %v1238 = vmul.f32 1.0, %v1237
    %v1239 = vtanh.pop %v1232
    %v1240 = vmul.f32 %v1238, %v1045
    %1242 = vrot.lane.b32.xlu0 %v1239, 64
    %v1243 = vpop.permute.xlu0 %1242
    %v1245 = vmul.f32 %v1238, %v1243
    %1247 = vrot.lane.b32.xlu0 %v1245, 32
    %v1248 = vpop.permute.xlu0 %1247
    %v1250 = vadd.f32 %v1240, %v1248
    %v1251 = vtanh.pop %v1250
    %1253 = vrot.lane.b32.xlu0 %v1251, 64
    %v1254 = vpop.permute.xlu0 %1253
    %v1256 = vmul.f32 %v1238, %v1254
    %v1257 = vpack.c.bf16 %v1256, %v1256
    %1259 = vrot.lane.b32.xlu0 %v1257, 32
    %v1260 = vpop.permute.xlu0 %1259
    %v1262 = vsel %vm903, %v1260, 0
    %1264 = vmatprep.subr.bf16.mxu0 0
    %1265 = vmatpush1.bf16.msra.mxu0 %v1064
    %1266 = vmatprep.subr.bf16.mxu0 0
    %1267 = vmatpush1.bf16.msra.mxu0 %v1065
    %1268 = vmatprep.subr.bf16.mxu0 0
    %1269 = vmatpush1.bf16.msra.mxu0 0
    %1270 = vmatprep.subr.bf16.mxu0 0
    %1271 = vmatpush1.bf16.msra.mxu0 0
    %1272 = vmatprep.subr.bf16.mxu0 0
    %1273 = vmatpush1.bf16.msra.mxu0 0
    %1274 = vmatprep.subr.bf16.mxu0 0
    %1275 = vmatpush1.bf16.msra.mxu0 0
    %1276 = vmatprep.subr.bf16.mxu0 0
    %1277 = vmatpush1.bf16.msra.mxu0 0
    %1278 = vmatprep.subr.bf16.mxu0 0
    %1279 = vmatpush1.bf16.msra.mxu0 0
    %1280 = vmatprep.subr.bf16.mxu0 0
    %1281 = vmatpush1.bf16.msra.mxu0 0
    %1282 = vmatprep.subr.bf16.mxu0 0
    %1283 = vmatpush1.bf16.msra.mxu0 0
    %1284 = vmatprep.subr.bf16.mxu0 0
    %1285 = vmatpush1.bf16.msra.mxu0 0
    %1286 = vmatprep.subr.bf16.mxu0 0
    %1287 = vmatpush1.bf16.msra.mxu0 0
    %1288 = vmatprep.subr.bf16.mxu0 0
    %1289 = vmatpush1.bf16.msra.mxu0 0
    %1290 = vmatprep.subr.bf16.mxu0 0
    %1291 = vmatpush1.bf16.msra.mxu0 0
    %1292 = vmatprep.subr.bf16.mxu0 0
    %1293 = vmatpush1.bf16.msra.mxu0 0
    %1294 = vmatprep.subr.bf16.mxu0 0
    %1295 = vmatpush1.bf16.msra.mxu0 0
    %1296 = vmatprep.mubr.bf16.mxu0 0
    %1297 = vmatmul.mubr.bf16.gmra.mrb[0].mxu0 %v1262
    %v1298 = vpop.f32.mrb[0].mxu0
    %v1299 = vadd.f32 %v965, %v1298
    %v1300 = vpop.f32.mrb[0].mxu0
    %v1301 = vpop.f32.mrb[0].mxu0
    %v1302 = vpop.f32.mrb[0].mxu0
    %1303 = vdwg.mxu0
    %v1304 = vpack.c.bf16 %v1187, %v1187
    %1306 = vrot.lane.b32.xlu0 %v1304, 32
    %v1307 = vpop.permute.xlu0 %1306
    %v1309 = vsel %vm903, %v1307, 0
    %1311 = vmatprep.subr.bf16.mxu0 0
    %1312 = vmatpush1.bf16.msra.mxu0 %v1119
    %1313 = vmatprep.subr.bf16.mxu0 0
    %1314 = vmatpush1.bf16.msra.mxu0 %v1120
    %1315 = vmatprep.subr.bf16.mxu0 0
    %1316 = vmatpush1.bf16.msra.mxu0 0
    %1317 = vmatprep.subr.bf16.mxu0 0
    %1318 = vmatpush1.bf16.msra.mxu0 0
    %1319 = vmatprep.subr.bf16.mxu0 0
    %1320 = vmatpush1.bf16.msra.mxu0 0
    %1321 = vmatprep.subr.bf16.mxu0 0
    %1322 = vmatpush1.bf16.msra.mxu0 0
    %1323 = vmatprep.subr.bf16.mxu0 0
    %1324 = vmatpush1.bf16.msra.mxu0 0
    %1325 = vmatprep.subr.bf16.mxu0 0
    %1326 = vmatpush1.bf16.msra.mxu0 0
    %1327 = vmatprep.subr.bf16.mxu0 0
    %1328 = vmatpush1.bf16.msra.mxu0 0
    %1329 = vmatprep.subr.bf16.mxu0 0
    %1330 = vmatpush1.bf16.msra.mxu0 0
    %1331 = vmatprep.subr.bf16.mxu0 0
    %1332 = vmatpush1.bf16.msra.mxu0 0
    %1333 = vmatprep.subr.bf16.mxu0 0
    %1334 = vmatpush1.bf16.msra.mxu0 0
    %1335 = vmatprep.subr.bf16.mxu0 0
    %1336 = vmatpush1.bf16.msra.mxu0 0
    %1337 = vmatprep.subr.bf16.mxu0 0
    %1338 = vmatpush1.bf16.msra.mxu0 0
    %1339 = vmatprep.subr.bf16.mxu0 0
    %1340 = vmatpush1.bf16.msra.mxu0 0
    %1341 = vmatprep.subr.bf16.mxu0 0
    %1342 = vmatpush1.bf16.msra.mxu0 0
    %1343 = vmatprep.mubr.bf16.mxu0 0
    %1344 = vmatmul.mubr.bf16.gmra.mrb[0].mxu0 %v1309
    %v1345 = vpop.f32.mrb[0].mxu0
    %v1346 = vadd.f32 0.0, %v1345
    %v1347 = vpop.f32.mrb[0].mxu0
    %v1348 = vpop.f32.mrb[0].mxu0
    %v1349 = vpop.f32.mrb[0].mxu0
    %1350 = vdwg.mxu0
    %v1351 = vadd.f32 %v1299, %v1346
    %v1352 = vxor.u32 %v1351, 2147483648
    %v1353 = vmul.f32 %v1352, 1.442695
    %v1354 = vpow.pop %v1353
    %v1355 = vadd.f32 %v1354, 1.0
    %v1356 = vrcp.pop %v1355
    %v1357 = vmul.f32 1.0, %v1356
    %v1358 = vtanh.pop %v1351
    %v1359 = vmul.f32 %v1357, %v1181
    %1361 = vrot.lane.b32.xlu0 %v1358, 64
    %v1362 = vpop.permute.xlu0 %1361
    %v1364 = vmul.f32 %v1357, %v1362
    %1366 = vrot.lane.b32.xlu0 %v1364, 32
    %v1367 = vpop.permute.xlu0 %1366
    %v1369 = vadd.f32 %v1359, %v1367
    %v1370 = vtanh.pop %v1369
    %1372 = vrot.lane.b32.xlu0 %v1370, 64
    %v1373 = vpop.permute.xlu0 %1372
    %v1375 = vmul.f32 %v1357, %v1373
    %v1376 = vrot.slane %v942, 2
    %v1378 = vrot.slane %v945, 1
    %v1380 = vsel %vm970, %v1376, %v1378
    %1381 = vmatprep.subr.bf16.mxu0 0
    %1382 = vmatpush1.bf16.msra.mxu0 %v980
    %1383 = vmatprep.subr.bf16.mxu0 0
    %1384 = vmatpush1.bf16.msra.mxu0 %v981
    %1385 = vmatprep.subr.bf16.mxu0 0
    %1386 = vmatpush1.bf16.msra.mxu0 0
    %1387 = vmatprep.subr.bf16.mxu0 0
    %1388 = vmatpush1.bf16.msra.mxu0 0
    %1389 = vmatprep.subr.bf16.mxu0 0
    %1390 = vmatpush1.bf16.msra.mxu0 0
    %1391 = vmatprep.subr.bf16.mxu0 0
    %1392 = vmatpush1.bf16.msra.mxu0 0
    %1393 = vmatprep.subr.bf16.mxu0 0
    %1394 = vmatpush1.bf16.msra.mxu0 0
    %1395 = vmatprep.subr.bf16.mxu0 0
    %1396 = vmatpush1.bf16.msra.mxu0 0
    %1397 = vmatprep.subr.bf16.mxu0 0
    %1398 = vmatpush1.bf16.msra.mxu0 0
    %1399 = vmatprep.subr.bf16.mxu0 0
    %1400 = vmatpush1.bf16.msra.mxu0 0
    %1401 = vmatprep.subr.bf16.mxu0 0
    %1402 = vmatpush1.bf16.msra.mxu0 0
    %1403 = vmatprep.subr.bf16.mxu0 0
    %1404 = vmatpush1.bf16.msra.mxu0 0
    %1405 = vmatprep.subr.bf16.mxu0 0
    %1406 = vmatpush1.bf16.msra.mxu0 0
    %1407 = vmatprep.subr.bf16.mxu0 0
    %1408 = vmatpush1.bf16.msra.mxu0 0
    %1409 = vmatprep.subr.bf16.mxu0 0
    %1410 = vmatpush1.bf16.msra.mxu0 0
    %1411 = vmatprep.subr.bf16.mxu0 0
    %1412 = vmatpush1.bf16.msra.mxu0 0
    %1413 = vmatprep.mubr.bf16.mxu0 0
    %1414 = vmatmul.mubr.bf16.gmra.mrb[0].mxu0 %v1262
    %v1415 = vpop.f32.mrb[0].mxu0
    %v1416 = vadd.f32 0.0, %v1415
    %v1417 = vpop.f32.mrb[0].mxu0
    %v1418 = vpop.f32.mrb[0].mxu0
    %v1419 = vpop.f32.mrb[0].mxu0
    %1420 = vdwg.mxu0
    %v1421 = vadd.f32 %v1380, %v1416
    %v1422 = vxor.u32 %v1421, 2147483648
    %v1423 = vmul.f32 %v1422, 1.442695
    %v1424 = vpow.pop %v1423
    %v1425 = vadd.f32 %v1424, 1.0
    %v1426 = vrcp.pop %v1425
    %v1427 = vmul.f32 1.0, %v1426
    %v1428 = vtanh.pop %v1421
    %v1429 = vmul.f32 %v1427, %v1250
    %1431 = vrot.lane.b32.xlu0 %v1428, 64
    %v1432 = vpop.permute.xlu0 %1431
    %v1434 = vmul.f32 %v1427, %v1432
    %1436 = vrot.lane.b32.xlu0 %v1434, 32
    %v1437 = vpop.permute.xlu0 %1436
    %v1439 = vadd.f32 %v1429, %v1437
    %v1440 = vtanh.pop %v1439
    %1442 = vrot.lane.b32.xlu0 %v1440, 64
    %v1443 = vpop.permute.xlu0 %1442
    %v1445 = vmul.f32 %v1427, %v1443
    %v1446 = vpack.c.bf16 %v1445, %v1445
    %1448 = vrot.lane.b32.xlu0 %v1446, 32
    %v1449 = vpop.permute.xlu0 %1448
    %v1451 = vsel %vm903, %v1449, 0
    %1453 = vmatprep.subr.bf16.mxu0 0
    %1454 = vmatpush1.bf16.msra.mxu0 %v1064
    %1455 = vmatprep.subr.bf16.mxu0 0
    %1456 = vmatpush1.bf16.msra.mxu0 %v1065
    %1457 = vmatprep.subr.bf16.mxu0 0
    %1458 = vmatpush1.bf16.msra.mxu0 0
    %1459 = vmatprep.subr.bf16.mxu0 0
    %1460 = vmatpush1.bf16.msra.mxu0 0
    %1461 = vmatprep.subr.bf16.mxu0 0
    %1462 = vmatpush1.bf16.msra.mxu0 0
    %1463 = vmatprep.subr.bf16.mxu0 0
    %1464 = vmatpush1.bf16.msra.mxu0 0
    %1465 = vmatprep.subr.bf16.mxu0 0
    %1466 = vmatpush1.bf16.msra.mxu0 0
    %1467 = vmatprep.subr.bf16.mxu0 0
    %1468 = vmatpush1.bf16.msra.mxu0 0
    %1469 = vmatprep.subr.bf16.mxu0 0
    %1470 = vmatpush1.bf16.msra.mxu0 0
    %1471 = vmatprep.subr.bf16.mxu0 0
    %1472 = vmatpush1.bf16.msra.mxu0 0
    %1473 = vmatprep.subr.bf16.mxu0 0
    %1474 = vmatpush1.bf16.msra.mxu0 0
    %1475 = vmatprep.subr.bf16.mxu0 0
    %1476 = vmatpush1.bf16.msra.mxu0 0
    %1477 = vmatprep.subr.bf16.mxu0 0
    %1478 = vmatpush1.bf16.msra.mxu0 0
    %1479 = vmatprep.subr.bf16.mxu0 0
    %1480 = vmatpush1.bf16.msra.mxu0 0
    %1481 = vmatprep.subr.bf16.mxu0 0
    %1482 = vmatpush1.bf16.msra.mxu0 0
    %1483 = vmatprep.subr.bf16.mxu0 0
    %1484 = vmatpush1.bf16.msra.mxu0 0
    %1485 = vmatprep.mubr.bf16.mxu0 0
    %1486 = vmatmul.mubr.bf16.gmra.mrb[0].mxu0 %v1451
    %v1487 = vpop.f32.mrb[0].mxu0
    %v1488 = vadd.f32 %v965, %v1487
    %v1489 = vpop.f32.mrb[0].mxu0
    %v1490 = vpop.f32.mrb[0].mxu0
    %v1491 = vpop.f32.mrb[0].mxu0
    %1492 = vdwg.mxu0
    %v1493 = vpack.c.bf16 %v1375, %v1375
    %1495 = vrot.lane.b32.xlu0 %v1493, 32
    %v1496 = vpop.permute.xlu0 %1495
    %v1498 = vsel %vm903, %v1496, 0
    %1500 = vmatprep.subr.bf16.mxu0 0
    %1501 = vmatpush1.bf16.msra.mxu0 %v1119
    %1502 = vmatprep.subr.bf16.mxu0 0
    %1503 = vmatpush1.bf16.msra.mxu0 %v1120
    %1504 = vmatprep.subr.bf16.mxu0 0
    %1505 = vmatpush1.bf16.msra.mxu0 0
    %1506 = vmatprep.subr.bf16.mxu0 0
    %1507 = vmatpush1.bf16.msra.mxu0 0
    %1508 = vmatprep.subr.bf16.mxu0 0
    %1509 = vmatpush1.bf16.msra.mxu0 0
    %1510 = vmatprep.subr.bf16.mxu0 0
    %1511 = vmatpush1.bf16.msra.mxu0 0
    %1512 = vmatprep.subr.bf16.mxu0 0
    %1513 = vmatpush1.bf16.msra.mxu0 0
    %1514 = vmatprep.subr.bf16.mxu0 0
    %1515 = vmatpush1.bf16.msra.mxu0 0
    %1516 = vmatprep.subr.bf16.mxu0 0
    %1517 = vmatpush1.bf16.msra.mxu0 0
    %1518 = vmatprep.subr.bf16.mxu0 0
    %1519 = vmatpush1.bf16.msra.mxu0 0
    %1520 = vmatprep.subr.bf16.mxu0 0
    %1521 = vmatpush1.bf16.msra.mxu0 0
    %1522 = vmatprep.subr.bf16.mxu0 0
    %1523 = vmatpush1.bf16.msra.mxu0 0
    %1524 = vmatprep.subr.bf16.mxu0 0
    %1525 = vmatpush1.bf16.msra.mxu0 0
    %1526 = vmatprep.subr.bf16.mxu0 0
    %1527 = vmatpush1.bf16.msra.mxu0 0
    %1528 = vmatprep.subr.bf16.mxu0 0
    %1529 = vmatpush1.bf16.msra.mxu0 0
    %1530 = vmatprep.subr.bf16.mxu0 0
    %1531 = vmatpush1.bf16.msra.mxu0 0
    %1532 = vmatprep.mubr.bf16.mxu0 0
    %1533 = vmatmul.mubr.bf16.gmra.mrb[0].mxu0 %v1498
    %v1534 = vpop.f32.mrb[0].mxu0
    %v1535 = vadd.f32 0.0, %v1534
    %v1536 = vpop.f32.mrb[0].mxu0
    %v1537 = vpop.f32.mrb[0].mxu0
    %v1538 = vpop.f32.mrb[0].mxu0
    %1539 = vdwg.mxu0
    %v1540 = vadd.f32 %v1488, %v1535
    %v1541 = vxor.u32 %v1540, 2147483648
    %v1542 = vmul.f32 %v1541, 1.442695
    %v1543 = vpow.pop %v1542
    %v1544 = vadd.f32 %v1543, 1.0
    %v1545 = vrcp.pop %v1544
    %v1546 = vmul.f32 1.0, %v1545
    %v1547 = vtanh.pop %v1540
    %v1548 = vmul.f32 %v1546, %v1369
    %1550 = vrot.lane.b32.xlu0 %v1547, 64
    %v1551 = vpop.permute.xlu0 %1550
    %v1553 = vmul.f32 %v1546, %v1551
    %1555 = vrot.lane.b32.xlu0 %v1553, 32
    %v1556 = vpop.permute.xlu0 %1555
    %v1558 = vadd.f32 %v1548, %v1556
    %v1559 = vtanh.pop %v1558
    %1561 = vrot.lane.b32.xlu0 %v1559, 64
    %v1562 = vpop.permute.xlu0 %1561
    %v1564 = vmul.f32 %v1546, %v1562
    %v1565 = vrot.slane %v942, 3
    %v1567 = vrot.slane %v945, 2
    %v1569 = vsel %vm970, %v1565, %v1567
    %1570 = vmatprep.subr.bf16.mxu0 0
    %1571 = vmatpush1.bf16.msra.mxu0 %v980
    %1572 = vmatprep.subr.bf16.mxu0 0
    %1573 = vmatpush1.bf16.msra.mxu0 %v981
    %1574 = vmatprep.subr.bf16.mxu0 0
    %1575 = vmatpush1.bf16.msra.mxu0 0
    %1576 = vmatprep.subr.bf16.mxu0 0
    %1577 = vmatpush1.bf16.msra.mxu0 0
    %1578 = vmatprep.subr.bf16.mxu0 0
    %1579 = vmatpush1.bf16.msra.mxu0 0
    %1580 = vmatprep.subr.bf16.mxu0 0
    %1581 = vmatpush1.bf16.msra.mxu0 0
    %1582 = vmatprep.subr.bf16.mxu0 0
    %1583 = vmatpush1.bf16.msra.mxu0 0
    %1584 = vmatprep.subr.bf16.mxu0 0
    %1585 = vmatpush1.bf16.msra.mxu0 0
    %1586 = vmatprep.subr.bf16.mxu0 0
    %1587 = vmatpush1.bf16.msra.mxu0 0
    %1588 = vmatprep.subr.bf16.mxu0 0
    %1589 = vmatpush1.bf16.msra.mxu0 0
    %1590 = vmatprep.subr.bf16.mxu0 0
    %1591 = vmatpush1.bf16.msra.mxu0 0
    %1592 = vmatprep.subr.bf16.mxu0 0
    %1593 = vmatpush1.bf16.msra.mxu0 0
    %1594 = vmatprep.subr.bf16.mxu0 0
    %1595 = vmatpush1.bf16.msra.mxu0 0
    %1596 = vmatprep.subr.bf16.mxu0 0
    %1597 = vmatpush1.bf16.msra.mxu0 0
    %1598 = vmatprep.subr.bf16.mxu0 0
    %1599 = vmatpush1.bf16.msra.mxu0 0
    %1600 = vmatprep.subr.bf16.mxu0 0
    %1601 = vmatpush1.bf16.msra.mxu0 0
    %1602 = vmatprep.mubr.bf16.mxu0 0
    %1603 = vmatmul.mubr.bf16.gmra.mrb[0].mxu0 %v1451
    %v1604 = vpop.f32.mrb[0].mxu0
    %v1605 = vadd.f32 0.0, %v1604
    %v1606 = vpop.f32.mrb[0].mxu0
    %v1607 = vpop.f32.mrb[0].mxu0
    %v1608 = vpop.f32.mrb[0].mxu0
    %1609 = vdwg.mxu0
    %v1610 = vadd.f32 %v1569, %v1605
    %v1611 = vxor.u32 %v1610, 2147483648
    %v1612 = vmul.f32 %v1611, 1.442695
    %v1613 = vpow.pop %v1612
    %v1614 = vadd.f32 %v1613, 1.0
    %v1615 = vrcp.pop %v1614
    %v1616 = vmul.f32 1.0, %v1615
    %v1617 = vtanh.pop %v1610
    %v1618 = vmul.f32 %v1616, %v1439
    %1620 = vrot.lane.b32.xlu0 %v1617, 64
    %v1621 = vpop.permute.xlu0 %1620
    %v1623 = vmul.f32 %v1616, %v1621
    %1625 = vrot.lane.b32.xlu0 %v1623, 32
    %v1626 = vpop.permute.xlu0 %1625
    %v1628 = vadd.f32 %v1618, %v1626
    %v1629 = vtanh.pop %v1628
    %1631 = vrot.lane.b32.xlu0 %v1629, 64
    %v1632 = vpop.permute.xlu0 %1631
    %v1634 = vmul.f32 %v1616, %v1632
    %v1635 = vpack.c.bf16 %v1634, %v1634
    %1637 = vrot.lane.b32.xlu0 %v1635, 32
    %v1638 = vpop.permute.xlu0 %1637
    %v1640 = vsel %vm903, %v1638, 0
    %1642 = vmatprep.subr.bf16.mxu0 0
    %1643 = vmatpush1.bf16.msra.mxu0 %v1064
    %1644 = vmatprep.subr.bf16.mxu0 0
    %1645 = vmatpush1.bf16.msra.mxu0 %v1065
    %1646 = vmatprep.subr.bf16.mxu0 0
    %1647 = vmatpush1.bf16.msra.mxu0 0
    %1648 = vmatprep.subr.bf16.mxu0 0
    %1649 = vmatpush1.bf16.msra.mxu0 0
    %1650 = vmatprep.subr.bf16.mxu0 0
    %1651 = vmatpush1.bf16.msra.mxu0 0
    %1652 = vmatprep.subr.bf16.mxu0 0
    %1653 = vmatpush1.bf16.msra.mxu0 0
    %1654 = vmatprep.subr.bf16.mxu0 0
    %1655 = vmatpush1.bf16.msra.mxu0 0
    %1656 = vmatprep.subr.bf16.mxu0 0
    %1657 = vmatpush1.bf16.msra.mxu0 0
    %1658 = vmatprep.subr.bf16.mxu0 0
    %1659 = vmatpush1.bf16.msra.mxu0 0
    %1660 = vmatprep.subr.bf16.mxu0 0
    %1661 = vmatpush1.bf16.msra.mxu0 0
    %1662 = vmatprep.subr.bf16.mxu0 0
    %1663 = vmatpush1.bf16.msra.mxu0 0
    %1664 = vmatprep.subr.bf16.mxu0 0
    %1665 = vmatpush1.bf16.msra.mxu0 0
    %1666 = vmatprep.subr.bf16.mxu0 0
    %1667 = vmatpush1.bf16.msra.mxu0 0
    %1668 = vmatprep.subr.bf16.mxu0 0
    %1669 = vmatpush1.bf16.msra.mxu0 0
    %1670 = vmatprep.subr.bf16.mxu0 0
    %1671 = vmatpush1.bf16.msra.mxu0 0
    %1672 = vmatprep.subr.bf16.mxu0 0
    %1673 = vmatpush1.bf16.msra.mxu0 0
    %1674 = vmatprep.mubr.bf16.mxu0 0
    %1675 = vmatmul.mubr.bf16.gmra.mrb[0].mxu0 %v1640
    %v1676 = vpop.f32.mrb[0].mxu0
    %v1677 = vadd.f32 %v965, %v1676
    %v1678 = vpop.f32.mrb[0].mxu0
    %v1679 = vpop.f32.mrb[0].mxu0
    %v1680 = vpop.f32.mrb[0].mxu0
    %1681 = vdwg.mxu0
    %v1682 = vpack.c.bf16 %v1564, %v1564
    %1684 = vrot.lane.b32.xlu0 %v1682, 32
    %v1685 = vpop.permute.xlu0 %1684
    %v1687 = vsel %vm903, %v1685, 0
    %1689 = vmatprep.subr.bf16.mxu0 0
    %1690 = vmatpush1.bf16.msra.mxu0 %v1119
    %1691 = vmatprep.subr.bf16.mxu0 0
    %1692 = vmatpush1.bf16.msra.mxu0 %v1120
    %1693 = vmatprep.subr.bf16.mxu0 0
    %1694 = vmatpush1.bf16.msra.mxu0 0
    %1695 = vmatprep.subr.bf16.mxu0 0
    %1696 = vmatpush1.bf16.msra.mxu0 0
    %1697 = vmatprep.subr.bf16.mxu0 0
    %1698 = vmatpush1.bf16.msra.mxu0 0
    %1699 = vmatprep.subr.bf16.mxu0 0
    %1700 = vmatpush1.bf16.msra.mxu0 0
    %1701 = vmatprep.subr.bf16.mxu0 0
    %1702 = vmatpush1.bf16.msra.mxu0 0
    %1703 = vmatprep.subr.bf16.mxu0 0
    %1704 = vmatpush1.bf16.msra.mxu0 0
    %1705 = vmatprep.subr.bf16.mxu0 0
    %1706 = vmatpush1.bf16.msra.mxu0 0
    %1707 = vmatprep.subr.bf16.mxu0 0
    %1708 = vmatpush1.bf16.msra.mxu0 0
    %1709 = vmatprep.subr.bf16.mxu0 0
    %1710 = vmatpush1.bf16.msra.mxu0 0
    %1711 = vmatprep.subr.bf16.mxu0 0
    %1712 = vmatpush1.bf16.msra.mxu0 0
    %1713 = vmatprep.subr.bf16.mxu0 0
    %1714 = vmatpush1.bf16.msra.mxu0 0
    %1715 = vmatprep.subr.bf16.mxu0 0
    %1716 = vmatpush1.bf16.msra.mxu0 0
    %1717 = vmatprep.subr.bf16.mxu0 0
    %1718 = vmatpush1.bf16.msra.mxu0 0
    %1719 = vmatprep.subr.bf16.mxu0 0
    %1720 = vmatpush1.bf16.msra.mxu0 0
    %1721 = vmatprep.mubr.bf16.mxu0 0
    %1722 = vmatmul.mubr.bf16.gmra.mrb[0].mxu0 %v1687
    %v1723 = vpop.f32.mrb[0].mxu0
    %v1724 = vadd.f32 0.0, %v1723
    %v1725 = vpop.f32.mrb[0].mxu0
    %v1726 = vpop.f32.mrb[0].mxu0
    %v1727 = vpop.f32.mrb[0].mxu0
    %1728 = vdwg.mxu0
    %v1729 = vadd.f32 %v1677, %v1724
    %v1730 = vxor.u32 %v1729, 2147483648
    %v1731 = vmul.f32 %v1730, 1.442695
    %v1732 = vpow.pop %v1731
    %v1733 = vadd.f32 %v1732, 1.0
    %v1734 = vrcp.pop %v1733
    %v1735 = vmul.f32 1.0, %v1734
    %v1736 = vtanh.pop %v1729
    %v1737 = vmul.f32 %v1735, %v1558
    %1739 = vrot.lane.b32.xlu0 %v1736, 64
    %v1740 = vpop.permute.xlu0 %1739
    %v1742 = vmul.f32 %v1735, %v1740
    %1744 = vrot.lane.b32.xlu0 %v1742, 32
    %v1745 = vpop.permute.xlu0 %1744
    %v1747 = vadd.f32 %v1737, %v1745
    %v1748 = vtanh.pop %v1747
    %1750 = vrot.lane.b32.xlu0 %v1748, 64
    %v1751 = vpop.permute.xlu0 %1750
    %v1753 = vmul.f32 %v1735, %v1751
    %v1754 = vrot.slane %v942, 4
    %v1756 = vrot.slane %v945, 3
    %v1758 = vsel %vm970, %v1754, %v1756
    %1759 = vmatprep.subr.bf16.mxu0 0
    %1760 = vmatpush1.bf16.msra.mxu0 %v980
    %1761 = vmatprep.subr.bf16.mxu0 0
    %1762 = vmatpush1.bf16.msra.mxu0 %v981
    %1763 = vmatprep.subr.bf16.mxu0 0
    %1764 = vmatpush1.bf16.msra.mxu0 0
    %1765 = vmatprep.subr.bf16.mxu0 0
    %1766 = vmatpush1.bf16.msra.mxu0 0
    %1767 = vmatprep.subr.bf16.mxu0 0
    %1768 = vmatpush1.bf16.msra.mxu0 0
    %1769 = vmatprep.subr.bf16.mxu0 0
    %1770 = vmatpush1.bf16.msra.mxu0 0
    %1771 = vmatprep.subr.bf16.mxu0 0
    %1772 = vmatpush1.bf16.msra.mxu0 0
    %1773 = vmatprep.subr.bf16.mxu0 0
    %1774 = vmatpush1.bf16.msra.mxu0 0
    %1775 = vmatprep.subr.bf16.mxu0 0
    %1776 = vmatpush1.bf16.msra.mxu0 0
    %1777 = vmatprep.subr.bf16.mxu0 0
    %1778 = vmatpush1.bf16.msra.mxu0 0
    %1779 = vmatprep.subr.bf16.mxu0 0
    %1780 = vmatpush1.bf16.msra.mxu0 0
    %1781 = vmatprep.subr.bf16.mxu0 0
    %1782 = vmatpush1.bf16.msra.mxu0 0
    %1783 = vmatprep.subr.bf16.mxu0 0
    %1784 = vmatpush1.bf16.msra.mxu0 0
    %1785 = vmatprep.subr.bf16.mxu0 0
    %1786 = vmatpush1.bf16.msra.mxu0 0
    %1787 = vmatprep.subr.bf16.mxu0 0
    %1788 = vmatpush1.bf16.msra.mxu0 0
    %1789 = vmatprep.subr.bf16.mxu0 0
    %1790 = vmatpush1.bf16.msra.mxu0 0
    %1791 = vmatprep.mubr.bf16.mxu0 0
    %1792 = vmatmul.mubr.bf16.gmra.mrb[0].mxu0 %v1640
    %v1793 = vpop.f32.mrb[0].mxu0
    %v1794 = vadd.f32 0.0, %v1793
    %v1795 = vpop.f32.mrb[0].mxu0
    %v1796 = vpop.f32.mrb[0].mxu0
    %v1797 = vpop.f32.mrb[0].mxu0
    %1798 = vdwg.mxu0
    %v1799 = vadd.f32 %v1758, %v1794
    %v1800 = vxor.u32 %v1799, 2147483648
    %v1801 = vmul.f32 %v1800, 1.442695
    %v1802 = vpow.pop %v1801
    %v1803 = vadd.f32 %v1802, 1.0
    %v1804 = vrcp.pop %v1803
    %v1805 = vmul.f32 1.0, %v1804
    %v1806 = vtanh.pop %v1799
    %v1807 = vmul.f32 %v1805, %v1628
    %1809 = vrot.lane.b32.xlu0 %v1806, 64
    %v1810 = vpop.permute.xlu0 %1809
    %v1812 = vmul.f32 %v1805, %v1810
    %1814 = vrot.lane.b32.xlu0 %v1812, 32
    %v1815 = vpop.permute.xlu0 %1814
    %v1817 = vadd.f32 %v1807, %v1815
    %v1818 = vtanh.pop %v1817
    %1820 = vrot.lane.b32.xlu0 %v1818, 64
    %v1821 = vpop.permute.xlu0 %1820
    %v1823 = vmul.f32 %v1805, %v1821
    %v1824 = vpack.c.bf16 %v1823, %v1823
    %1826 = vrot.lane.b32.xlu0 %v1824, 32
    %v1827 = vpop.permute.xlu0 %1826
    %v1829 = vsel %vm903, %v1827, 0
    %1831 = vmatprep.subr.bf16.mxu0 0
    %1832 = vmatpush1.bf16.msra.mxu0 %v1064
    %1833 = vmatprep.subr.bf16.mxu0 0
    %1834 = vmatpush1.bf16.msra.mxu0 %v1065
    %1835 = vmatprep.subr.bf16.mxu0 0
    %1836 = vmatpush1.bf16.msra.mxu0 0
    %1837 = vmatprep.subr.bf16.mxu0 0
    %1838 = vmatpush1.bf16.msra.mxu0 0
    %1839 = vmatprep.subr.bf16.mxu0 0
    %1840 = vmatpush1.bf16.msra.mxu0 0
    %1841 = vmatprep.subr.bf16.mxu0 0
    %1842 = vmatpush1.bf16.msra.mxu0 0
    %1843 = vmatprep.subr.bf16.mxu0 0
    %1844 = vmatpush1.bf16.msra.mxu0 0
    %1845 = vmatprep.subr.bf16.mxu0 0
    %1846 = vmatpush1.bf16.msra.mxu0 0
    %1847 = vmatprep.subr.bf16.mxu0 0
    %1848 = vmatpush1.bf16.msra.mxu0 0
    %1849 = vmatprep.subr.bf16.mxu0 0
    %1850 = vmatpush1.bf16.msra.mxu0 0
    %1851 = vmatprep.subr.bf16.mxu0 0
    %1852 = vmatpush1.bf16.msra.mxu0 0
    %1853 = vmatprep.subr.bf16.mxu0 0
    %1854 = vmatpush1.bf16.msra.mxu0 0
    %1855 = vmatprep.subr.bf16.mxu0 0
    %1856 = vmatpush1.bf16.msra.mxu0 0
    %1857 = vmatprep.subr.bf16.mxu0 0
    %1858 = vmatpush1.bf16.msra.mxu0 0
    %1859 = vmatprep.subr.bf16.mxu0 0
    %1860 = vmatpush1.bf16.msra.mxu0 0
    %1861 = vmatprep.subr.bf16.mxu0 0
    %1862 = vmatpush1.bf16.msra.mxu0 0
    %1863 = vmatprep.mubr.bf16.mxu0 0
    %1864 = vmatmul.mubr.bf16.gmra.mrb[0].mxu0 %v1829
    %v1865 = vpop.f32.mrb[0].mxu0
    %v1866 = vadd.f32 %v965, %v1865
    %v1867 = vpop.f32.mrb[0].mxu0
    %v1868 = vpop.f32.mrb[0].mxu0
    %v1869 = vpop.f32.mrb[0].mxu0
    %1870 = vdwg.mxu0
    %v1871 = vpack.c.bf16 %v1753, %v1753
    %1873 = vrot.lane.b32.xlu0 %v1871, 32
    %v1874 = vpop.permute.xlu0 %1873
    %v1876 = vsel %vm903, %v1874, 0
    %1878 = vmatprep.subr.bf16.mxu0 0
    %1879 = vmatpush1.bf16.msra.mxu0 %v1119
    %1880 = vmatprep.subr.bf16.mxu0 0
    %1881 = vmatpush1.bf16.msra.mxu0 %v1120
    %1882 = vmatprep.subr.bf16.mxu0 0
    %1883 = vmatpush1.bf16.msra.mxu0 0
    %1884 = vmatprep.subr.bf16.mxu0 0
    %1885 = vmatpush1.bf16.msra.mxu0 0
    %1886 = vmatprep.subr.bf16.mxu0 0
    %1887 = vmatpush1.bf16.msra.mxu0 0
    %1888 = vmatprep.subr.bf16.mxu0 0
    %1889 = vmatpush1.bf16.msra.mxu0 0
    %1890 = vmatprep.subr.bf16.mxu0 0
    %1891 = vmatpush1.bf16.msra.mxu0 0
    %1892 = vmatprep.subr.bf16.mxu0 0
    %1893 = vmatpush1.bf16.msra.mxu0 0
    %1894 = vmatprep.subr.bf16.mxu0 0
    %1895 = vmatpush1.bf16.msra.mxu0 0
    %1896 = vmatprep.subr.bf16.mxu0 0
    %1897 = vmatpush1.bf16.msra.mxu0 0
    %1898 = vmatprep.subr.bf16.mxu0 0
    %1899 = vmatpush1.bf16.msra.mxu0 0
    %1900 = vmatprep.subr.bf16.mxu0 0
    %1901 = vmatpush1.bf16.msra.mxu0 0
    %1902 = vmatprep.subr.bf16.mxu0 0
    %1903 = vmatpush1.bf16.msra.mxu0 0
    %1904 = vmatprep.subr.bf16.mxu0 0
    %1905 = vmatpush1.bf16.msra.mxu0 0
    %1906 = vmatprep.subr.bf16.mxu0 0
    %1907 = vmatpush1.bf16.msra.mxu0 0
    %1908 = vmatprep.subr.bf16.mxu0 0
    %1909 = vmatpush1.bf16.msra.mxu0 0
    %1910 = vmatprep.mubr.bf16.mxu0 0
    %1911 = vmatmul.mubr.bf16.gmra.mrb[0].mxu0 %v1876
    %v1912 = vpop.f32.mrb[0].mxu0
    %v1913 = vadd.f32 0.0, %v1912
    %v1914 = vpop.f32.mrb[0].mxu0
    %v1915 = vpop.f32.mrb[0].mxu0
    %v1916 = vpop.f32.mrb[0].mxu0
    %1917 = vdwg.mxu0
    %v1918 = vadd.f32 %v1866, %v1913
    %v1919 = vxor.u32 %v1918, 2147483648
    %v1920 = vmul.f32 %v1919, 1.442695
    %v1921 = vpow.pop %v1920
    %v1922 = vadd.f32 %v1921, 1.0
    %v1923 = vrcp.pop %v1922
    %v1924 = vmul.f32 1.0, %v1923
    %v1925 = vtanh.pop %v1918
    %v1926 = vmul.f32 %v1924, %v1747
    %1928 = vrot.lane.b32.xlu0 %v1925, 64
    %v1929 = vpop.permute.xlu0 %1928
    %v1931 = vmul.f32 %v1924, %v1929
    %1933 = vrot.lane.b32.xlu0 %v1931, 32
    %v1934 = vpop.permute.xlu0 %1933
    %v1936 = vadd.f32 %v1926, %v1934
    %v1937 = vtanh.pop %v1936
    %1939 = vrot.lane.b32.xlu0 %v1937, 64
    %v1940 = vpop.permute.xlu0 %1939
    %v1942 = vmul.f32 %v1924, %v1940
    %v1943 = vrot.slane %v942, 5
    %v1945 = vrot.slane %v945, 4
    %v1947 = vsel %vm970, %v1943, %v1945
    %1948 = vmatprep.subr.bf16.mxu0 0
    %1949 = vmatpush1.bf16.msra.mxu0 %v980
    %1950 = vmatprep.subr.bf16.mxu0 0
    %1951 = vmatpush1.bf16.msra.mxu0 %v981
    %1952 = vmatprep.subr.bf16.mxu0 0
    %1953 = vmatpush1.bf16.msra.mxu0 0
    %1954 = vmatprep.subr.bf16.mxu0 0
    %1955 = vmatpush1.bf16.msra.mxu0 0
    %1956 = vmatprep.subr.bf16.mxu0 0
    %1957 = vmatpush1.bf16.msra.mxu0 0
    %1958 = vmatprep.subr.bf16.mxu0 0
    %1959 = vmatpush1.bf16.msra.mxu0 0
    %1960 = vmatprep.subr.bf16.mxu0 0
    %1961 = vmatpush1.bf16.msra.mxu0 0
    %1962 = vmatprep.subr.bf16.mxu0 0
    %1963 = vmatpush1.bf16.msra.mxu0 0
    %1964 = vmatprep.subr.bf16.mxu0 0
    %1965 = vmatpush1.bf16.msra.mxu0 0
    %1966 = vmatprep.subr.bf16.mxu0 0
    %1967 = vmatpush1.bf16.msra.mxu0 0
    %1968 = vmatprep.subr.bf16.mxu0 0
    %1969 = vmatpush1.bf16.msra.mxu0 0
    %1970 = vmatprep.subr.bf16.mxu0 0
    %1971 = vmatpush1.bf16.msra.mxu0 0
    %1972 = vmatprep.subr.bf16.mxu0 0
    %1973 = vmatpush1.bf16.msra.mxu0 0
    %1974 = vmatprep.subr.bf16.mxu0 0
    %1975 = vmatpush1.bf16.msra.mxu0 0
    %1976 = vmatprep.subr.bf16.mxu0 0
    %1977 = vmatpush1.bf16.msra.mxu0 0
    %1978 = vmatprep.subr.bf16.mxu0 0
    %1979 = vmatpush1.bf16.msra.mxu0 0
    %1980 = vmatprep.mubr.bf16.mxu0 0
    %1981 = vmatmul.mubr.bf16.gmra.mrb[0].mxu0 %v1829
    %v1982 = vpop.f32.mrb[0].mxu0
    %v1983 = vadd.f32 0.0, %v1982
    %v1984 = vpop.f32.mrb[0].mxu0
    %v1985 = vpop.f32.mrb[0].mxu0
    %v1986 = vpop.f32.mrb[0].mxu0
    %1987 = vdwg.mxu0
    %v1988 = vadd.f32 %v1947, %v1983
    %v1989 = vxor.u32 %v1988, 2147483648
    %v1990 = vmul.f32 %v1989, 1.442695
    %v1991 = vpow.pop %v1990
    %v1992 = vadd.f32 %v1991, 1.0
    %v1993 = vrcp.pop %v1992
    %v1994 = vmul.f32 1.0, %v1993
    %v1995 = vtanh.pop %v1988
    %v1996 = vmul.f32 %v1994, %v1817
    %1998 = vrot.lane.b32.xlu0 %v1995, 64
    %v1999 = vpop.permute.xlu0 %1998
    %v2001 = vmul.f32 %v1994, %v1999
    %2003 = vrot.lane.b32.xlu0 %v2001, 32
    %v2004 = vpop.permute.xlu0 %2003
    %v2006 = vadd.f32 %v1996, %v2004
    %v2007 = vtanh.pop %v2006
    %2009 = vrot.lane.b32.xlu0 %v2007, 64
    %v2010 = vpop.permute.xlu0 %2009
    %v2012 = vmul.f32 %v1994, %v2010
    %v2013 = vpack.c.bf16 %v2012, %v2012
    %2015 = vrot.lane.b32.xlu0 %v2013, 32
    %v2016 = vpop.permute.xlu0 %2015
    %v2018 = vsel %vm903, %v2016, 0
    %2020 = vmatprep.subr.bf16.mxu0 0
    %2021 = vmatpush1.bf16.msra.mxu0 %v1064
    %2022 = vmatprep.subr.bf16.mxu0 0
    %2023 = vmatpush1.bf16.msra.mxu0 %v1065
    %2024 = vmatprep.subr.bf16.mxu0 0
    %2025 = vmatpush1.bf16.msra.mxu0 0
    %2026 = vmatprep.subr.bf16.mxu0 0
    %2027 = vmatpush1.bf16.msra.mxu0 0
    %2028 = vmatprep.subr.bf16.mxu0 0
    %2029 = vmatpush1.bf16.msra.mxu0 0
    %2030 = vmatprep.subr.bf16.mxu0 0
    %2031 = vmatpush1.bf16.msra.mxu0 0
    %2032 = vmatprep.subr.bf16.mxu0 0
    %2033 = vmatpush1.bf16.msra.mxu0 0
    %2034 = vmatprep.subr.bf16.mxu0 0
    %2035 = vmatpush1.bf16.msra.mxu0 0
    %2036 = vmatprep.subr.bf16.mxu0 0
    %2037 = vmatpush1.bf16.msra.mxu0 0
    %2038 = vmatprep.subr.bf16.mxu0 0
    %2039 = vmatpush1.bf16.msra.mxu0 0
    %2040 = vmatprep.subr.bf16.mxu0 0
    %2041 = vmatpush1.bf16.msra.mxu0 0
    %2042 = vmatprep.subr.bf16.mxu0 0
    %2043 = vmatpush1.bf16.msra.mxu0 0
    %2044 = vmatprep.subr.bf16.mxu0 0
    %2045 = vmatpush1.bf16.msra.mxu0 0
    %2046 = vmatprep.subr.bf16.mxu0 0
    %2047 = vmatpush1.bf16.msra.mxu0 0
    %2048 = vmatprep.subr.bf16.mxu0 0
    %2049 = vmatpush1.bf16.msra.mxu0 0
    %2050 = vmatprep.subr.bf16.mxu0 0
    %2051 = vmatpush1.bf16.msra.mxu0 0
    %2052 = vmatprep.mubr.bf16.mxu0 0
    %2053 = vmatmul.mubr.bf16.gmra.mrb[0].mxu0 %v2018
    %v2054 = vpop.f32.mrb[0].mxu0
    %v2055 = vadd.f32 %v965, %v2054
    %v2056 = vpop.f32.mrb[0].mxu0
    %v2057 = vpop.f32.mrb[0].mxu0
    %v2058 = vpop.f32.mrb[0].mxu0
    %2059 = vdwg.mxu0
    %v2060 = vpack.c.bf16 %v1942, %v1942
    %2062 = vrot.lane.b32.xlu0 %v2060, 32
    %v2063 = vpop.permute.xlu0 %2062
    %v2065 = vsel %vm903, %v2063, 0
    %2067 = vmatprep.subr.bf16.mxu0 0
    %2068 = vmatpush1.bf16.msra.mxu0 %v1119
    %2069 = vmatprep.subr.bf16.mxu0 0
    %2070 = vmatpush1.bf16.msra.mxu0 %v1120
    %2071 = vmatprep.subr.bf16.mxu0 0
    %2072 = vmatpush1.bf16.msra.mxu0 0
    %2073 = vmatprep.subr.bf16.mxu0 0
    %2074 = vmatpush1.bf16.msra.mxu0 0
    %2075 = vmatprep.subr.bf16.mxu0 0
    %2076 = vmatpush1.bf16.msra.mxu0 0
    %2077 = vmatprep.subr.bf16.mxu0 0
    %2078 = vmatpush1.bf16.msra.mxu0 0
    %2079 = vmatprep.subr.bf16.mxu0 0
    %2080 = vmatpush1.bf16.msra.mxu0 0
    %2081 = vmatprep.subr.bf16.mxu0 0
    %2082 = vmatpush1.bf16.msra.mxu0 0
    %2083 = vmatprep.subr.bf16.mxu0 0
    %2084 = vmatpush1.bf16.msra.mxu0 0
    %2085 = vmatprep.subr.bf16.mxu0 0
    %2086 = vmatpush1.bf16.msra.mxu0 0
    %2087 = vmatprep.subr.bf16.mxu0 0
    %2088 = vmatpush1.bf16.msra.mxu0 0
    %2089 = vmatprep.subr.bf16.mxu0 0
    %2090 = vmatpush1.bf16.msra.mxu0 0
    %2091 = vmatprep.subr.bf16.mxu0 0
    %2092 = vmatpush1.bf16.msra.mxu0 0
    %2093 = vmatprep.subr.bf16.mxu0 0
    %2094 = vmatpush1.bf16.msra.mxu0 0
    %2095 = vmatprep.subr.bf16.mxu0 0
    %2096 = vmatpush1.bf16.msra.mxu0 0
    %2097 = vmatprep.subr.bf16.mxu0 0
    %2098 = vmatpush1.bf16.msra.mxu0 0
    %2099 = vmatprep.mubr.bf16.mxu0 0
    %2100 = vmatmul.mubr.bf16.gmra.mrb[0].mxu0 %v2065
    %v2101 = vpop.f32.mrb[0].mxu0
    %v2102 = vadd.f32 0.0, %v2101
    %v2103 = vpop.f32.mrb[0].mxu0
    %v2104 = vpop.f32.mrb[0].mxu0
    %v2105 = vpop.f32.mrb[0].mxu0
    %2106 = vdwg.mxu0
    %v2107 = vadd.f32 %v2055, %v2102
    %v2108 = vxor.u32 %v2107, 2147483648
    %v2109 = vmul.f32 %v2108, 1.442695
    %v2110 = vpow.pop %v2109
    %v2111 = vadd.f32 %v2110, 1.0
    %v2112 = vrcp.pop %v2111
    %v2113 = vmul.f32 1.0, %v2112
    %v2114 = vtanh.pop %v2107
    %v2115 = vmul.f32 %v2113, %v1936
    %2117 = vrot.lane.b32.xlu0 %v2114, 64
    %v2118 = vpop.permute.xlu0 %2117
    %v2120 = vmul.f32 %v2113, %v2118
    %2122 = vrot.lane.b32.xlu0 %v2120, 32
    %v2123 = vpop.permute.xlu0 %2122
    %v2125 = vadd.f32 %v2115, %v2123
    %v2126 = vtanh.pop %v2125
    %2128 = vrot.lane.b32.xlu0 %v2126, 64
    %v2129 = vpop.permute.xlu0 %2128
    %v2131 = vmul.f32 %v2113, %v2129
    %v2132 = vrot.slane %v942, 6
    %v2134 = vrot.slane %v945, 5
    %v2136 = vsel %vm970, %v2132, %v2134
    %2137 = vmatprep.subr.bf16.mxu0 0
    %2138 = vmatpush1.bf16.msra.mxu0 %v980
    %2139 = vmatprep.subr.bf16.mxu0 0
    %2140 = vmatpush1.bf16.msra.mxu0 %v981
    %2141 = vmatprep.subr.bf16.mxu0 0
    %2142 = vmatpush1.bf16.msra.mxu0 0
    %2143 = vmatprep.subr.bf16.mxu0 0
    %2144 = vmatpush1.bf16.msra.mxu0 0
    %2145 = vmatprep.subr.bf16.mxu0 0
    %2146 = vmatpush1.bf16.msra.mxu0 0
    %2147 = vmatprep.subr.bf16.mxu0 0
    %2148 = vmatpush1.bf16.msra.mxu0 0
    %2149 = vmatprep.subr.bf16.mxu0 0
    %2150 = vmatpush1.bf16.msra.mxu0 0
    %2151 = vmatprep.subr.bf16.mxu0 0
    %2152 = vmatpush1.bf16.msra.mxu0 0
    %2153 = vmatprep.subr.bf16.mxu0 0
    %2154 = vmatpush1.bf16.msra.mxu0 0
    %2155 = vmatprep.subr.bf16.mxu0 0
    %2156 = vmatpush1.bf16.msra.mxu0 0
    %2157 = vmatprep.subr.bf16.mxu0 0
    %2158 = vmatpush1.bf16.msra.mxu0 0
    %2159 = vmatprep.subr.bf16.mxu0 0
    %2160 = vmatpush1.bf16.msra.mxu0 0
    %2161 = vmatprep.subr.bf16.mxu0 0
    %2162 = vmatpush1.bf16.msra.mxu0 0
    %2163 = vmatprep.subr.bf16.mxu0 0
    %2164 = vmatpush1.bf16.msra.mxu0 0
    %2165 = vmatprep.subr.bf16.mxu0 0
    %2166 = vmatpush1.bf16.msra.mxu0 0
    %2167 = vmatprep.subr.bf16.mxu0 0
    %2168 = vmatpush1.bf16.msra.mxu0 0
    %2169 = vmatprep.mubr.bf16.mxu0 0
    %2170 = vmatmul.mubr.bf16.gmra.mrb[0].mxu0 %v2018
    %v2171 = vpop.f32.mrb[0].mxu0
    %v2172 = vadd.f32 0.0, %v2171
    %v2173 = vpop.f32.mrb[0].mxu0
    %v2174 = vpop.f32.mrb[0].mxu0
    %v2175 = vpop.f32.mrb[0].mxu0
    %2176 = vdwg.mxu0
    %v2177 = vadd.f32 %v2136, %v2172
    %v2178 = vxor.u32 %v2177, 2147483648
    %v2179 = vmul.f32 %v2178, 1.442695
    %v2180 = vpow.pop %v2179
    %v2181 = vadd.f32 %v2180, 1.0
    %v2182 = vrcp.pop %v2181
    %v2183 = vmul.f32 1.0, %v2182
    %v2184 = vtanh.pop %v2177
    %v2185 = vmul.f32 %v2183, %v2006
    %2187 = vrot.lane.b32.xlu0 %v2184, 64
    %v2188 = vpop.permute.xlu0 %2187
    %v2190 = vmul.f32 %v2183, %v2188
    %2192 = vrot.lane.b32.xlu0 %v2190, 32
    %v2193 = vpop.permute.xlu0 %2192
    %v2195 = vadd.f32 %v2185, %v2193
    %v2196 = vtanh.pop %v2195
    %2198 = vrot.lane.b32.xlu0 %v2196, 64
    %v2199 = vpop.permute.xlu0 %2198
    %v2201 = vmul.f32 %v2183, %v2199
    %v2202 = vpack.c.bf16 %v2201, %v2201
    %2204 = vrot.lane.b32.xlu0 %v2202, 32
    %v2205 = vpop.permute.xlu0 %2204
    %v2207 = vsel %vm903, %v2205, 0
    %2209 = vmatprep.subr.bf16.mxu0 0
    %2210 = vmatpush1.bf16.msra.mxu0 %v1064
    %2211 = vmatprep.subr.bf16.mxu0 0
    %2212 = vmatpush1.bf16.msra.mxu0 %v1065
    %2213 = vmatprep.subr.bf16.mxu0 0
    %2214 = vmatpush1.bf16.msra.mxu0 0
    %2215 = vmatprep.subr.bf16.mxu0 0
    %2216 = vmatpush1.bf16.msra.mxu0 0
    %2217 = vmatprep.subr.bf16.mxu0 0
    %2218 = vmatpush1.bf16.msra.mxu0 0
    %2219 = vmatprep.subr.bf16.mxu0 0
    %2220 = vmatpush1.bf16.msra.mxu0 0
    %2221 = vmatprep.subr.bf16.mxu0 0
    %2222 = vmatpush1.bf16.msra.mxu0 0
    %2223 = vmatprep.subr.bf16.mxu0 0
    %2224 = vmatpush1.bf16.msra.mxu0 0
    %2225 = vmatprep.subr.bf16.mxu0 0
    %2226 = vmatpush1.bf16.msra.mxu0 0
    %2227 = vmatprep.subr.bf16.mxu0 0
    %2228 = vmatpush1.bf16.msra.mxu0 0
    %2229 = vmatprep.subr.bf16.mxu0 0
    %2230 = vmatpush1.bf16.msra.mxu0 0
    %2231 = vmatprep.subr.bf16.mxu0 0
    %2232 = vmatpush1.bf16.msra.mxu0 0
    %2233 = vmatprep.subr.bf16.mxu0 0
    %2234 = vmatpush1.bf16.msra.mxu0 0
    %2235 = vmatprep.subr.bf16.mxu0 0
    %2236 = vmatpush1.bf16.msra.mxu0 0
    %2237 = vmatprep.subr.bf16.mxu0 0
    %2238 = vmatpush1.bf16.msra.mxu0 0
    %2239 = vmatprep.subr.bf16.mxu0 0
    %2240 = vmatpush1.bf16.msra.mxu0 0
    %2241 = vmatprep.mubr.bf16.mxu0 0
    %2242 = vmatmul.mubr.bf16.gmra.mrb[0].mxu0 %v2207
    %v2243 = vpop.f32.mrb[0].mxu0
    %v2244 = vadd.f32 %v965, %v2243
    %v2245 = vpop.f32.mrb[0].mxu0
    %v2246 = vpop.f32.mrb[0].mxu0
    %v2247 = vpop.f32.mrb[0].mxu0
    %2248 = vdwg.mxu0
    %v2249 = vpack.c.bf16 %v2131, %v2131
    %2251 = vrot.lane.b32.xlu0 %v2249, 32
    %v2252 = vpop.permute.xlu0 %2251
    %v2254 = vsel %vm903, %v2252, 0
    %2256 = vmatprep.subr.bf16.mxu0 0
    %2257 = vmatpush1.bf16.msra.mxu0 %v1119
    %2258 = vmatprep.subr.bf16.mxu0 0
    %2259 = vmatpush1.bf16.msra.mxu0 %v1120
    %2260 = vmatprep.subr.bf16.mxu0 0
    %2261 = vmatpush1.bf16.msra.mxu0 0
    %2262 = vmatprep.subr.bf16.mxu0 0
    %2263 = vmatpush1.bf16.msra.mxu0 0
    %2264 = vmatprep.subr.bf16.mxu0 0
    %2265 = vmatpush1.bf16.msra.mxu0 0
    %2266 = vmatprep.subr.bf16.mxu0 0
    %2267 = vmatpush1.bf16.msra.mxu0 0
    %2268 = vmatprep.subr.bf16.mxu0 0
    %2269 = vmatpush1.bf16.msra.mxu0 0
    %2270 = vmatprep.subr.bf16.mxu0 0
    %2271 = vmatpush1.bf16.msra.mxu0 0
    %2272 = vmatprep.subr.bf16.mxu0 0
    %2273 = vmatpush1.bf16.msra.mxu0 0
    %2274 = vmatprep.subr.bf16.mxu0 0
    %2275 = vmatpush1.bf16.msra.mxu0 0
    %2276 = vmatprep.subr.bf16.mxu0 0
    %2277 = vmatpush1.bf16.msra.mxu0 0
    %2278 = vmatprep.subr.bf16.mxu0 0
    %2279 = vmatpush1.bf16.msra.mxu0 0
    %2280 = vmatprep.subr.bf16.mxu0 0
    %2281 = vmatpush1.bf16.msra.mxu0 0
    %2282 = vmatprep.subr.bf16.mxu0 0
    %2283 = vmatpush1.bf16.msra.mxu0 0
    %2284 = vmatprep.subr.bf16.mxu0 0
    %2285 = vmatpush1.bf16.msra.mxu0 0
    %2286 = vmatprep.subr.bf16.mxu0 0
    %2287 = vmatpush1.bf16.msra.mxu0 0
    %2288 = vmatprep.mubr.bf16.mxu0 0
    %2289 = vmatmul.mubr.bf16.gmra.mrb[0].mxu0 %v2254
    %v2290 = vpop.f32.mrb[0].mxu0
    %v2291 = vadd.f32 0.0, %v2290
    %v2292 = vpop.f32.mrb[0].mxu0
    %v2293 = vpop.f32.mrb[0].mxu0
    %v2294 = vpop.f32.mrb[0].mxu0
    %2295 = vdwg.mxu0
    %v2296 = vadd.f32 %v2244, %v2291
    %v2297 = vxor.u32 %v2296, 2147483648
    %v2298 = vmul.f32 %v2297, 1.442695
    %v2299 = vpow.pop %v2298
    %v2300 = vadd.f32 %v2299, 1.0
    %v2301 = vrcp.pop %v2300
    %v2302 = vmul.f32 1.0, %v2301
    %v2303 = vtanh.pop %v2296
    %v2304 = vmul.f32 %v2302, %v2125
    %2306 = vrot.lane.b32.xlu0 %v2303, 64
    %v2307 = vpop.permute.xlu0 %2306
    %v2309 = vmul.f32 %v2302, %v2307
    %2311 = vrot.lane.b32.xlu0 %v2309, 32
    %v2312 = vpop.permute.xlu0 %2311
    %v2314 = vadd.f32 %v2304, %v2312
    %v2315 = vtanh.pop %v2314
    %2317 = vrot.lane.b32.xlu0 %v2315, 64
    %v2318 = vpop.permute.xlu0 %2317
    %v2320 = vmul.f32 %v2302, %v2318
    %v2321 = vrot.slane %v942, 7
    %v2323 = vrot.slane %v945, 6
    %v2325 = vsel %vm970, %v2321, %v2323
    %2326 = vmatprep.subr.bf16.mxu0 0
    %2327 = vmatpush1.bf16.msra.mxu0 %v980
    %2328 = vmatprep.subr.bf16.mxu0 0
    %2329 = vmatpush1.bf16.msra.mxu0 %v981
    %2330 = vmatprep.subr.bf16.mxu0 0
    %2331 = vmatpush1.bf16.msra.mxu0 0
    %2332 = vmatprep.subr.bf16.mxu0 0
    %2333 = vmatpush1.bf16.msra.mxu0 0
    %2334 = vmatprep.subr.bf16.mxu0 0
    %2335 = vmatpush1.bf16.msra.mxu0 0
    %2336 = vmatprep.subr.bf16.mxu0 0
    %2337 = vmatpush1.bf16.msra.mxu0 0
    %2338 = vmatprep.subr.bf16.mxu0 0
    %2339 = vmatpush1.bf16.msra.mxu0 0
    %2340 = vmatprep.subr.bf16.mxu0 0
    %2341 = vmatpush1.bf16.msra.mxu0 0
    %2342 = vmatprep.subr.bf16.mxu0 0
    %2343 = vmatpush1.bf16.msra.mxu0 0
    %2344 = vmatprep.subr.bf16.mxu0 0
    %2345 = vmatpush1.bf16.msra.mxu0 0
    %2346 = vmatprep.subr.bf16.mxu0 0
    %2347 = vmatpush1.bf16.msra.mxu0 0
    %2348 = vmatprep.subr.bf16.mxu0 0
    %2349 = vmatpush1.bf16.msra.mxu0 0
    %2350 = vmatprep.subr.bf16.mxu0 0
    %2351 = vmatpush1.bf16.msra.mxu0 0
    %2352 = vmatprep.subr.bf16.mxu0 0
    %2353 = vmatpush1.bf16.msra.mxu0 0
    %2354 = vmatprep.subr.bf16.mxu0 0
    %2355 = vmatpush1.bf16.msra.mxu0 0
    %2356 = vmatprep.subr.bf16.mxu0 0
    %2357 = vmatpush1.bf16.msra.mxu0 0
    %2358 = vmatprep.mubr.bf16.mxu0 0
    %2359 = vmatmul.mubr.bf16.gmra.mrb[0].mxu0 %v2207
    %v2360 = vpop.f32.mrb[0].mxu0
    %v2361 = vadd.f32 0.0, %v2360
    %v2362 = vpop.f32.mrb[0].mxu0
    %v2363 = vpop.f32.mrb[0].mxu0
    %v2364 = vpop.f32.mrb[0].mxu0
    %2365 = vdwg.mxu0
    %v2366 = vadd.f32 %v2325, %v2361
    %v2367 = vxor.u32 %v2366, 2147483648
    %v2368 = vmul.f32 %v2367, 1.442695
    %v2369 = vpow.pop %v2368
    %v2370 = vadd.f32 %v2369, 1.0
    %v2371 = vrcp.pop %v2370
    %v2372 = vmul.f32 1.0, %v2371
    %v2373 = vtanh.pop %v2366
    %v2374 = vmul.f32 %v2372, %v2195
    %2376 = vrot.lane.b32.xlu0 %v2373, 64
    %v2377 = vpop.permute.xlu0 %2376
    %v2379 = vmul.f32 %v2372, %v2377
    %2381 = vrot.lane.b32.xlu0 %v2379, 32
    %v2382 = vpop.permute.xlu0 %2381
    %v2384 = vadd.f32 %v2374, %v2382
    %v2385 = vtanh.pop %v2384
    %2387 = vrot.lane.b32.xlu0 %v2385, 64
    %v2388 = vpop.permute.xlu0 %2387
    %v2390 = vmul.f32 %v2372, %v2388
    %v2391 = vpack.c.bf16 %v2390, %v2390
    %2393 = vrot.lane.b32.xlu0 %v2391, 32
    %v2394 = vpop.permute.xlu0 %2393
    %v2396 = vsel %vm903, %v2394, 0
    %2398 = vmatprep.subr.bf16.mxu0 0
    %2399 = vmatpush1.bf16.msra.mxu0 %v1064
    %2400 = vmatprep.subr.bf16.mxu0 0
    %2401 = vmatpush1.bf16.msra.mxu0 %v1065
    %2402 = vmatprep.subr.bf16.mxu0 0
    %2403 = vmatpush1.bf16.msra.mxu0 0
    %2404 = vmatprep.subr.bf16.mxu0 0
    %2405 = vmatpush1.bf16.msra.mxu0 0
    %2406 = vmatprep.subr.bf16.mxu0 0
    %2407 = vmatpush1.bf16.msra.mxu0 0
    %2408 = vmatprep.subr.bf16.mxu0 0
    %2409 = vmatpush1.bf16.msra.mxu0 0
    %2410 = vmatprep.subr.bf16.mxu0 0
    %2411 = vmatpush1.bf16.msra.mxu0 0
    %2412 = vmatprep.subr.bf16.mxu0 0
    %2413 = vmatpush1.bf16.msra.mxu0 0
    %2414 = vmatprep.subr.bf16.mxu0 0
    %2415 = vmatpush1.bf16.msra.mxu0 0
    %2416 = vmatprep.subr.bf16.mxu0 0
    %2417 = vmatpush1.bf16.msra.mxu0 0
    %2418 = vmatprep.subr.bf16.mxu0 0
    %2419 = vmatpush1.bf16.msra.mxu0 0
    %2420 = vmatprep.subr.bf16.mxu0 0
    %2421 = vmatpush1.bf16.msra.mxu0 0
    %2422 = vmatprep.subr.bf16.mxu0 0
    %2423 = vmatpush1.bf16.msra.mxu0 0
    %2424 = vmatprep.subr.bf16.mxu0 0
    %2425 = vmatpush1.bf16.msra.mxu0 0
    %2426 = vmatprep.subr.bf16.mxu0 0
    %2427 = vmatpush1.bf16.msra.mxu0 0
    %2428 = vmatprep.subr.bf16.mxu0 0
    %2429 = vmatpush1.bf16.msra.mxu0 0
    %2430 = vmatprep.mubr.bf16.mxu0 0
    %2431 = vmatmul.mubr.bf16.gmra.mrb[0].mxu0 %v2396
    %v2432 = vpop.f32.mrb[0].mxu0
    %v2433 = vadd.f32 %v965, %v2432
    %v2434 = vpop.f32.mrb[0].mxu0
    %v2435 = vpop.f32.mrb[0].mxu0
    %v2436 = vpop.f32.mrb[0].mxu0
    %2437 = vdwg.mxu0
    %v2438 = vpack.c.bf16 %v2320, %v2320
    %2440 = vrot.lane.b32.xlu0 %v2438, 32
    %v2441 = vpop.permute.xlu0 %2440
    %v2443 = vsel %vm903, %v2441, 0
    %2445 = vmatprep.subr.bf16.mxu0 0
    %2446 = vmatpush1.bf16.msra.mxu0 %v1119
    %2447 = vmatprep.subr.bf16.mxu0 0
    %2448 = vmatpush1.bf16.msra.mxu0 %v1120
    %2449 = vmatprep.subr.bf16.mxu0 0
    %2450 = vmatpush1.bf16.msra.mxu0 0
    %2451 = vmatprep.subr.bf16.mxu0 0
    %2452 = vmatpush1.bf16.msra.mxu0 0
    %2453 = vmatprep.subr.bf16.mxu0 0
    %2454 = vmatpush1.bf16.msra.mxu0 0
    %2455 = vmatprep.subr.bf16.mxu0 0
    %2456 = vmatpush1.bf16.msra.mxu0 0
    %2457 = vmatprep.subr.bf16.mxu0 0
    %2458 = vmatpush1.bf16.msra.mxu0 0
    %2459 = vmatprep.subr.bf16.mxu0 0
    %2460 = vmatpush1.bf16.msra.mxu0 0
    %2461 = vmatprep.subr.bf16.mxu0 0
    %2462 = vmatpush1.bf16.msra.mxu0 0
    %2463 = vmatprep.subr.bf16.mxu0 0
    %2464 = vmatpush1.bf16.msra.mxu0 0
    %2465 = vmatprep.subr.bf16.mxu0 0
    %2466 = vmatpush1.bf16.msra.mxu0 0
    %2467 = vmatprep.subr.bf16.mxu0 0
    %2468 = vmatpush1.bf16.msra.mxu0 0
    %2469 = vmatprep.subr.bf16.mxu0 0
    %2470 = vmatpush1.bf16.msra.mxu0 0
    %2471 = vmatprep.subr.bf16.mxu0 0
    %2472 = vmatpush1.bf16.msra.mxu0 0
    %2473 = vmatprep.subr.bf16.mxu0 0
    %2474 = vmatpush1.bf16.msra.mxu0 0
    %2475 = vmatprep.subr.bf16.mxu0 0
    %2476 = vmatpush1.bf16.msra.mxu0 0
    %2477 = vmatprep.mubr.bf16.mxu0 0
    %2478 = vmatmul.mubr.bf16.gmra.mrb[0].mxu0 %v2443
    %v2479 = vpop.f32.mrb[0].mxu0
    %v2480 = vadd.f32 0.0, %v2479
    %v2481 = vpop.f32.mrb[0].mxu0
    %v2482 = vpop.f32.mrb[0].mxu0
    %v2483 = vpop.f32.mrb[0].mxu0
    %2484 = vdwg.mxu0
    %v2485 = vadd.f32 %v2433, %v2480
    %v2486 = vxor.u32 %v2485, 2147483648
    %v2487 = vmul.f32 %v2486, 1.442695
    %v2488 = vpow.pop %v2487
    %v2489 = vadd.f32 %v2488, 1.0
    %v2490 = vrcp.pop %v2489
    %v2491 = vmul.f32 1.0, %v2490
    %v2492 = vtanh.pop %v2485
    %v2493 = vmul.f32 %v2491, %v2314
    %2495 = vrot.lane.b32.xlu0 %v2492, 64
    %v2496 = vpop.permute.xlu0 %2495
    %v2498 = vmul.f32 %v2491, %v2496
    %2500 = vrot.lane.b32.xlu0 %v2498, 32
    %v2501 = vpop.permute.xlu0 %2500
    %v2503 = vadd.f32 %v2493, %v2501
    %v2504 = vtanh.pop %v2503
    %2506 = vrot.lane.b32.xlu0 %v2504, 64
    %v2507 = vpop.permute.xlu0 %2506
    %v2509 = vmul.f32 %v2491, %v2507
    %v2511 = vrot.slane %v2509, 6
    %vm2513 = vcmask 1041408
    %v2514 = vsel %vm2513, %v2390, %v2511
    %v2515 = vpack.c.bf16 %v2514, %v2514
    %v2516 = vld [vmem:[%s7] sm:$0xf]
    %v2517 = vld [vmem:[%s7 + $0x4] sm:$0xf]
    %v2518 = vld [vmem:[%s7 + $0x8] sm:$0xf]
    %v2519 = vld [vmem:[%s7 + $0xc] sm:$0xf]
    %v2520 = vld [vmem:[%s8] sm:$0x1]
    %v2522 = vlaneseq
    %v2523 = vshrl.u32 %v2522, 7
    %v2524 = vsub.s32 0, %v2523
    %v2525 = vrot.slane %v2520, %v2524
    %2528 = vrot.lane.b32.xlu0 %v2515, 32
    %v2529 = vpop.permute.xlu0 %2528
    %v2534 = vunpack.c.l.b16 %v2516
    %v2535 = vunpack.c.l.b16 %v2517
    %v2536 = vunpack.c.l.b16 %v2518
    %v2537 = vunpack.c.l.b16 %v2519
    %v2538 = vpack.c.b16 %v2535, %v2534
    %v2539 = vpack.c.b16 %v2537, %v2536
    %v2543 = vsel %vm903, %v2529, 0
    %2545 = vmatprep.subr.bf16.mxu0 0
    %2546 = vmatpush1.bf16.msra.mxu0 %v2538
    %2547 = vmatprep.subr.bf16.mxu0 0
    %2548 = vmatpush1.bf16.msra.mxu0 %v2539
    %2549 = vmatprep.subr.bf16.mxu0 0
    %2550 = vmatpush1.bf16.msra.mxu0 0
    %2551 = vmatprep.subr.bf16.mxu0 0
    %2552 = vmatpush1.bf16.msra.mxu0 0
    %2553 = vmatprep.subr.bf16.mxu0 0
    %2554 = vmatpush1.bf16.msra.mxu0 0
    %2555 = vmatprep.subr.bf16.mxu0 0
    %2556 = vmatpush1.bf16.msra.mxu0 0
    %2557 = vmatprep.subr.bf16.mxu0 0
    %2558 = vmatpush1.bf16.msra.mxu0 0
    %2559 = vmatprep.subr.bf16.mxu0 0
    %2560 = vmatpush1.bf16.msra.mxu0 0
    %2561 = vmatprep.subr.bf16.mxu0 0
    %2562 = vmatpush1.bf16.msra.mxu0 0
    %2563 = vmatprep.subr.bf16.mxu0 0
    %2564 = vmatpush1.bf16.msra.mxu0 0
    %2565 = vmatprep.subr.bf16.mxu0 0
    %2566 = vmatpush1.bf16.msra.mxu0 0
    %2567 = vmatprep.subr.bf16.mxu0 0
    %2568 = vmatpush1.bf16.msra.mxu0 0
    %2569 = vmatprep.subr.bf16.mxu0 0
    %2570 = vmatpush1.bf16.msra.mxu0 0
    %2571 = vmatprep.subr.bf16.mxu0 0
    %2572 = vmatpush1.bf16.msra.mxu0 0
    %2573 = vmatprep.subr.bf16.mxu0 0
    %2574 = vmatpush1.bf16.msra.mxu0 0
    %2575 = vmatprep.subr.bf16.mxu0 0
    %2576 = vmatpush1.bf16.msra.mxu0 0
    %2577 = vmatprep.mubr.bf16.mxu0 0
    %2578 = vmatmul.mubr.bf16.gmra.mrb[0].mxu0 %v2543
    %v2579 = vpop.f32.mrb[0].mxu0
    %v2580 = vadd.f32 %v2525, %v2579
    %v2581 = vpop.f32.mrb[0].mxu0
    %v2582 = vpop.f32.mrb[0].mxu0
    %v2583 = vpop.f32.mrb[0].mxu0
    %2584 = vdwg.mxu0
    %vm2585 = vcmask 35840
    %2586 = vst.msk [vmem:[#allocation2] sm:$0xf] %vm2585, %v2580
    // Predicated region
    $region38: #{decoder_forward.1} parent=1 // pred_check
      _
    $region39: #{decoder_forward.1} parent=1 // pred_check_branch
      %2588 = sbr.rel (0) target = $region41
    $region40: #{decoder_forward.1} parent=1 // pred_region
      %s2590 = ssub.s32 64, 64
      %2591 = vsyncadd [#allocation3], %s2590
      %s2593 = sshll.u32 [#allocation2], 4
      %s2594 = int_to_ptr.vmem [resolvable:$true] %s2593
      %2596 = dma.vmem_to_hbm [thread:$0]  %s2594, 64, %s9, [#allocation3]
    $region41: #{decoder_forward.1} parent=1 // pred_fallthru
      _
    // Predicated region
    $region42: #{decoder_forward.1} parent=1 // pred_check
      _
    $region43: #{decoder_forward.1} parent=1 // pred_check_branch
      %2598 = sbr.rel (0) target = $region45
    $region44: #{decoder_forward.1} parent=1 // pred_region
      %2599 = dma.done [#allocation3], 64
    $region45: #{decoder_forward.1} parent=1 // pred_fallthru
      _
    %2600 = vsyncpa [#allocation3], 1

</llo_original>
